<compile_context>
chip_gen: v7x
topology: tpu7x:2x2x1
jax: 0.10.0
libtpu: 0.0.40
codegen_flags: <defaults>
</compile_context>

<pallas_src>
import math
import functools

import jax
import jax.numpy as jnp
from jax.experimental import pallas as pl
from jax.experimental.pallas import tpu as pltpu

LN_EPS = 1e-5          # Python floats only: jnp module-level constants would be
NEG_BIAS = -1e30       # captured as kernel constants.
LANE = 128             # lane width for the lane-dense decoder output


# ------------------------------- kernel ------------------------------------ #

def fused_forward_kernel(x_ref, pe_ref, we_ref, be_ref,
                         wq_ref, wk_ref, wv_ref, bq_ref, bk_ref, bv_ref,
                         wo_ref, bo_ref, ln1w_ref, ln1b_ref,
                         w1_ref, b1_ref, w2_ref, b2_ref,
                         ln2w_ref, ln2b_ref, wdec_ref, bdec_ref,
                         o_ref, *, seq, nheads, nlayers):
    """One batch element per grid step; full depth fused, activations in VMEM.

    Shapes (VMEM blocks, per grid step):
      x_ref   (C, Din) f32          we_ref  (Din, D) bf16   be_ref (1, D) f32
      pe_ref  (C, D)   f32
      wq/wk/wv_ref (L, H, D, hd) bf16      bq/bk/bv_ref (L, H, 1, hd) f32
      wo_ref  (L, H, hd, D) bf16           bo_ref (L, 1, D) f32
      ln*_ref (L, 1, D) f32
      w1_ref  (L, D, Dff) bf16  b1_ref (L, 1, Dff) f32
      w2_ref  (L, Dff, D) bf16  b2_ref (L, 1, D)   f32
      wdec_ref (D, LANE) bf16   bdec_ref (1, LANE) f32
      o_ref   (C, LANE) f32
    """
    f32 = jnp.float32
    bf16 = jnp.bfloat16

    # ---- low-level stand-in (linear on chunk-last frames) + PE -------------
    h = jnp.dot(x_ref[...].astype(bf16), we_ref[...],
                preferred_element_type=f32)
    h = h + be_ref[...] + pe_ref[...]                        # (C, D) f32

    D = h.shape[-1]
    hd = D // nheads
    scale = 1.0 / math.sqrt(hd)

    # Causal additive bias; broadcast hoisted out of the layer loop.
    r_ix = jax.lax.broadcasted_iota(jnp.int32, (seq, seq), 0)
    c_ix = jax.lax.broadcasted_iota(jnp.int32, (seq, seq), 1)
    causal = jnp.where(c_ix <= r_ix, 0.0, NEG_BIAS).astype(f32)     # (C, C)
    causal_h = jnp.broadcast_to(causal, (nheads, seq, seq))         # (H, C, C)

    def layer_norm(x, w, b):
        mu = jnp.mean(x, axis=-1, keepdims=True)
        var = jnp.mean(jnp.square(x - mu), axis=-1, keepdims=True)
        return (x - mu) * (jax.lax.rsqrt(var + LN_EPS) * w) + b

    for layer in range(nlayers):      # static unroll; weights already in VMEM
        # ---- causal multi-head self-attention (heads batched) --------------
        h16 = h.astype(bf16)
        h_b = jnp.broadcast_to(h16, (nheads, seq, D))        # (H, C, D) bf16

        qh = jnp.einsum("hcd,hde->hce", h_b, wq_ref[layer],
                        preferred_element_type=f32) + bq_ref[layer]  # (H,C,hd)
        kh = jnp.einsum("hcd,hde->hce", h_b, wk_ref[layer],
                        preferred_element_type=f32) + bk_ref[layer]
        vh = jnp.einsum("hcd,hde->hce", h_b, wv_ref[layer],
                        preferred_element_type=f32) + bv_ref[layer]

        s = jnp.einsum("hqd,hkd->hqk", qh.astype(bf16), kh.astype(bf16),
                       preferred_element_type=f32) * scale + causal_h
        m = jnp.max(s, axis=-1, keepdims=True)
        p = jnp.exp(s - m)
        p = p * pl.reciprocal(jnp.sum(p, axis=-1, keepdims=True),
                              approx=True)                   # softmax (EUP recip)

        ctx = jnp.einsum("hqk,hkd->hqd", p.astype(bf16), vh.astype(bf16),
                         preferred_element_type=f32)         # (H, C, hd)
        # Output projection applied per head and summed (no concat).
        attn = jnp.sum(
            jnp.einsum("hqd,hde->hqe", ctx.astype(bf16), wo_ref[layer],
                       preferred_element_type=f32),
            axis=0) + bo_ref[layer]                          # (C, D)

        # ---- residual + LayerNorm 1 (post-norm) ----------------------------
        x1 = layer_norm(h + attn, ln1w_ref[layer], ln1b_ref[layer])

        # ---- feed-forward (ReLU) -------------------------------------------
        f = jnp.dot(x1.astype(bf16), w1_ref[layer],
                    preferred_element_type=f32) + b1_ref[layer]
        f = jnp.maximum(f, 0.0)
        f = jnp.dot(f.astype(bf16), w2_ref[layer],
                    preferred_element_type=f32) + b2_ref[layer]

        # ---- residual + LayerNorm 2 ----------------------------------------
        h = layer_norm(x1 + f, ln2w_ref[layer], ln2b_ref[layer])

    # ---- decoder (lane-padded to 128; padding sliced off by the wrapper) ---
    o_ref[...] = jnp.dot(h.astype(bf16), wdec_ref[...],
                         preferred_element_type=f32) + bdec_ref[...]


# ------------------------------ wrapper ------------------------------------ #

def pack_params(params, nheads):
    """PyTorch-layout f32 params -> kernel-ready arrays.

    Matmul weights transposed to [in, out] (MXU RHS lane-contiguous) and cast
    to bf16 (f32 accumulation in-kernel).  q/k/v/out-proj weights pre-permuted
    to head-major (L, H, D, hd) / (L, H, hd, D) so the kernel never slices or
    concatenates along the lane dim.  Decoder lane-padded to 128.
    """
    bf16 = jnp.bfloat16
    D = params["embed_w"].shape[0]
    hd = D // nheads

    def per_head_in_out(w_py):            # (hd*H, D_in) torch -> (H, D_in, hd)
        w_t = w_py.T                       # (D_in, D_out), cols head-major
        return jnp.swapaxes(w_t.reshape(w_t.shape[0], nheads, hd), 0, 1)

    wq, wk, wv, bq, bk, bv, wo_h = [], [], [], [], [], [], []
    for lyr in params["layers"]:
        wqkv = lyr["wqkv"]                 # (3D, D) torch [out, in]
        wq.append(per_head_in_out(wqkv[:D]).astype(bf16))
        wk.append(per_head_in_out(wqkv[D:2 * D]).astype(bf16))
        wv.append(per_head_in_out(wqkv[2 * D:]).astype(bf16))
        b = lyr["bqkv"][0]                 # (3D,)
        bq.append(b[:D].reshape(nheads, 1, hd))
        bk.append(b[D:2 * D].reshape(nheads, 1, hd))
        bv.append(b[2 * D:].reshape(nheads, 1, hd))
        # out = ctx @ wo.T ; rows of wo.T are head-major -> (H, hd, D)
        wo_h.append(lyr["wo"].T.reshape(nheads, hd, D).astype(bf16))

    def stack(key):
        return jnp.stack([lyr[key] for lyr in params["layers"]])

    def stack_t(key):
        return jnp.swapaxes(stack(key), 1, 2).astype(bf16)

    dout = params["dec_w"].shape[0]
    pad = LANE - dout
    dec_w_t = jnp.pad(params["dec_w"].T, ((0, 0), (0, pad)))       # (D, LANE)
    dec_b = jnp.pad(params["dec_b"], ((0, 0), (0, pad)))           # (1, LANE)

    return {
        "embed_w_t": params["embed_w"].T.astype(bf16),             # (Din, D)
        "embed_b": params["embed_b"],                               # (1, D)
        "pe": params["pe"],                                         # (C, D)
        "wq": jnp.stack(wq), "wk": jnp.stack(wk), "wv": jnp.stack(wv),
        "bq": jnp.stack(bq), "bk": jnp.stack(bk), "bv": jnp.stack(bv),
        "wo": jnp.stack(wo_h), "bo": stack("bo"),
        "ln1w": stack("ln1w"), "ln1b": stack("ln1b"),
        "w1": stack_t("w1"), "b1": stack("b1"),
        "w2": stack_t("w2"), "b2": stack("b2"),
        "ln2w": stack("ln2w"), "ln2b": stack("ln2b"),
        "dec_w_t": dec_w_t.astype(bf16), "dec_b": dec_b,
        "dout": dout,
        "nlayers": len(params["layers"]),
    }


def hierarchical_model(x, packed, *, freq_ratio, nheads):
    """Full forward pass: one fused pallas_call with a parallel batch grid."""
    B, T, Din = x.shape
    R = int(freq_ratio)
    assert T % R == 0
    C = T // R

    # --- hierarchical chunking (pure indexing, done in the wrapper) ---------
    xc = x.reshape(B, C, R, Din)
    # TODO(synk): ll_model is hydra-instantiated with no concrete definition;
    # `low_level(chunks)[:, -1]` is approximated by a linear projection (inside
    # the kernel) of each chunk's last frame.
    x_last = xc[:, :, R - 1, :].reshape(B * C, Din)

    pe = packed["pe"][:C]                                          # (C, D)

    kernel = functools.partial(
        fused_forward_kernel,
        seq=C, nheads=nheads, nlayers=packed["nlayers"])

    weights = (packed["embed_w_t"], packed["embed_b"],
               packed["wq"], packed["wk"], packed["wv"],
               packed["bq"], packed["bk"], packed["bv"],
               packed["wo"], packed["bo"],
               packed["ln1w"], packed["ln1b"],
               packed["w1"], packed["b1"], packed["w2"], packed["b2"],
               packed["ln2w"], packed["ln2b"],
               packed["dec_w_t"], packed["dec_b"])

    def resident_spec(arr):
        # Full-array block with a constant index_map: fetched once, stays
        # resident in VMEM across all grid steps.
        zeros = (0,) * arr.ndim
        return pl.BlockSpec(arr.shape, lambda b, z=zeros: z)

    in_specs = ([pl.BlockSpec((C, Din), lambda b: (b, 0)),          # x rows
                 resident_spec(pe)]
                + [resident_spec(w) for w in weights])

    out_pad = pl.pallas_call(
        kernel,
        grid=(B,),
        in_specs=in_specs,
        out_specs=pl.BlockSpec((C, LANE), lambda b: (b, 0)),
        out_shape=jax.ShapeDtypeStruct((B * C, LANE), jnp.float32),
        compiler_params=pltpu.CompilerParams(
            dimension_semantics=("parallel",),
            vmem_limit_bytes=48 * 1024 * 1024),
    )(x_last, pe, *weights)

    dout = packed["dout"]
    return out_pad[:, :dout].reshape(B, C, dout)


# --------------------------- parameter setup -------------------------------- #

def make_positional_encoding(seq_len, d_model):
    pos = jnp.arange(seq_len, dtype=jnp.float32)[:, None]
    div = jnp.exp(jnp.arange(0, d_model, 2, dtype=jnp.float32)
                  * (-math.log(10000.0) / d_model))
    pe = jnp.zeros((seq_len, d_model), jnp.float32)
    pe = pe.at[:, 0::2].set(jnp.sin(pos * div))
    pe = pe.at[:, 1::2].set(jnp.cos(pos * div)[:, : d_model // 2])  # odd-D safe
    return pe


def init_params(key, input_dim, output_dim, model_dim, nlayers, seq_len):
    def uni(k, shape, scale):
        return jax.random.uniform(k, shape, jnp.float32, -scale, scale)

    keys = iter(jax.random.split(key, 8 + 8 * nlayers))
    D, Dff = model_dim, model_dim  # dim_feedforward == model_dim

    params = {
        "embed_w": uni(next(keys), (D, input_dim), 0.1),
        "embed_b": uni(next(keys), (1, D), 1.0 / math.sqrt(input_dim)),
        "pe": make_positional_encoding(seq_len, D),
        "dec_w": uni(next(keys), (output_dim, D), 1.0 / math.sqrt(D)),
        "dec_b": uni(next(keys), (1, output_dim), 1.0 / math.sqrt(D)),
        "layers": [],
    }
    s = 1.0 / math.sqrt(D)
    for _ in range(nlayers):
        params["layers"].append({
            "wqkv": uni(next(keys), (3 * D, D), s),
            "bqkv": uni(next(keys), (1, 3 * D), s),
            "wo": uni(next(keys), (D, D), s),
            "bo": uni(next(keys), (1, D), s),
            "ln1w": jnp.ones((1, D), jnp.float32),
            "ln1b": jnp.zeros((1, D), jnp.float32),
            "w1": uni(next(keys), (Dff, D), s),
            "b1": uni(next(keys), (1, Dff), s),
            "w2": uni(next(keys), (D, Dff), 1.0 / math.sqrt(Dff)),
            "b2": uni(next(keys), (1, D), 1.0 / math.sqrt(Dff)),
            "ln2w": jnp.ones((1, D), jnp.float32),
            "ln2b": jnp.zeros((1, D), jnp.float32),
        })
    return params


# -------------------------------- main --------------------------------------- #

if __name__ == "__main__":
    B = 2
    freq_ratio = 2                 # R: low-level chunk length
    C = 8                          # high-level (transformer) sequence length
    T = C * freq_ratio             # raw input sequence length
    input_dim, output_dim = 4, 4
    model_dim, nheads, nlayers = 32, 4, 2

    key = jax.random.PRNGKey(0)
    k_params, k_x = jax.random.split(key)

    params = init_params(k_params, input_dim, output_dim, model_dim, nlayers, C)
    packed = pack_params(params, nheads)
    x = jax.random.normal(k_x, (B, T, input_dim), jnp.float32)

    out = hierarchical_model(x, packed, freq_ratio=freq_ratio, nheads=nheads)
    out = jax.block_until_ready(out)
    assert out.shape == (B, C, output_dim), out.shape
    assert bool(jnp.all(jnp.isfinite(out)))
    print("KERNEL_OK")
</pallas_src>

<mosaic_0001>
module attributes {stable_mosaic.version = 11 : i64} {
  func.func @fused_forward_kernel(%arg0: i32, %arg1: memref<8x4xf32, #tpu.memory_space<vmem>>, %arg2: memref<8x32xf32, #tpu.memory_space<vmem>>, %arg3: memref<4x32xbf16, #tpu.memory_space<vmem>>, %arg4: memref<1x32xf32, #tpu.memory_space<vmem>>, %arg5: memref<2x4x32x8xbf16, #tpu.memory_space<vmem>>, %arg6: memref<2x4x32x8xbf16, #tpu.memory_space<vmem>>, %arg7: memref<2x4x32x8xbf16, #tpu.memory_space<vmem>>, %arg8: memref<2x4x1x8xf32, #tpu.memory_space<vmem>>, %arg9: memref<2x4x1x8xf32, #tpu.memory_space<vmem>>, %arg10: memref<2x4x1x8xf32, #tpu.memory_space<vmem>>, %arg11: memref<2x4x8x32xbf16, #tpu.memory_space<vmem>>, %arg12: memref<2x1x32xf32, #tpu.memory_space<vmem>>, %arg13: memref<2x1x32xf32, #tpu.memory_space<vmem>>, %arg14: memref<2x1x32xf32, #tpu.memory_space<vmem>>, %arg15: memref<2x32x32xbf16, #tpu.memory_space<vmem>>, %arg16: memref<2x1x32xf32, #tpu.memory_space<vmem>>, %arg17: memref<2x32x32xbf16, #tpu.memory_space<vmem>>, %arg18: memref<2x1x32xf32, #tpu.memory_space<vmem>>, %arg19: memref<2x1x32xf32, #tpu.memory_space<vmem>>, %arg20: memref<2x1x32xf32, #tpu.memory_space<vmem>>, %arg21: memref<32x128xbf16, #tpu.memory_space<vmem>>, %arg22: memref<1x128xf32, #tpu.memory_space<vmem>>, %arg23: memref<8x128xf32, #tpu.memory_space<vmem>>) attributes {dimension_semantics = [#tpu.dimension_semantics<parallel>], iteration_bounds = array<i64: 2>, scalar_prefetch = 0 : i64, scratch_operands = 0 : i64, tpu.core_type = #tpu.core_type<tc>, window_params = [{transform_indices = @transform_0, window_bounds = array<i64: 8, 4>}, {pipeline_mode = #tpu.pipeline_mode<synchronous>, transform_indices = @transform_1, window_bounds = array<i64: 8, 32>}, {pipeline_mode = #tpu.pipeline_mode<synchronous>, transform_indices = @transform_2, window_bounds = array<i64: 4, 32>}, {pipeline_mode = #tpu.pipeline_mode<synchronous>, transform_indices = @transform_3, window_bounds = array<i64: 1, 32>}, {pipeline_mode = #tpu.pipeline_mode<synchronous>, transform_indices = @transform_4, window_bounds = array<i64: 2, 4, 32, 8>}, {pipeline_mode = #tpu.pipeline_mode<synchronous>, transform_indices = @transform_5, window_bounds = array<i64: 2, 4, 32, 8>}, {pipeline_mode = #tpu.pipeline_mode<synchronous>, transform_indices = @transform_6, window_bounds = array<i64: 2, 4, 32, 8>}, {pipeline_mode = #tpu.pipeline_mode<synchronous>, transform_indices = @transform_7, window_bounds = array<i64: 2, 4, 1, 8>}, {pipeline_mode = #tpu.pipeline_mode<synchronous>, transform_indices = @transform_8, window_bounds = array<i64: 2, 4, 1, 8>}, {pipeline_mode = #tpu.pipeline_mode<synchronous>, transform_indices = @transform_9, window_bounds = array<i64: 2, 4, 1, 8>}, {pipeline_mode = #tpu.pipeline_mode<synchronous>, transform_indices = @transform_10, window_bounds = array<i64: 2, 4, 8, 32>}, {pipeline_mode = #tpu.pipeline_mode<synchronous>, transform_indices = @transform_11, window_bounds = array<i64: 2, 1, 32>}, {pipeline_mode = #tpu.pipeline_mode<synchronous>, transform_indices = @transform_12, window_bounds = array<i64: 2, 1, 32>}, {pipeline_mode = #tpu.pipeline_mode<synchronous>, transform_indices = @transform_13, window_bounds = array<i64: 2, 1, 32>}, {pipeline_mode = #tpu.pipeline_mode<synchronous>, transform_indices = @transform_14, window_bounds = array<i64: 2, 32, 32>}, {pipeline_mode = #tpu.pipeline_mode<synchronous>, transform_indices = @transform_15, window_bounds = array<i64: 2, 1, 32>}, {pipeline_mode = #tpu.pipeline_mode<synchronous>, transform_indices = @transform_16, window_bounds = array<i64: 2, 32, 32>}, {pipeline_mode = #tpu.pipeline_mode<synchronous>, transform_indices = @transform_17, window_bounds = array<i64: 2, 1, 32>}, {pipeline_mode = #tpu.pipeline_mode<synchronous>, transform_indices = @transform_18, window_bounds = array<i64: 2, 1, 32>}, {pipeline_mode = #tpu.pipeline_mode<synchronous>, transform_indices = @transform_19, window_bounds = array<i64: 2, 1, 32>}, {pipeline_mode = #tpu.pipeline_mode<synchronous>, transform_indices = @transform_20, window_bounds = array<i64: 32, 128>}, {pipeline_mode = #tpu.pipeline_mode<synchronous>, transform_indices = @transform_21, window_bounds = array<i64: 1, 128>}, {transform_indices = @transform_22, window_bounds = array<i64: 8, 128>}]} {
    %c0 = arith.constant 0 : index
    %c0_0 = arith.constant 0 : index
    %0 = vector.load %arg1[%c0, %c0_0] : memref<8x4xf32, #tpu.memory_space<vmem>>, vector<8x4xf32>
    %1 = arith.truncf %0 : vector<8x4xf32> to vector<8x4xbf16>
    %c0_1 = arith.constant 0 : index
    %c0_2 = arith.constant 0 : index
    %2 = vector.load %arg3[%c0_1, %c0_2] : memref<4x32xbf16, #tpu.memory_space<vmem>>, vector<4x32xbf16>
    %cst = arith.constant dense<0.000000e+00> : vector<8x32xf32>
    %3 = tpu.matmul %1, %2, %cst {dimension_numbers = #tpu.dot_dimension_numbers<[1], [0], [0], [1], [0, 0, 1, 1], [], []>} : vector<8x4xbf16>, vector<4x32xbf16>, vector<8x32xf32> -> vector<8x32xf32>
    %c0_3 = arith.constant 0 : index
    %c0_4 = arith.constant 0 : index
    %4 = vector.load %arg4[%c0_3, %c0_4] : memref<1x32xf32, #tpu.memory_space<vmem>>, vector<1x32xf32>
    %5 = vector.broadcast %4 : vector<1x32xf32> to vector<8x32xf32>
    %6 = arith.addf %3, %5 : vector<8x32xf32>
    %c0_5 = arith.constant 0 : index
    %c0_6 = arith.constant 0 : index
    %7 = vector.load %arg2[%c0_5, %c0_6] : memref<8x32xf32, #tpu.memory_space<vmem>>, vector<8x32xf32>
    %8 = arith.addf %6, %7 : vector<8x32xf32>
    %9 = tpu.iota {dimensions = array<i32: 0>} : vector<8x8xi32>
    %10 = tpu.iota {dimensions = array<i32: 1>} : vector<8x8xi32>
    %11 = arith.cmpi sle, %10, %9 : vector<8x8xi32>
    %cst_7 = arith.constant 0.000000e+00 : f32
    %cst_8 = arith.constant -1.000000e+30 : f32
    %12 = vector.broadcast %cst_7 : f32 to vector<8x8xf32>
    %13 = vector.broadcast %cst_8 : f32 to vector<8x8xf32>
    %14 = arith.select %11, %12, %13 : vector<8x8xi1>, vector<8x8xf32>
    %15 = vector.shape_cast %14 : vector<8x8xf32> to vector<1x8x8xf32>
    %16 = vector.broadcast %15 : vector<1x8x8xf32> to vector<4x8x8xf32>
    %17 = arith.truncf %8 : vector<8x32xf32> to vector<8x32xbf16>
    %18 = vector.shape_cast %17 : vector<8x32xbf16> to vector<1x8x32xbf16>
    %19 = vector.broadcast %18 : vector<1x8x32xbf16> to vector<4x8x32xbf16>
    %c0_9 = arith.constant 0 : index
    %c0_10 = arith.constant 0 : index
    %c0_11 = arith.constant 0 : index
    %c0_12 = arith.constant 0 : index
    %20 = vector.load %arg5[%c0_9, %c0_10, %c0_11, %c0_12] : memref<2x4x32x8xbf16, #tpu.memory_space<vmem>>, vector<1x4x32x8xbf16>
    %21 = vector.shape_cast %20 : vector<1x4x32x8xbf16> to vector<4x32x8xbf16>
    "tpu.trace_start"() <{level = 10 : i32, message = "hcd,hde->hce"}> : () -> ()
    %cst_13 = arith.constant dense<0.000000e+00> : vector<4x8x8xf32>
    %22 = tpu.matmul %19, %21, %cst_13 {dimension_numbers = #tpu.dot_dimension_numbers<[2], [1], [1], [2], [0, 0, 0, 1, 1, 2], [0], [0]>} : vector<4x8x32xbf16>, vector<4x32x8xbf16>, vector<4x8x8xf32> -> vector<4x8x8xf32>
    "tpu.trace_stop"() : () -> ()
    %c0_14 = arith.constant 0 : index
    %c0_15 = arith.constant 0 : index
    %c0_16 = arith.constant 0 : index
    %c0_17 = arith.constant 0 : index
    %23 = vector.load %arg8[%c0_14, %c0_15, %c0_16, %c0_17] : memref<2x4x1x8xf32, #tpu.memory_space<vmem>>, vector<1x4x1x8xf32>
    %24 = vector.shape_cast %23 : vector<1x4x1x8xf32> to vector<4x1x8xf32>
    %25 = vector.broadcast %24 : vector<4x1x8xf32> to vector<4x8x8xf32>
    %26 = arith.addf %22, %25 : vector<4x8x8xf32>
    %c0_18 = arith.constant 0 : index
    %c0_19 = arith.constant 0 : index
    %c0_20 = arith.constant 0 : index
    %c0_21 = arith.constant 0 : index
    %27 = vector.load %arg6[%c0_18, %c0_19, %c0_20, %c0_21] : memref<2x4x32x8xbf16, #tpu.memory_space<vmem>>, vector<1x4x32x8xbf16>
    %28 = vector.shape_cast %27 : vector<1x4x32x8xbf16> to vector<4x32x8xbf16>
    "tpu.trace_start"() <{level = 10 : i32, message = "hcd,hde->hce"}> : () -> ()
    %cst_22 = arith.constant dense<0.000000e+00> : vector<4x8x8xf32>
    %29 = tpu.matmul %19, %28, %cst_22 {dimension_numbers = #tpu.dot_dimension_numbers<[2], [1], [1], [2], [0, 0, 0, 1, 1, 2], [0], [0]>} : vector<4x8x32xbf16>, vector<4x32x8xbf16>, vector<4x8x8xf32> -> vector<4x8x8xf32>
    "tpu.trace_stop"() : () -> ()
    %c0_23 = arith.constant 0 : index
    %c0_24 = arith.constant 0 : index
    %c0_25 = arith.constant 0 : index
    %c0_26 = arith.constant 0 : index
    %30 = vector.load %arg9[%c0_23, %c0_24, %c0_25, %c0_26] : memref<2x4x1x8xf32, #tpu.memory_space<vmem>>, vector<1x4x1x8xf32>
    %31 = vector.shape_cast %30 : vector<1x4x1x8xf32> to vector<4x1x8xf32>
    %32 = vector.broadcast %31 : vector<4x1x8xf32> to vector<4x8x8xf32>
    %33 = arith.addf %29, %32 : vector<4x8x8xf32>
    %c0_27 = arith.constant 0 : index
    %c0_28 = arith.constant 0 : index
    %c0_29 = arith.constant 0 : index
    %c0_30 = arith.constant 0 : index
    %34 = vector.load %arg7[%c0_27, %c0_28, %c0_29, %c0_30] : memref<2x4x32x8xbf16, #tpu.memory_space<vmem>>, vector<1x4x32x8xbf16>
    %35 = vector.shape_cast %34 : vector<1x4x32x8xbf16> to vector<4x32x8xbf16>
    "tpu.trace_start"() <{level = 10 : i32, message = "hcd,hde->hce"}> : () -> ()
    %cst_31 = arith.constant dense<0.000000e+00> : vector<4x8x8xf32>
    %36 = tpu.matmul %19, %35, %cst_31 {dimension_numbers = #tpu.dot_dimension_numbers<[2], [1], [1], [2], [0, 0, 0, 1, 1, 2], [0], [0]>} : vector<4x8x32xbf16>, vector<4x32x8xbf16>, vector<4x8x8xf32> -> vector<4x8x8xf32>
    "tpu.trace_stop"() : () -> ()
    %c0_32 = arith.constant 0 : index
    %c0_33 = arith.constant 0 : index
    %c0_34 = arith.constant 0 : index
    %c0_35 = arith.constant 0 : index
    %37 = vector.load %arg10[%c0_32, %c0_33, %c0_34, %c0_35] : memref<2x4x1x8xf32, #tpu.memory_space<vmem>>, vector<1x4x1x8xf32>
    %38 = vector.shape_cast %37 : vector<1x4x1x8xf32> to vector<4x1x8xf32>
    %39 = vector.broadcast %38 : vector<4x1x8xf32> to vector<4x8x8xf32>
    %40 = arith.addf %36, %39 : vector<4x8x8xf32>
    %41 = arith.truncf %26 : vector<4x8x8xf32> to vector<4x8x8xbf16>
    %42 = arith.truncf %33 : vector<4x8x8xf32> to vector<4x8x8xbf16>
    "tpu.trace_start"() <{level = 10 : i32, message = "hqd,hkd->hqk"}> : () -> ()
    %cst_36 = arith.constant dense<0.000000e+00> : vector<4x8x8xf32>
    %43 = tpu.matmul %41, %42, %cst_36 {dimension_numbers = #tpu.dot_dimension_numbers<[2], [2], [1], [1], [0, 0, 0, 1, 1, 1], [0], [0]>} : vector<4x8x8xbf16>, vector<4x8x8xbf16>, vector<4x8x8xf32> -> vector<4x8x8xf32>
    "tpu.trace_stop"() : () -> ()
    %cst_37 = arith.constant 0.353553385 : f32
    %44 = vector.broadcast %cst_37 : f32 to vector<4x8x8xf32>
    %45 = arith.mulf %43, %44 : vector<4x8x8xf32>
    %46 = arith.addf %45, %16 : vector<4x8x8xf32>
    %cst_38 = arith.constant dense<0xFF800000> : vector<4x8xf32>
    %47 = vector.multi_reduction <maximumf>, %46, %cst_38 [2] : vector<4x8x8xf32> to vector<4x8xf32>
    %48 = vector.shape_cast %47 : vector<4x8xf32> to vector<4x8x1xf32>
    %49 = vector.broadcast %48 : vector<4x8x1xf32> to vector<4x8x8xf32>
    %50 = arith.subf %46, %49 : vector<4x8x8xf32>
    %51 = math.exp %50 : vector<4x8x8xf32>
    %cst_39 = arith.constant dense<0.000000e+00> : vector<4x8xf32>
    %52 = vector.multi_reduction <add>, %51, %cst_39 [2] : vector<4x8x8xf32> to vector<4x8xf32>
    %53 = vector.shape_cast %52 : vector<4x8xf32> to vector<4x8x1xf32>
    %54 = tpu.reciprocal %53 {approx = true} : vector<4x8x1xf32> -> vector<4x8x1xf32>
    %55 = vector.broadcast %54 : vector<4x8x1xf32> to vector<4x8x8xf32>
    %56 = arith.mulf %51, %55 : vector<4x8x8xf32>
    %57 = arith.truncf %56 : vector<4x8x8xf32> to vector<4x8x8xbf16>
    %58 = arith.truncf %40 : vector<4x8x8xf32> to vector<4x8x8xbf16>
    "tpu.trace_start"() <{level = 10 : i32, message = "hqk,hkd->hqd"}> : () -> ()
    %cst_40 = arith.constant dense<0.000000e+00> : vector<4x8x8xf32>
    %59 = tpu.matmul %57, %58, %cst_40 {dimension_numbers = #tpu.dot_dimension_numbers<[2], [1], [1], [2], [0, 0, 0, 1, 1, 2], [0], [0]>} : vector<4x8x8xbf16>, vector<4x8x8xbf16>, vector<4x8x8xf32> -> vector<4x8x8xf32>
    "tpu.trace_stop"() : () -> ()
    %60 = arith.truncf %59 : vector<4x8x8xf32> to vector<4x8x8xbf16>
    %c0_41 = arith.constant 0 : index
    %c0_42 = arith.constant 0 : index
    %c0_43 = arith.constant 0 : index
    %c0_44 = arith.constant 0 : index
    %61 = vector.load %arg11[%c0_41, %c0_42, %c0_43, %c0_44] : memref<2x4x8x32xbf16, #tpu.memory_space<vmem>>, vector<1x4x8x32xbf16>
    %62 = vector.shape_cast %61 : vector<1x4x8x32xbf16> to vector<4x8x32xbf16>
    "tpu.trace_start"() <{level = 10 : i32, message = "hqd,hde->hqe"}> : () -> ()
    %cst_45 = arith.constant dense<0.000000e+00> : vector<4x8x32xf32>
    %63 = tpu.matmul %60, %62, %cst_45 {dimension_numbers = #tpu.dot_dimension_numbers<[2], [1], [1], [2], [0, 0, 0, 1, 1, 2], [0], [0]>} : vector<4x8x8xbf16>, vector<4x8x32xbf16>, vector<4x8x32xf32> -> vector<4x8x32xf32>
    "tpu.trace_stop"() : () -> ()
    %cst_46 = arith.constant dense<0.000000e+00> : vector<8x32xf32>
    %64 = vector.multi_reduction <add>, %63, %cst_46 [0] : vector<4x8x32xf32> to vector<8x32xf32>
    %c0_47 = arith.constant 0 : index
    %c0_48 = arith.constant 0 : index
    %c0_49 = arith.constant 0 : index
    %65 = vector.load %arg12[%c0_47, %c0_48, %c0_49] : memref<2x1x32xf32, #tpu.memory_space<vmem>>, vector<1x1x32xf32>
    %66 = vector.shape_cast %65 : vector<1x1x32xf32> to vector<1x32xf32>
    %67 = vector.broadcast %66 : vector<1x32xf32> to vector<8x32xf32>
    %68 = arith.addf %64, %67 : vector<8x32xf32>
    %69 = arith.addf %8, %68 : vector<8x32xf32>
    %c0_50 = arith.constant 0 : index
    %c0_51 = arith.constant 0 : index
    %c0_52 = arith.constant 0 : index
    %70 = vector.load %arg13[%c0_50, %c0_51, %c0_52] : memref<2x1x32xf32, #tpu.memory_space<vmem>>, vector<1x1x32xf32>
    %71 = vector.shape_cast %70 : vector<1x1x32xf32> to vector<1x32xf32>
    %c0_53 = arith.constant 0 : index
    %c0_54 = arith.constant 0 : index
    %c0_55 = arith.constant 0 : index
    %72 = vector.load %arg14[%c0_53, %c0_54, %c0_55] : memref<2x1x32xf32, #tpu.memory_space<vmem>>, vector<1x1x32xf32>
    %73 = vector.shape_cast %72 : vector<1x1x32xf32> to vector<1x32xf32>
    %cst_56 = arith.constant dense<0.000000e+00> : vector<8xf32>
    %74 = vector.multi_reduction <add>, %69, %cst_56 [1] : vector<8x32xf32> to vector<8xf32>
    %75 = vector.shape_cast %74 : vector<8xf32> to vector<8x1xf32>
    %cst_57 = arith.constant 3.200000e+01 : f32
    %76 = vector.broadcast %cst_57 : f32 to vector<8x1xf32>
    %77 = arith.divf %75, %76 : vector<8x1xf32>
    %78 = vector.broadcast %77 : vector<8x1xf32> to vector<8x32xf32>
    %79 = arith.subf %69, %78 : vector<8x32xf32>
    %80 = arith.mulf %79, %79 : vector<8x32xf32>
    %cst_58 = arith.constant dense<0.000000e+00> : vector<8xf32>
    %81 = vector.multi_reduction <add>, %80, %cst_58 [1] : vector<8x32xf32> to vector<8xf32>
    %82 = vector.shape_cast %81 : vector<8xf32> to vector<8x1xf32>
    %cst_59 = arith.constant 3.200000e+01 : f32
    %83 = vector.broadcast %cst_59 : f32 to vector<8x1xf32>
    %84 = arith.divf %82, %83 : vector<8x1xf32>
    %85 = vector.broadcast %77 : vector<8x1xf32> to vector<8x32xf32>
    %86 = arith.subf %69, %85 : vector<8x32xf32>
    %cst_60 = arith.constant 9.99999974E-6 : f32
    %87 = vector.broadcast %cst_60 : f32 to vector<8x1xf32>
    %88 = arith.addf %84, %87 : vector<8x1xf32>
    %89 = math.rsqrt %88 : vector<8x1xf32>
    %90 = vector.broadcast %89 : vector<8x1xf32> to vector<8x32xf32>
    %91 = vector.broadcast %71 : vector<1x32xf32> to vector<8x32xf32>
    %92 = arith.mulf %90, %91 : vector<8x32xf32>
    %93 = arith.mulf %86, %92 : vector<8x32xf32>
    %94 = vector.broadcast %73 : vector<1x32xf32> to vector<8x32xf32>
    %95 = arith.addf %93, %94 : vector<8x32xf32>
    %96 = arith.truncf %95 : vector<8x32xf32> to vector<8x32xbf16>
    %c0_61 = arith.constant 0 : index
    %c0_62 = arith.constant 0 : index
    %c0_63 = arith.constant 0 : index
    %97 = vector.load %arg15[%c0_61, %c0_62, %c0_63] : memref<2x32x32xbf16, #tpu.memory_space<vmem>>, vector<1x32x32xbf16>
    %98 = vector.shape_cast %97 : vector<1x32x32xbf16> to vector<32x32xbf16>
    %cst_64 = arith.constant dense<0.000000e+00> : vector<8x32xf32>
    %99 = tpu.matmul %96, %98, %cst_64 {dimension_numbers = #tpu.dot_dimension_numbers<[1], [0], [0], [1], [0, 0, 1, 1], [], []>} : vector<8x32xbf16>, vector<32x32xbf16>, vector<8x32xf32> -> vector<8x32xf32>
    %c0_65 = arith.constant 0 : index
    %c0_66 = arith.constant 0 : index
    %c0_67 = arith.constant 0 : index
    %100 = vector.load %arg16[%c0_65, %c0_66, %c0_67] : memref<2x1x32xf32, #tpu.memory_space<vmem>>, vector<1x1x32xf32>
    %101 = vector.shape_cast %100 : vector<1x1x32xf32> to vector<1x32xf32>
    %102 = vector.broadcast %101 : vector<1x32xf32> to vector<8x32xf32>
    %103 = arith.addf %99, %102 : vector<8x32xf32>
    %cst_68 = arith.constant 0.000000e+00 : f32
    %104 = vector.broadcast %cst_68 : f32 to vector<8x32xf32>
    %105 = arith.maximumf %103, %104 : vector<8x32xf32>
    %106 = arith.truncf %105 : vector<8x32xf32> to vector<8x32xbf16>
    %c0_69 = arith.constant 0 : index
    %c0_70 = arith.constant 0 : index
    %c0_71 = arith.constant 0 : index
    %107 = vector.load %arg17[%c0_69, %c0_70, %c0_71] : memref<2x32x32xbf16, #tpu.memory_space<vmem>>, vector<1x32x32xbf16>
    %108 = vector.shape_cast %107 : vector<1x32x32xbf16> to vector<32x32xbf16>
    %cst_72 = arith.constant dense<0.000000e+00> : vector<8x32xf32>
    %109 = tpu.matmul %106, %108, %cst_72 {dimension_numbers = #tpu.dot_dimension_numbers<[1], [0], [0], [1], [0, 0, 1, 1], [], []>} : vector<8x32xbf16>, vector<32x32xbf16>, vector<8x32xf32> -> vector<8x32xf32>
    %c0_73 = arith.constant 0 : index
    %c0_74 = arith.constant 0 : index
    %c0_75 = arith.constant 0 : index
    %110 = vector.load %arg18[%c0_73, %c0_74, %c0_75] : memref<2x1x32xf32, #tpu.memory_space<vmem>>, vector<1x1x32xf32>
    %111 = vector.shape_cast %110 : vector<1x1x32xf32> to vector<1x32xf32>
    %112 = vector.broadcast %111 : vector<1x32xf32> to vector<8x32xf32>
    %113 = arith.addf %109, %112 : vector<8x32xf32>
    %114 = arith.addf %95, %113 : vector<8x32xf32>
    %c0_76 = arith.constant 0 : index
    %c0_77 = arith.constant 0 : index
    %c0_78 = arith.constant 0 : index
    %115 = vector.load %arg19[%c0_76, %c0_77, %c0_78] : memref<2x1x32xf32, #tpu.memory_space<vmem>>, vector<1x1x32xf32>
    %116 = vector.shape_cast %115 : vector<1x1x32xf32> to vector<1x32xf32>
    %c0_79 = arith.constant 0 : index
    %c0_80 = arith.constant 0 : index
    %c0_81 = arith.constant 0 : index
    %117 = vector.load %arg20[%c0_79, %c0_80, %c0_81] : memref<2x1x32xf32, #tpu.memory_space<vmem>>, vector<1x1x32xf32>
    %118 = vector.shape_cast %117 : vector<1x1x32xf32> to vector<1x32xf32>
    %cst_82 = arith.constant dense<0.000000e+00> : vector<8xf32>
    %119 = vector.multi_reduction <add>, %114, %cst_82 [1] : vector<8x32xf32> to vector<8xf32>
    %120 = vector.shape_cast %119 : vector<8xf32> to vector<8x1xf32>
    %cst_83 = arith.constant 3.200000e+01 : f32
    %121 = vector.broadcast %cst_83 : f32 to vector<8x1xf32>
    %122 = arith.divf %120, %121 : vector<8x1xf32>
    %123 = vector.broadcast %122 : vector<8x1xf32> to vector<8x32xf32>
    %124 = arith.subf %114, %123 : vector<8x32xf32>
    %125 = arith.mulf %124, %124 : vector<8x32xf32>
    %cst_84 = arith.constant dense<0.000000e+00> : vector<8xf32>
    %126 = vector.multi_reduction <add>, %125, %cst_84 [1] : vector<8x32xf32> to vector<8xf32>
    %127 = vector.shape_cast %126 : vector<8xf32> to vector<8x1xf32>
    %cst_85 = arith.constant 3.200000e+01 : f32
    %128 = vector.broadcast %cst_85 : f32 to vector<8x1xf32>
    %129 = arith.divf %127, %128 : vector<8x1xf32>
    %130 = vector.broadcast %122 : vector<8x1xf32> to vector<8x32xf32>
    %131 = arith.subf %114, %130 : vector<8x32xf32>
    %cst_86 = arith.constant 9.99999974E-6 : f32
    %132 = vector.broadcast %cst_86 : f32 to vector<8x1xf32>
    %133 = arith.addf %129, %132 : vector<8x1xf32>
    %134 = math.rsqrt %133 : vector<8x1xf32>
    %135 = vector.broadcast %134 : vector<8x1xf32> to vector<8x32xf32>
    %136 = vector.broadcast %116 : vector<1x32xf32> to vector<8x32xf32>
    %137 = arith.mulf %135, %136 : vector<8x32xf32>
    %138 = arith.mulf %131, %137 : vector<8x32xf32>
    %139 = vector.broadcast %118 : vector<1x32xf32> to vector<8x32xf32>
    %140 = arith.addf %138, %139 : vector<8x32xf32>
    %141 = arith.truncf %140 : vector<8x32xf32> to vector<8x32xbf16>
    %142 = vector.shape_cast %141 : vector<8x32xbf16> to vector<1x8x32xbf16>
    %143 = vector.broadcast %142 : vector<1x8x32xbf16> to vector<4x8x32xbf16>
    %c1 = arith.constant 1 : index
    %c0_87 = arith.constant 0 : index
    %c0_88 = arith.constant 0 : index
    %c0_89 = arith.constant 0 : index
    %144 = vector.load %arg5[%c1, %c0_87, %c0_88, %c0_89] : memref<2x4x32x8xbf16, #tpu.memory_space<vmem>>, vector<1x4x32x8xbf16>
    %145 = vector.shape_cast %144 : vector<1x4x32x8xbf16> to vector<4x32x8xbf16>
    "tpu.trace_start"() <{level = 10 : i32, message = "hcd,hde->hce"}> : () -> ()
    %cst_90 = arith.constant dense<0.000000e+00> : vector<4x8x8xf32>
    %146 = tpu.matmul %143, %145, %cst_90 {dimension_numbers = #tpu.dot_dimension_numbers<[2], [1], [1], [2], [0, 0, 0, 1, 1, 2], [0], [0]>} : vector<4x8x32xbf16>, vector<4x32x8xbf16>, vector<4x8x8xf32> -> vector<4x8x8xf32>
    "tpu.trace_stop"() : () -> ()
    %c1_91 = arith.constant 1 : index
    %c0_92 = arith.constant 0 : index
    %c0_93 = arith.constant 0 : index
    %c0_94 = arith.constant 0 : index
    %147 = vector.load %arg8[%c1_91, %c0_92, %c0_93, %c0_94] : memref<2x4x1x8xf32, #tpu.memory_space<vmem>>, vector<1x4x1x8xf32>
    %148 = vector.shape_cast %147 : vector<1x4x1x8xf32> to vector<4x1x8xf32>
    %149 = vector.broadcast %148 : vector<4x1x8xf32> to vector<4x8x8xf32>
    %150 = arith.addf %146, %149 : vector<4x8x8xf32>
    %c1_95 = arith.constant 1 : index
    %c0_96 = arith.constant 0 : index
    %c0_97 = arith.constant 0 : index
    %c0_98 = arith.constant 0 : index
    %151 = vector.load %arg6[%c1_95, %c0_96, %c0_97, %c0_98] : memref<2x4x32x8xbf16, #tpu.memory_space<vmem>>, vector<1x4x32x8xbf16>
    %152 = vector.shape_cast %151 : vector<1x4x32x8xbf16> to vector<4x32x8xbf16>
    "tpu.trace_start"() <{level = 10 : i32, message = "hcd,hde->hce"}> : () -> ()
    %cst_99 = arith.constant dense<0.000000e+00> : vector<4x8x8xf32>
    %153 = tpu.matmul %143, %152, %cst_99 {dimension_numbers = #tpu.dot_dimension_numbers<[2], [1], [1], [2], [0, 0, 0, 1, 1, 2], [0], [0]>} : vector<4x8x32xbf16>, vector<4x32x8xbf16>, vector<4x8x8xf32> -> vector<4x8x8xf32>
    "tpu.trace_stop"() : () -> ()
    %c1_100 = arith.constant 1 : index
    %c0_101 = arith.constant 0 : index
    %c0_102 = arith.constant 0 : index
    %c0_103 = arith.constant 0 : index
    %154 = vector.load %arg9[%c1_100, %c0_101, %c0_102, %c0_103] : memref<2x4x1x8xf32, #tpu.memory_space<vmem>>, vector<1x4x1x8xf32>
    %155 = vector.shape_cast %154 : vector<1x4x1x8xf32> to vector<4x1x8xf32>
    %156 = vector.broadcast %155 : vector<4x1x8xf32> to vector<4x8x8xf32>
    %157 = arith.addf %153, %156 : vector<4x8x8xf32>
    %c1_104 = arith.constant 1 : index
    %c0_105 = arith.constant 0 : index
    %c0_106 = arith.constant 0 : index
    %c0_107 = arith.constant 0 : index
    %158 = vector.load %arg7[%c1_104, %c0_105, %c0_106, %c0_107] : memref<2x4x32x8xbf16, #tpu.memory_space<vmem>>, vector<1x4x32x8xbf16>
    %159 = vector.shape_cast %158 : vector<1x4x32x8xbf16> to vector<4x32x8xbf16>
    "tpu.trace_start"() <{level = 10 : i32, message = "hcd,hde->hce"}> : () -> ()
    %cst_108 = arith.constant dense<0.000000e+00> : vector<4x8x8xf32>
    %160 = tpu.matmul %143, %159, %cst_108 {dimension_numbers = #tpu.dot_dimension_numbers<[2], [1], [1], [2], [0, 0, 0, 1, 1, 2], [0], [0]>} : vector<4x8x32xbf16>, vector<4x32x8xbf16>, vector<4x8x8xf32> -> vector<4x8x8xf32>
    "tpu.trace_stop"() : () -> ()
    %c1_109 = arith.constant 1 : index
    %c0_110 = arith.constant 0 : index
    %c0_111 = arith.constant 0 : index
    %c0_112 = arith.constant 0 : index
    %161 = vector.load %arg10[%c1_109, %c0_110, %c0_111, %c0_112] : memref<2x4x1x8xf32, #tpu.memory_space<vmem>>, vector<1x4x1x8xf32>
    %162 = vector.shape_cast %161 : vector<1x4x1x8xf32> to vector<4x1x8xf32>
    %163 = vector.broadcast %162 : vector<4x1x8xf32> to vector<4x8x8xf32>
    %164 = arith.addf %160, %163 : vector<4x8x8xf32>
    %165 = arith.truncf %150 : vector<4x8x8xf32> to vector<4x8x8xbf16>
    %166 = arith.truncf %157 : vector<4x8x8xf32> to vector<4x8x8xbf16>
    "tpu.trace_start"() <{level = 10 : i32, message = "hqd,hkd->hqk"}> : () -> ()
    %cst_113 = arith.constant dense<0.000000e+00> : vector<4x8x8xf32>
    %167 = tpu.matmul %165, %166, %cst_113 {dimension_numbers = #tpu.dot_dimension_numbers<[2], [2], [1], [1], [0, 0, 0, 1, 1, 1], [0], [0]>} : vector<4x8x8xbf16>, vector<4x8x8xbf16>, vector<4x8x8xf32> -> vector<4x8x8xf32>
    "tpu.trace_stop"() : () -> ()
    %cst_114 = arith.constant 0.353553385 : f32
    %168 = vector.broadcast %cst_114 : f32 to vector<4x8x8xf32>
    %169 = arith.mulf %167, %168 : vector<4x8x8xf32>
    %170 = arith.addf %169, %16 : vector<4x8x8xf32>
    %cst_115 = arith.constant dense<0xFF800000> : vector<4x8xf32>
    %171 = vector.multi_reduction <maximumf>, %170, %cst_115 [2] : vector<4x8x8xf32> to vector<4x8xf32>
    %172 = vector.shape_cast %171 : vector<4x8xf32> to vector<4x8x1xf32>
    %173 = vector.broadcast %172 : vector<4x8x1xf32> to vector<4x8x8xf32>
    %174 = arith.subf %170, %173 : vector<4x8x8xf32>
    %175 = math.exp %174 : vector<4x8x8xf32>
    %cst_116 = arith.constant dense<0.000000e+00> : vector<4x8xf32>
    %176 = vector.multi_reduction <add>, %175, %cst_116 [2] : vector<4x8x8xf32> to vector<4x8xf32>
    %177 = vector.shape_cast %176 : vector<4x8xf32> to vector<4x8x1xf32>
    %178 = tpu.reciprocal %177 {approx = true} : vector<4x8x1xf32> -> vector<4x8x1xf32>
    %179 = vector.broadcast %178 : vector<4x8x1xf32> to vector<4x8x8xf32>
    %180 = arith.mulf %175, %179 : vector<4x8x8xf32>
    %181 = arith.truncf %180 : vector<4x8x8xf32> to vector<4x8x8xbf16>
    %182 = arith.truncf %164 : vector<4x8x8xf32> to vector<4x8x8xbf16>
    "tpu.trace_start"() <{level = 10 : i32, message = "hqk,hkd->hqd"}> : () -> ()
    %cst_117 = arith.constant dense<0.000000e+00> : vector<4x8x8xf32>
    %183 = tpu.matmul %181, %182, %cst_117 {dimension_numbers = #tpu.dot_dimension_numbers<[2], [1], [1], [2], [0, 0, 0, 1, 1, 2], [0], [0]>} : vector<4x8x8xbf16>, vector<4x8x8xbf16>, vector<4x8x8xf32> -> vector<4x8x8xf32>
    "tpu.trace_stop"() : () -> ()
    %184 = arith.truncf %183 : vector<4x8x8xf32> to vector<4x8x8xbf16>
    %c1_118 = arith.constant 1 : index
    %c0_119 = arith.constant 0 : index
    %c0_120 = arith.constant 0 : index
    %c0_121 = arith.constant 0 : index
    %185 = vector.load %arg11[%c1_118, %c0_119, %c0_120, %c0_121] : memref<2x4x8x32xbf16, #tpu.memory_space<vmem>>, vector<1x4x8x32xbf16>
    %186 = vector.shape_cast %185 : vector<1x4x8x32xbf16> to vector<4x8x32xbf16>
    "tpu.trace_start"() <{level = 10 : i32, message = "hqd,hde->hqe"}> : () -> ()
    %cst_122 = arith.constant dense<0.000000e+00> : vector<4x8x32xf32>
    %187 = tpu.matmul %184, %186, %cst_122 {dimension_numbers = #tpu.dot_dimension_numbers<[2], [1], [1], [2], [0, 0, 0, 1, 1, 2], [0], [0]>} : vector<4x8x8xbf16>, vector<4x8x32xbf16>, vector<4x8x32xf32> -> vector<4x8x32xf32>
    "tpu.trace_stop"() : () -> ()
    %cst_123 = arith.constant dense<0.000000e+00> : vector<8x32xf32>
    %188 = vector.multi_reduction <add>, %187, %cst_123 [0] : vector<4x8x32xf32> to vector<8x32xf32>
    %c1_124 = arith.constant 1 : index
    %c0_125 = arith.constant 0 : index
    %c0_126 = arith.constant 0 : index
    %189 = vector.load %arg12[%c1_124, %c0_125, %c0_126] : memref<2x1x32xf32, #tpu.memory_space<vmem>>, vector<1x1x32xf32>
    %190 = vector.shape_cast %189 : vector<1x1x32xf32> to vector<1x32xf32>
    %191 = vector.broadcast %190 : vector<1x32xf32> to vector<8x32xf32>
    %192 = arith.addf %188, %191 : vector<8x32xf32>
    %193 = arith.addf %140, %192 : vector<8x32xf32>
    %c1_127 = arith.constant 1 : index
    %c0_128 = arith.constant 0 : index
    %c0_129 = arith.constant 0 : index
    %194 = vector.load %arg13[%c1_127, %c0_128, %c0_129] : memref<2x1x32xf32, #tpu.memory_space<vmem>>, vector<1x1x32xf32>
    %195 = vector.shape_cast %194 : vector<1x1x32xf32> to vector<1x32xf32>
    %c1_130 = arith.constant 1 : index
    %c0_131 = arith.constant 0 : index
    %c0_132 = arith.constant 0 : index
    %196 = vector.load %arg14[%c1_130, %c0_131, %c0_132] : memref<2x1x32xf32, #tpu.memory_space<vmem>>, vector<1x1x32xf32>
    %197 = vector.shape_cast %196 : vector<1x1x32xf32> to vector<1x32xf32>
    %cst_133 = arith.constant dense<0.000000e+00> : vector<8xf32>
    %198 = vector.multi_reduction <add>, %193, %cst_133 [1] : vector<8x32xf32> to vector<8xf32>
    %199 = vector.shape_cast %198 : vector<8xf32> to vector<8x1xf32>
    %cst_134 = arith.constant 3.200000e+01 : f32
    %200 = vector.broadcast %cst_134 : f32 to vector<8x1xf32>
    %201 = arith.divf %199, %200 : vector<8x1xf32>
    %202 = vector.broadcast %201 : vector<8x1xf32> to vector<8x32xf32>
    %203 = arith.subf %193, %202 : vector<8x32xf32>
    %204 = arith.mulf %203, %203 : vector<8x32xf32>
    %cst_135 = arith.constant dense<0.000000e+00> : vector<8xf32>
    %205 = vector.multi_reduction <add>, %204, %cst_135 [1] : vector<8x32xf32> to vector<8xf32>
    %206 = vector.shape_cast %205 : vector<8xf32> to vector<8x1xf32>
    %cst_136 = arith.constant 3.200000e+01 : f32
    %207 = vector.broadcast %cst_136 : f32 to vector<8x1xf32>
    %208 = arith.divf %206, %207 : vector<8x1xf32>
    %209 = vector.broadcast %201 : vector<8x1xf32> to vector<8x32xf32>
    %210 = arith.subf %193, %209 : vector<8x32xf32>
    %cst_137 = arith.constant 9.99999974E-6 : f32
    %211 = vector.broadcast %cst_137 : f32 to vector<8x1xf32>
    %212 = arith.addf %208, %211 : vector<8x1xf32>
    %213 = math.rsqrt %212 : vector<8x1xf32>
    %214 = vector.broadcast %213 : vector<8x1xf32> to vector<8x32xf32>
    %215 = vector.broadcast %195 : vector<1x32xf32> to vector<8x32xf32>
    %216 = arith.mulf %214, %215 : vector<8x32xf32>
    %217 = arith.mulf %210, %216 : vector<8x32xf32>
    %218 = vector.broadcast %197 : vector<1x32xf32> to vector<8x32xf32>
    %219 = arith.addf %217, %218 : vector<8x32xf32>
    %220 = arith.truncf %219 : vector<8x32xf32> to vector<8x32xbf16>
    %c1_138 = arith.constant 1 : index
    %c0_139 = arith.constant 0 : index
    %c0_140 = arith.constant 0 : index
    %221 = vector.load %arg15[%c1_138, %c0_139, %c0_140] : memref<2x32x32xbf16, #tpu.memory_space<vmem>>, vector<1x32x32xbf16>
    %222 = vector.shape_cast %221 : vector<1x32x32xbf16> to vector<32x32xbf16>
    %cst_141 = arith.constant dense<0.000000e+00> : vector<8x32xf32>
    %223 = tpu.matmul %220, %222, %cst_141 {dimension_numbers = #tpu.dot_dimension_numbers<[1], [0], [0], [1], [0, 0, 1, 1], [], []>} : vector<8x32xbf16>, vector<32x32xbf16>, vector<8x32xf32> -> vector<8x32xf32>
    %c1_142 = arith.constant 1 : index
    %c0_143 = arith.constant 0 : index
    %c0_144 = arith.constant 0 : index
    %224 = vector.load %arg16[%c1_142, %c0_143, %c0_144] : memref<2x1x32xf32, #tpu.memory_space<vmem>>, vector<1x1x32xf32>
    %225 = vector.shape_cast %224 : vector<1x1x32xf32> to vector<1x32xf32>
    %226 = vector.broadcast %225 : vector<1x32xf32> to vector<8x32xf32>
    %227 = arith.addf %223, %226 : vector<8x32xf32>
    %cst_145 = arith.constant 0.000000e+00 : f32
    %228 = vector.broadcast %cst_145 : f32 to vector<8x32xf32>
    %229 = arith.maximumf %227, %228 : vector<8x32xf32>
    %230 = arith.truncf %229 : vector<8x32xf32> to vector<8x32xbf16>
    %c1_146 = arith.constant 1 : index
    %c0_147 = arith.constant 0 : index
    %c0_148 = arith.constant 0 : index
    %231 = vector.load %arg17[%c1_146, %c0_147, %c0_148] : memref<2x32x32xbf16, #tpu.memory_space<vmem>>, vector<1x32x32xbf16>
    %232 = vector.shape_cast %231 : vector<1x32x32xbf16> to vector<32x32xbf16>
    %cst_149 = arith.constant dense<0.000000e+00> : vector<8x32xf32>
    %233 = tpu.matmul %230, %232, %cst_149 {dimension_numbers = #tpu.dot_dimension_numbers<[1], [0], [0], [1], [0, 0, 1, 1], [], []>} : vector<8x32xbf16>, vector<32x32xbf16>, vector<8x32xf32> -> vector<8x32xf32>
    %c1_150 = arith.constant 1 : index
    %c0_151 = arith.constant 0 : index
    %c0_152 = arith.constant 0 : index
    %234 = vector.load %arg18[%c1_150, %c0_151, %c0_152] : memref<2x1x32xf32, #tpu.memory_space<vmem>>, vector<1x1x32xf32>
    %235 = vector.shape_cast %234 : vector<1x1x32xf32> to vector<1x32xf32>
    %236 = vector.broadcast %235 : vector<1x32xf32> to vector<8x32xf32>
    %237 = arith.addf %233, %236 : vector<8x32xf32>
    %238 = arith.addf %219, %237 : vector<8x32xf32>
    %c1_153 = arith.constant 1 : index
    %c0_154 = arith.constant 0 : index
    %c0_155 = arith.constant 0 : index
    %239 = vector.load %arg19[%c1_153, %c0_154, %c0_155] : memref<2x1x32xf32, #tpu.memory_space<vmem>>, vector<1x1x32xf32>
    %240 = vector.shape_cast %239 : vector<1x1x32xf32> to vector<1x32xf32>
    %c1_156 = arith.constant 1 : index
    %c0_157 = arith.constant 0 : index
    %c0_158 = arith.constant 0 : index
    %241 = vector.load %arg20[%c1_156, %c0_157, %c0_158] : memref<2x1x32xf32, #tpu.memory_space<vmem>>, vector<1x1x32xf32>
    %242 = vector.shape_cast %241 : vector<1x1x32xf32> to vector<1x32xf32>
    %cst_159 = arith.constant dense<0.000000e+00> : vector<8xf32>
    %243 = vector.multi_reduction <add>, %238, %cst_159 [1] : vector<8x32xf32> to vector<8xf32>
    %244 = vector.shape_cast %243 : vector<8xf32> to vector<8x1xf32>
    %cst_160 = arith.constant 3.200000e+01 : f32
    %245 = vector.broadcast %cst_160 : f32 to vector<8x1xf32>
    %246 = arith.divf %244, %245 : vector<8x1xf32>
    %247 = vector.broadcast %246 : vector<8x1xf32> to vector<8x32xf32>
    %248 = arith.subf %238, %247 : vector<8x32xf32>
    %249 = arith.mulf %248, %248 : vector<8x32xf32>
    %cst_161 = arith.constant dense<0.000000e+00> : vector<8xf32>
    %250 = vector.multi_reduction <add>, %249, %cst_161 [1] : vector<8x32xf32> to vector<8xf32>
    %251 = vector.shape_cast %250 : vector<8xf32> to vector<8x1xf32>
    %cst_162 = arith.constant 3.200000e+01 : f32
    %252 = vector.broadcast %cst_162 : f32 to vector<8x1xf32>
    %253 = arith.divf %251, %252 : vector<8x1xf32>
    %254 = vector.broadcast %246 : vector<8x1xf32> to vector<8x32xf32>
    %255 = arith.subf %238, %254 : vector<8x32xf32>
    %cst_163 = arith.constant 9.99999974E-6 : f32
    %256 = vector.broadcast %cst_163 : f32 to vector<8x1xf32>
    %257 = arith.addf %253, %256 : vector<8x1xf32>
    %258 = math.rsqrt %257 : vector<8x1xf32>
    %259 = vector.broadcast %258 : vector<8x1xf32> to vector<8x32xf32>
    %260 = vector.broadcast %240 : vector<1x32xf32> to vector<8x32xf32>
    %261 = arith.mulf %259, %260 : vector<8x32xf32>
    %262 = arith.mulf %255, %261 : vector<8x32xf32>
    %263 = vector.broadcast %242 : vector<1x32xf32> to vector<8x32xf32>
    %264 = arith.addf %262, %263 : vector<8x32xf32>
    %265 = arith.truncf %264 : vector<8x32xf32> to vector<8x32xbf16>
    %c0_164 = arith.constant 0 : index
    %c0_165 = arith.constant 0 : index
    %266 = vector.load %arg21[%c0_164, %c0_165] : memref<32x128xbf16, #tpu.memory_space<vmem>>, vector<32x128xbf16>
    %cst_166 = arith.constant dense<0.000000e+00> : vector<8x128xf32>
    %267 = tpu.matmul %265, %266, %cst_166 {dimension_numbers = #tpu.dot_dimension_numbers<[1], [0], [0], [1], [0, 0, 1, 1], [], []>} : vector<8x32xbf16>, vector<32x128xbf16>, vector<8x128xf32> -> vector<8x128xf32>
    %c0_167 = arith.constant 0 : index
    %c0_168 = arith.constant 0 : index
    %268 = vector.load %arg22[%c0_167, %c0_168] : memref<1x128xf32, #tpu.memory_space<vmem>>, vector<1x128xf32>
    %269 = vector.broadcast %268 : vector<1x128xf32> to vector<8x128xf32>
    %270 = arith.addf %267, %269 : vector<8x128xf32>
    %c0_169 = arith.constant 0 : index
    %c0_170 = arith.constant 0 : index
    %271 = vector.load %arg23[%c0_169, %c0_170] : memref<8x128xf32, #tpu.memory_space<vmem>>, vector<8x128xf32>
    tpu.vector_store %arg23[%c0_169, %c0_170], %270 {strides = array<i32>} : memref<8x128xf32, #tpu.memory_space<vmem>>, vector<8x128xf32>,
    return
  }
  func.func @transform_0(%arg0: i32) -> (i32, i32) {
    %c0_i32 = arith.constant 0 : i32
    %c0_i32_0 = arith.constant 0 : i32
    return %arg0, %c0_i32 : i32, i32
  }
  func.func @transform_1(%arg0: i32) -> (i32, i32) {
    %c0_i32 = arith.constant 0 : i32
    %c0_i32_0 = arith.constant 0 : i32
    %c0_i32_1 = arith.constant 0 : i32
    return %c0_i32, %c0_i32_0 : i32, i32
  }
  func.func @transform_2(%arg0: i32) -> (i32, i32) {
    %c0_i32 = arith.constant 0 : i32
    %c0_i32_0 = arith.constant 0 : i32
    %c0_i32_1 = arith.constant 0 : i32
    return %c0_i32, %c0_i32_0 : i32, i32
  }
  func.func @transform_3(%arg0: i32) -> (i32, i32) {
    %c0_i32 = arith.constant 0 : i32
    %c0_i32_0 = arith.constant 0 : i32
    %c0_i32_1 = arith.constant 0 : i32
    return %c0_i32, %c0_i32_0 : i32, i32
  }
  func.func @transform_4(%arg0: i32) -> (i32, i32, i32, i32) {
    %c0_i32 = arith.constant 0 : i32
    %c0_i32_0 = arith.constant 0 : i32
    %c0_i32_1 = arith.constant 0 : i32
    %c0_i32_2 = arith.constant 0 : i32
    %c0_i32_3 = arith.constant 0 : i32
    return %c0_i32, %c0_i32_0, %c0_i32_1, %c0_i32_2 : i32, i32, i32, i32
  }
  func.func @transform_5(%arg0: i32) -> (i32, i32, i32, i32) {
    %c0_i32 = arith.constant 0 : i32
    %c0_i32_0 = arith.constant 0 : i32
    %c0_i32_1 = arith.constant 0 : i32
    %c0_i32_2 = arith.constant 0 : i32
    %c0_i32_3 = arith.constant 0 : i32
    return %c0_i32, %c0_i32_0, %c0_i32_1, %c0_i32_2 : i32, i32, i32, i32
  }
  func.func @transform_6(%arg0: i32) -> (i32, i32, i32, i32) {
    %c0_i32 = arith.constant 0 : i32
    %c0_i32_0 = arith.constant 0 : i32
    %c0_i32_1 = arith.constant 0 : i32
    %c0_i32_2 = arith.constant 0 : i32
    %c0_i32_3 = arith.constant 0 : i32
    return %c0_i32, %c0_i32_0, %c0_i32_1, %c0_i32_2 : i32, i32, i32, i32
  }
  func.func @transform_7(%arg0: i32) -> (i32, i32, i32, i32) {
    %c0_i32 = arith.constant 0 : i32
    %c0_i32_0 = arith.constant 0 : i32
    %c0_i32_1 = arith.constant 0 : i32
    %c0_i32_2 = arith.constant 0 : i32
    %c0_i32_3 = arith.constant 0 : i32
    return %c0_i32, %c0_i32_0, %c0_i32_1, %c0_i32_2 : i32, i32, i32, i32
  }
  func.func @transform_8(%arg0: i32) -> (i32, i32, i32, i32) {
    %c0_i32 = arith.constant 0 : i32
    %c0_i32_0 = arith.constant 0 : i32
    %c0_i32_1 = arith.constant 0 : i32
    %c0_i32_2 = arith.constant 0 : i32
    %c0_i32_3 = arith.constant 0 : i32
    return %c0_i32, %c0_i32_0, %c0_i32_1, %c0_i32_2 : i32, i32, i32, i32
  }
  func.func @transform_9(%arg0: i32) -> (i32, i32, i32, i32) {
    %c0_i32 = arith.constant 0 : i32
    %c0_i32_0 = arith.constant 0 : i32
    %c0_i32_1 = arith.constant 0 : i32
    %c0_i32_2 = arith.constant 0 : i32
    %c0_i32_3 = arith.constant 0 : i32
    return %c0_i32, %c0_i32_0, %c0_i32_1, %c0_i32_2 : i32, i32, i32, i32
  }
  func.func @transform_10(%arg0: i32) -> (i32, i32, i32, i32) {
    %c0_i32 = arith.constant 0 : i32
    %c0_i32_0 = arith.constant 0 : i32
    %c0_i32_1 = arith.constant 0 : i32
    %c0_i32_2 = arith.constant 0 : i32
    %c0_i32_3 = arith.constant 0 : i32
    return %c0_i32, %c0_i32_0, %c0_i32_1, %c0_i32_2 : i32, i32, i32, i32
  }
  func.func @transform_11(%arg0: i32) -> (i32, i32, i32) {
    %c0_i32 = arith.constant 0 : i32
    %c0_i32_0 = arith.constant 0 : i32
    %c0_i32_1 = arith.constant 0 : i32
    %c0_i32_2 = arith.constant 0 : i32
    return %c0_i32, %c0_i32_0, %c0_i32_1 : i32, i32, i32
  }
  func.func @transform_12(%arg0: i32) -> (i32, i32, i32) {
    %c0_i32 = arith.constant 0 : i32
    %c0_i32_0 = arith.constant 0 : i32
    %c0_i32_1 = arith.constant 0 : i32
    %c0_i32_2 = arith.constant 0 : i32
    return %c0_i32, %c0_i32_0, %c0_i32_1 : i32, i32, i32
  }
  func.func @transform_13(%arg0: i32) -> (i32, i32, i32) {
    %c0_i32 = arith.constant 0 : i32
    %c0_i32_0 = arith.constant 0 : i32
    %c0_i32_1 = arith.constant 0 : i32
    %c0_i32_2 = arith.constant 0 : i32
    return %c0_i32, %c0_i32_0, %c0_i32_1 : i32, i32, i32
  }
  func.func @transform_14(%arg0: i32) -> (i32, i32, i32) {
    %c0_i32 = arith.constant 0 : i32
    %c0_i32_0 = arith.constant 0 : i32
    %c0_i32_1 = arith.constant 0 : i32
    %c0_i32_2 = arith.constant 0 : i32
    return %c0_i32, %c0_i32_0, %c0_i32_1 : i32, i32, i32
  }
  func.func @transform_15(%arg0: i32) -> (i32, i32, i32) {
    %c0_i32 = arith.constant 0 : i32
    %c0_i32_0 = arith.constant 0 : i32
    %c0_i32_1 = arith.constant 0 : i32
    %c0_i32_2 = arith.constant 0 : i32
    return %c0_i32, %c0_i32_0, %c0_i32_1 : i32, i32, i32
  }
  func.func @transform_16(%arg0: i32) -> (i32, i32, i32) {
    %c0_i32 = arith.constant 0 : i32
    %c0_i32_0 = arith.constant 0 : i32
    %c0_i32_1 = arith.constant 0 : i32
    %c0_i32_2 = arith.constant 0 : i32
    return %c0_i32, %c0_i32_0, %c0_i32_1 : i32, i32, i32
  }
  func.func @transform_17(%arg0: i32) -> (i32, i32, i32) {
    %c0_i32 = arith.constant 0 : i32
    %c0_i32_0 = arith.constant 0 : i32
    %c0_i32_1 = arith.constant 0 : i32
    %c0_i32_2 = arith.constant 0 : i32
    return %c0_i32, %c0_i32_0, %c0_i32_1 : i32, i32, i32
  }
  func.func @transform_18(%arg0: i32) -> (i32, i32, i32) {
    %c0_i32 = arith.constant 0 : i32
    %c0_i32_0 = arith.constant 0 : i32
    %c0_i32_1 = arith.constant 0 : i32
    %c0_i32_2 = arith.constant 0 : i32
    return %c0_i32, %c0_i32_0, %c0_i32_1 : i32, i32, i32
  }
  func.func @transform_19(%arg0: i32) -> (i32, i32, i32) {
    %c0_i32 = arith.constant 0 : i32
    %c0_i32_0 = arith.constant 0 : i32
    %c0_i32_1 = arith.constant 0 : i32
    %c0_i32_2 = arith.constant 0 : i32
    return %c0_i32, %c0_i32_0, %c0_i32_1 : i32, i32, i32
  }
  func.func @transform_20(%arg0: i32) -> (i32, i32) {
    %c0_i32 = arith.constant 0 : i32
    %c0_i32_0 = arith.constant 0 : i32
    %c0_i32_1 = arith.constant 0 : i32
    return %c0_i32, %c0_i32_0 : i32, i32
  }
  func.func @transform_21(%arg0: i32) -> (i32, i32) {
    %c0_i32 = arith.constant 0 : i32
    %c0_i32_0 = arith.constant 0 : i32
    %c0_i32_1 = arith.constant 0 : i32
    return %c0_i32, %c0_i32_0 : i32, i32
  }
  func.func @transform_22(%arg0: i32) -> (i32, i32) {
    %c0_i32 = arith.constant 0 : i32
    %c0_i32_0 = arith.constant 0 : i32
    return %arg0, %c0_i32 : i32, i32
  }
}

</mosaic_0001>

<llo_original>
// kernel: tpu_custom_call.1
$region0: #{tpu_custom_call.1}
  #allocation0 [shape = 'u32[]', space=smem, size = 0x4, offset = 0x4, fixed_abs, tag = 'smem constant byte address 0x4 - core index']
  #allocation1 [shape = 'u32[144,128]{1,0:T(1,128)}', space=vmem, size = 0x12000, scoped, tag = 'internal scratch']
  %s0 = inlined_call_operand.vmem [shape: f32[16,4], index: 0, kind: input, shape index: {}]
  %s1 = inlined_call_operand.vmem [shape: f32[8,32], index: 1, kind: input, shape index: {}]
  %s2 = inlined_call_operand.vmem [shape: bf16[4,32], index: 2, kind: input, shape index: {}]
  %s3 = inlined_call_operand.vmem [shape: f32[1,32], index: 3, kind: input, shape index: {}]
  %s4 = inlined_call_operand.vmem [shape: bf16[2,4,32,8], index: 4, kind: input, shape index: {}]
  %s5 = inlined_call_operand.vmem [shape: bf16[2,4,32,8], index: 5, kind: input, shape index: {}]
  %s6 = inlined_call_operand.vmem [shape: bf16[2,4,32,8], index: 6, kind: input, shape index: {}]
  %s7 = inlined_call_operand.vmem [shape: f32[2,4,1,8], index: 7, kind: input, shape index: {}]
  %s8 = inlined_call_operand.vmem [shape: f32[2,4,1,8], index: 8, kind: input, shape index: {}]
  %s9 = inlined_call_operand.vmem [shape: f32[2,4,1,8], index: 9, kind: input, shape index: {}]
  %s10 = inlined_call_operand.vmem [shape: bf16[2,4,8,32], index: 10, kind: input, shape index: {}]
  %s11 = inlined_call_operand.vmem [shape: f32[2,1,32], index: 11, kind: input, shape index: {}]
  %s12 = inlined_call_operand.vmem [shape: f32[2,1,32], index: 12, kind: input, shape index: {}]
  %s13 = inlined_call_operand.vmem [shape: f32[2,1,32], index: 13, kind: input, shape index: {}]
  %s14 = inlined_call_operand.vmem [shape: bf16[2,32,32], index: 14, kind: input, shape index: {}]
  %s15 = inlined_call_operand.vmem [shape: f32[2,1,32], index: 15, kind: input, shape index: {}]
  %s16 = inlined_call_operand.vmem [shape: bf16[2,32,32], index: 16, kind: input, shape index: {}]
  %s17 = inlined_call_operand.vmem [shape: f32[2,1,32], index: 17, kind: input, shape index: {}]
  %s18 = inlined_call_operand.vmem [shape: f32[2,1,32], index: 18, kind: input, shape index: {}]
  %s19 = inlined_call_operand.vmem [shape: f32[2,1,32], index: 19, kind: input, shape index: {}]
  %s20 = inlined_call_operand.vmem [shape: bf16[32,128], index: 20, kind: input, shape index: {}]
  %s21 = inlined_call_operand.vmem [shape: f32[1,128], index: 21, kind: input, shape index: {}]
  %s22 = inlined_call_operand.hbm [shape: f32[16,128], index: 22, kind: output, shape index: {}]
  %s23 = sld [smem:[#allocation0]]
  $region121: #{tpu_custom_call.1} parent=0
    _
  %s25 = ssub.s32 1, %s23
  %s26 = scalar_select 0, %s25, %s23
  $region1: #{tpu_custom_call.1} parent=0
    #allocation2 [shape = 'u8[8192]{0}', space=vmem, size = 0x2000, scoped, tag = 'output window, operand 0']
    #allocation3 [shape = 's32[2]{0}', space=sflag, size = 0x8, scoped, tag = 'scoped memory for tpu_custom_call.1']
    %27 = vsyncpa [#allocation3], 0
    %s28 = scalar_lea.sflag [#allocation3], 1
    %29 = vsyncpa %s28, 0
    loop: start=0, step=1, limit=4
    $region2: #{tpu_custom_call.1} parent=1 // loop_pre_header
      _
    $region3: #{tpu_custom_call.1} parent=1 // loop_header
      %s31 = sphi 0, %s35
      %p32 = scmp.ge.s32.totalorder %s31, 4
      %s41 = sphi 0, %s43
      %s44 = sphi 0, %s41
      %s45 = sphi 0, %s44
      %s61 = sphi 0, %s45
      %s65 = sphi 0, %s65
      %s67 = sphi 0, %s65
      %s68 = sphi 0, %s67
      %s82 = sphi 0, %s68
      %s86 = sphi 0, %s86
      %s88 = sphi 0, %s86
      %s89 = sphi 0, %s88
      %s103 = sphi 0, %s89
      %s107 = sphi 0, %s107
      %s109 = sphi 0, %s107
      %s110 = sphi 0, %s109
      %s124 = sphi 0, %s110
      %s128 = sphi 0, %s128
      %s130 = sphi 0, %s128
      %s131 = sphi 0, %s130
      %s145 = sphi 0, %s131
      %s149 = sphi 0, %s149
      %s151 = sphi 0, %s149
      %s152 = sphi 0, %s151
      %s166 = sphi 0, %s152
      %s170 = sphi 0, %s170
      %s172 = sphi 0, %s170
      %s173 = sphi 0, %s172
      %s187 = sphi 0, %s173
      %s191 = sphi 0, %s191
      %s193 = sphi 0, %s191
      %s194 = sphi 0, %s193
      %s208 = sphi 0, %s194
      %s212 = sphi 0, %s212
      %s214 = sphi 0, %s212
      %s215 = sphi 0, %s214
      %s229 = sphi 0, %s215
      %s233 = sphi 0, %s233
      %s235 = sphi 0, %s233
      %s236 = sphi 0, %s235
      %s250 = sphi 0, %s236
      %s254 = sphi 0, %s254
      %s256 = sphi 0, %s254
      %s257 = sphi 0, %s256
      %s271 = sphi 0, %s257
      %s275 = sphi 0, %s275
      %s277 = sphi 0, %s275
      %s278 = sphi 0, %s277
      %s292 = sphi 0, %s278
      %s296 = sphi 0, %s296
      %s298 = sphi 0, %s296
      %s299 = sphi 0, %s298
      %s313 = sphi 0, %s299
      %s317 = sphi 0, %s317
      %s319 = sphi 0, %s317
      %s320 = sphi 0, %s319
      %s334 = sphi 0, %s320
      %s338 = sphi 0, %s338
      %s340 = sphi 0, %s338
      %s341 = sphi 0, %s340
      %s355 = sphi 0, %s341
      %s359 = sphi 0, %s359
      %s361 = sphi 0, %s359
      %s362 = sphi 0, %s361
      %s376 = sphi 0, %s362
      %s380 = sphi 0, %s380
      %s382 = sphi 0, %s380
      %s383 = sphi 0, %s382
      %s397 = sphi 0, %s383
      %s401 = sphi 0, %s401
      %s403 = sphi 0, %s401
      %s404 = sphi 0, %s403
      %s418 = sphi 0, %s404
      %s422 = sphi 0, %s422
      %s424 = sphi 0, %s422
      %s425 = sphi 0, %s424
      %s439 = sphi 0, %s425
      %s443 = sphi 0, %s443
      %s445 = sphi 0, %s443
      %s446 = sphi 0, %s445
      %s460 = sphi 0, %s446
      %s464 = sphi 0, %s464
      %s466 = sphi 0, %s464
      %s467 = sphi 0, %s466
      %s481 = sphi 0, %s467
      %s485 = sphi 0, %s485
      %s487 = sphi 0, %s485
      %s488 = sphi 0, %s487
      %s502 = sphi 0, %s488
      %s508 = sphi 0, %s510
      %s511 = sphi 0, %s508
      %s512 = sphi 0, %s511
      %s528 = sphi 0, %s512
    $region4: #{tpu_custom_call.1} parent=1 // loop_header_branch
      %34 = sbr.rel (%p32) target = $region8
    $region5: #{tpu_custom_call.1} parent=1 // loop_body
      %s36 = ssub.s32 %s31, 1
      %s37 = ssub.s32 %s31, 2
      %s38 = sadd.s32 %s31, 1
      %s39 = ssub.s32 %s31, %s38
      %p40 = scmp.eq.s32.totalorder %s39, 0
      %s42 = sadd.s32 %s41, 1
      %s43 = scalar_select %p40, %s41, %s42
      %p46 = pneg %p40
      %p47 = scmp.eq.s32.totalorder %s31, 1
      %p48 = por %p46, %p47
      %p49 = scmp.ne.s32.totalorder %s41, %s44
      %p50 = scmp.eq.s32.totalorder %s31, 0
      %p51 = por %p49, %p50
      %p52 = scmp.ne.s32.totalorder %s41, %s44
      %p53 = scmp.eq.s32.totalorder %s36, 1
      %p54 = por %p52, %p53
      %p55 = scmp.ne.s32.totalorder %s44, %s45
      %p56 = scmp.eq.s32.totalorder %s36, 0
      %p57 = por %p55, %p56
      %p58 = scmp.ne.s32.totalorder %s44, %s45
      %p59 = scmp.eq.s32.totalorder %s37, 1
      %p60 = por %p58, %p59
      %p62 = scmp.ne.s32.totalorder %s45, %s61
      %p63 = scmp.eq.s32.totalorder %s37, 0
      %p64 = por %p62, %p63
      %s66 = sadd.s32 %s65, 1
      %p69 = scmp.eq.s32.totalorder %s31, 1
      %p70 = scmp.ne.s32.totalorder %s65, %s67
      %p71 = scmp.eq.s32.totalorder %s31, 0
      %p72 = por %p70, %p71
      %p73 = scmp.ne.s32.totalorder %s65, %s67
      %p74 = scmp.eq.s32.totalorder %s36, 1
      %p75 = por %p73, %p74
      %p76 = scmp.ne.s32.totalorder %s67, %s68
      %p77 = scmp.eq.s32.totalorder %s36, 0
      %p78 = por %p76, %p77
      %p79 = scmp.ne.s32.totalorder %s67, %s68
      %p80 = scmp.eq.s32.totalorder %s37, 1
      %p81 = por %p79, %p80
      %p83 = scmp.ne.s32.totalorder %s68, %s82
      %p84 = scmp.eq.s32.totalorder %s37, 0
      %p85 = por %p83, %p84
      %s87 = sadd.s32 %s86, 1
      %p90 = scmp.eq.s32.totalorder %s31, 1
      %p91 = scmp.ne.s32.totalorder %s86, %s88
      %p92 = scmp.eq.s32.totalorder %s31, 0
      %p93 = por %p91, %p92
      %p94 = scmp.ne.s32.totalorder %s86, %s88
      %p95 = scmp.eq.s32.totalorder %s36, 1
      %p96 = por %p94, %p95
      %p97 = scmp.ne.s32.totalorder %s88, %s89
      %p98 = scmp.eq.s32.totalorder %s36, 0
      %p99 = por %p97, %p98
      %p100 = scmp.ne.s32.totalorder %s88, %s89
      %p101 = scmp.eq.s32.totalorder %s37, 1
      %p102 = por %p100, %p101
      %p104 = scmp.ne.s32.totalorder %s89, %s103
      %p105 = scmp.eq.s32.totalorder %s37, 0
      %p106 = por %p104, %p105
      %s108 = sadd.s32 %s107, 1
      %p111 = scmp.eq.s32.totalorder %s31, 1
      %p112 = scmp.ne.s32.totalorder %s107, %s109
      %p113 = scmp.eq.s32.totalorder %s31, 0
      %p114 = por %p112, %p113
      %p115 = scmp.ne.s32.totalorder %s107, %s109
      %p116 = scmp.eq.s32.totalorder %s36, 1
      %p117 = por %p115, %p116
      %p118 = scmp.ne.s32.totalorder %s109, %s110
      %p119 = scmp.eq.s32.totalorder %s36, 0
      %p120 = por %p118, %p119
      %p121 = scmp.ne.s32.totalorder %s109, %s110
      %p122 = scmp.eq.s32.totalorder %s37, 1
      %p123 = por %p121, %p122
      %p125 = scmp.ne.s32.totalorder %s110, %s124
      %p126 = scmp.eq.s32.totalorder %s37, 0
      %p127 = por %p125, %p126
      %s129 = sadd.s32 %s128, 1
      %p132 = scmp.eq.s32.totalorder %s31, 1
      %p133 = scmp.ne.s32.totalorder %s128, %s130
      %p134 = scmp.eq.s32.totalorder %s31, 0
      %p135 = por %p133, %p134
      %p136 = scmp.ne.s32.totalorder %s128, %s130
      %p137 = scmp.eq.s32.totalorder %s36, 1
      %p138 = por %p136, %p137
      %p139 = scmp.ne.s32.totalorder %s130, %s131
      %p140 = scmp.eq.s32.totalorder %s36, 0
      %p141 = por %p139, %p140
      %p142 = scmp.ne.s32.totalorder %s130, %s131
      %p143 = scmp.eq.s32.totalorder %s37, 1
      %p144 = por %p142, %p143
      %p146 = scmp.ne.s32.totalorder %s131, %s145
      %p147 = scmp.eq.s32.totalorder %s37, 0
      %p148 = por %p146, %p147
      %s150 = sadd.s32 %s149, 1
      %p153 = scmp.eq.s32.totalorder %s31, 1
      %p154 = scmp.ne.s32.totalorder %s149, %s151
      %p155 = scmp.eq.s32.totalorder %s31, 0
      %p156 = por %p154, %p155
      %p157 = scmp.ne.s32.totalorder %s149, %s151
      %p158 = scmp.eq.s32.totalorder %s36, 1
      %p159 = por %p157, %p158
      %p160 = scmp.ne.s32.totalorder %s151, %s152
      %p161 = scmp.eq.s32.totalorder %s36, 0
      %p162 = por %p160, %p161
      %p163 = scmp.ne.s32.totalorder %s151, %s152
      %p164 = scmp.eq.s32.totalorder %s37, 1
      %p165 = por %p163, %p164
      %p167 = scmp.ne.s32.totalorder %s152, %s166
      %p168 = scmp.eq.s32.totalorder %s37, 0
      %p169 = por %p167, %p168
      %s171 = sadd.s32 %s170, 1
      %p174 = scmp.eq.s32.totalorder %s31, 1
      %p175 = scmp.ne.s32.totalorder %s170, %s172
      %p176 = scmp.eq.s32.totalorder %s31, 0
      %p177 = por %p175, %p176
      %p178 = scmp.ne.s32.totalorder %s170, %s172
      %p179 = scmp.eq.s32.totalorder %s36, 1
      %p180 = por %p178, %p179
      %p181 = scmp.ne.s32.totalorder %s172, %s173
      %p182 = scmp.eq.s32.totalorder %s36, 0
      %p183 = por %p181, %p182
      %p184 = scmp.ne.s32.totalorder %s172, %s173
      %p185 = scmp.eq.s32.totalorder %s37, 1
      %p186 = por %p184, %p185
      %p188 = scmp.ne.s32.totalorder %s173, %s187
      %p189 = scmp.eq.s32.totalorder %s37, 0
      %p190 = por %p188, %p189
      %s192 = sadd.s32 %s191, 1
      %p195 = scmp.eq.s32.totalorder %s31, 1
      %p196 = scmp.ne.s32.totalorder %s191, %s193
      %p197 = scmp.eq.s32.totalorder %s31, 0
      %p198 = por %p196, %p197
      %p199 = scmp.ne.s32.totalorder %s191, %s193
      %p200 = scmp.eq.s32.totalorder %s36, 1
      %p201 = por %p199, %p200
      %p202 = scmp.ne.s32.totalorder %s193, %s194
      %p203 = scmp.eq.s32.totalorder %s36, 0
      %p204 = por %p202, %p203
      %p205 = scmp.ne.s32.totalorder %s193, %s194
      %p206 = scmp.eq.s32.totalorder %s37, 1
      %p207 = por %p205, %p206
      %p209 = scmp.ne.s32.totalorder %s194, %s208
      %p210 = scmp.eq.s32.totalorder %s37, 0
      %p211 = por %p209, %p210
      %s213 = sadd.s32 %s212, 1
      %p216 = scmp.eq.s32.totalorder %s31, 1
      %p217 = scmp.ne.s32.totalorder %s212, %s214
      %p218 = scmp.eq.s32.totalorder %s31, 0
      %p219 = por %p217, %p218
      %p220 = scmp.ne.s32.totalorder %s212, %s214
      %p221 = scmp.eq.s32.totalorder %s36, 1
      %p222 = por %p220, %p221
      %p223 = scmp.ne.s32.totalorder %s214, %s215
      %p224 = scmp.eq.s32.totalorder %s36, 0
      %p225 = por %p223, %p224
      %p226 = scmp.ne.s32.totalorder %s214, %s215
      %p227 = scmp.eq.s32.totalorder %s37, 1
      %p228 = por %p226, %p227
      %p230 = scmp.ne.s32.totalorder %s215, %s229
      %p231 = scmp.eq.s32.totalorder %s37, 0
      %p232 = por %p230, %p231
      %s234 = sadd.s32 %s233, 1
      %p237 = scmp.eq.s32.totalorder %s31, 1
      %p238 = scmp.ne.s32.totalorder %s233, %s235
      %p239 = scmp.eq.s32.totalorder %s31, 0
      %p240 = por %p238, %p239
      %p241 = scmp.ne.s32.totalorder %s233, %s235
      %p242 = scmp.eq.s32.totalorder %s36, 1
      %p243 = por %p241, %p242
      %p244 = scmp.ne.s32.totalorder %s235, %s236
      %p245 = scmp.eq.s32.totalorder %s36, 0
      %p246 = por %p244, %p245
      %p247 = scmp.ne.s32.totalorder %s235, %s236
      %p248 = scmp.eq.s32.totalorder %s37, 1
      %p249 = por %p247, %p248
      %p251 = scmp.ne.s32.totalorder %s236, %s250
      %p252 = scmp.eq.s32.totalorder %s37, 0
      %p253 = por %p251, %p252
      %s255 = sadd.s32 %s254, 1
      %p258 = scmp.eq.s32.totalorder %s31, 1
      %p259 = scmp.ne.s32.totalorder %s254, %s256
      %p260 = scmp.eq.s32.totalorder %s31, 0
      %p261 = por %p259, %p260
      %p262 = scmp.ne.s32.totalorder %s254, %s256
      %p263 = scmp.eq.s32.totalorder %s36, 1
      %p264 = por %p262, %p263
      %p265 = scmp.ne.s32.totalorder %s256, %s257
      %p266 = scmp.eq.s32.totalorder %s36, 0
      %p267 = por %p265, %p266
      %p268 = scmp.ne.s32.totalorder %s256, %s257
      %p269 = scmp.eq.s32.totalorder %s37, 1
      %p270 = por %p268, %p269
      %p272 = scmp.ne.s32.totalorder %s257, %s271
      %p273 = scmp.eq.s32.totalorder %s37, 0
      %p274 = por %p272, %p273
      %s276 = sadd.s32 %s275, 1
      %p279 = scmp.eq.s32.totalorder %s31, 1
      %p280 = scmp.ne.s32.totalorder %s275, %s277
      %p281 = scmp.eq.s32.totalorder %s31, 0
      %p282 = por %p280, %p281
      %p283 = scmp.ne.s32.totalorder %s275, %s277
      %p284 = scmp.eq.s32.totalorder %s36, 1
      %p285 = por %p283, %p284
      %p286 = scmp.ne.s32.totalorder %s277, %s278
      %p287 = scmp.eq.s32.totalorder %s36, 0
      %p288 = por %p286, %p287
      %p289 = scmp.ne.s32.totalorder %s277, %s278
      %p290 = scmp.eq.s32.totalorder %s37, 1
      %p291 = por %p289, %p290
      %p293 = scmp.ne.s32.totalorder %s278, %s292
      %p294 = scmp.eq.s32.totalorder %s37, 0
      %p295 = por %p293, %p294
      %s297 = sadd.s32 %s296, 1
      %p300 = scmp.eq.s32.totalorder %s31, 1
      %p301 = scmp.ne.s32.totalorder %s296, %s298
      %p302 = scmp.eq.s32.totalorder %s31, 0
      %p303 = por %p301, %p302
      %p304 = scmp.ne.s32.totalorder %s296, %s298
      %p305 = scmp.eq.s32.totalorder %s36, 1
      %p306 = por %p304, %p305
      %p307 = scmp.ne.s32.totalorder %s298, %s299
      %p308 = scmp.eq.s32.totalorder %s36, 0
      %p309 = por %p307, %p308
      %p310 = scmp.ne.s32.totalorder %s298, %s299
      %p311 = scmp.eq.s32.totalorder %s37, 1
      %p312 = por %p310, %p311
      %p314 = scmp.ne.s32.totalorder %s299, %s313
      %p315 = scmp.eq.s32.totalorder %s37, 0
      %p316 = por %p314, %p315
      %s318 = sadd.s32 %s317, 1
      %p321 = scmp.eq.s32.totalorder %s31, 1
      %p322 = scmp.ne.s32.totalorder %s317, %s319
      %p323 = scmp.eq.s32.totalorder %s31, 0
      %p324 = por %p322, %p323
      %p325 = scmp.ne.s32.totalorder %s317, %s319
      %p326 = scmp.eq.s32.totalorder %s36, 1
      %p327 = por %p325, %p326
      %p328 = scmp.ne.s32.totalorder %s319, %s320
      %p329 = scmp.eq.s32.totalorder %s36, 0
      %p330 = por %p328, %p329
      %p331 = scmp.ne.s32.totalorder %s319, %s320
      %p332 = scmp.eq.s32.totalorder %s37, 1
      %p333 = por %p331, %p332
      %p335 = scmp.ne.s32.totalorder %s320, %s334
      %p336 = scmp.eq.s32.totalorder %s37, 0
      %p337 = por %p335, %p336
      %s339 = sadd.s32 %s338, 1
      %p342 = scmp.eq.s32.totalorder %s31, 1
      %p343 = scmp.ne.s32.totalorder %s338, %s340
      %p344 = scmp.eq.s32.totalorder %s31, 0
      %p345 = por %p343, %p344
      %p346 = scmp.ne.s32.totalorder %s338, %s340
      %p347 = scmp.eq.s32.totalorder %s36, 1
      %p348 = por %p346, %p347
      %p349 = scmp.ne.s32.totalorder %s340, %s341
      %p350 = scmp.eq.s32.totalorder %s36, 0
      %p351 = por %p349, %p350
      %p352 = scmp.ne.s32.totalorder %s340, %s341
      %p353 = scmp.eq.s32.totalorder %s37, 1
      %p354 = por %p352, %p353
      %p356 = scmp.ne.s32.totalorder %s341, %s355
      %p357 = scmp.eq.s32.totalorder %s37, 0
      %p358 = por %p356, %p357
      %s360 = sadd.s32 %s359, 1
      %p363 = scmp.eq.s32.totalorder %s31, 1
      %p364 = scmp.ne.s32.totalorder %s359, %s361
      %p365 = scmp.eq.s32.totalorder %s31, 0
      %p366 = por %p364, %p365
      %p367 = scmp.ne.s32.totalorder %s359, %s361
      %p368 = scmp.eq.s32.totalorder %s36, 1
      %p369 = por %p367, %p368
      %p370 = scmp.ne.s32.totalorder %s361, %s362
      %p371 = scmp.eq.s32.totalorder %s36, 0
      %p372 = por %p370, %p371
      %p373 = scmp.ne.s32.totalorder %s361, %s362
      %p374 = scmp.eq.s32.totalorder %s37, 1
      %p375 = por %p373, %p374
      %p377 = scmp.ne.s32.totalorder %s362, %s376
      %p378 = scmp.eq.s32.totalorder %s37, 0
      %p379 = por %p377, %p378
      %s381 = sadd.s32 %s380, 1
      %p384 = scmp.eq.s32.totalorder %s31, 1
      %p385 = scmp.ne.s32.totalorder %s380, %s382
      %p386 = scmp.eq.s32.totalorder %s31, 0
      %p387 = por %p385, %p386
      %p388 = scmp.ne.s32.totalorder %s380, %s382
      %p389 = scmp.eq.s32.totalorder %s36, 1
      %p390 = por %p388, %p389
      %p391 = scmp.ne.s32.totalorder %s382, %s383
      %p392 = scmp.eq.s32.totalorder %s36, 0
      %p393 = por %p391, %p392
      %p394 = scmp.ne.s32.totalorder %s382, %s383
      %p395 = scmp.eq.s32.totalorder %s37, 1
      %p396 = por %p394, %p395
      %p398 = scmp.ne.s32.totalorder %s383, %s397
      %p399 = scmp.eq.s32.totalorder %s37, 0
      %p400 = por %p398, %p399
      %s402 = sadd.s32 %s401, 1
      %p405 = scmp.eq.s32.totalorder %s31, 1
      %p406 = scmp.ne.s32.totalorder %s401, %s403
      %p407 = scmp.eq.s32.totalorder %s31, 0
      %p408 = por %p406, %p407
      %p409 = scmp.ne.s32.totalorder %s401, %s403
      %p410 = scmp.eq.s32.totalorder %s36, 1
      %p411 = por %p409, %p410
      %p412 = scmp.ne.s32.totalorder %s403, %s404
      %p413 = scmp.eq.s32.totalorder %s36, 0
      %p414 = por %p412, %p413
      %p415 = scmp.ne.s32.totalorder %s403, %s404
      %p416 = scmp.eq.s32.totalorder %s37, 1
      %p417 = por %p415, %p416
      %p419 = scmp.ne.s32.totalorder %s404, %s418
      %p420 = scmp.eq.s32.totalorder %s37, 0
      %p421 = por %p419, %p420
      %s423 = sadd.s32 %s422, 1
      %p426 = scmp.eq.s32.totalorder %s31, 1
      %p427 = scmp.ne.s32.totalorder %s422, %s424
      %p428 = scmp.eq.s32.totalorder %s31, 0
      %p429 = por %p427, %p428
      %p430 = scmp.ne.s32.totalorder %s422, %s424
      %p431 = scmp.eq.s32.totalorder %s36, 1
      %p432 = por %p430, %p431
      %p433 = scmp.ne.s32.totalorder %s424, %s425
      %p434 = scmp.eq.s32.totalorder %s36, 0
      %p435 = por %p433, %p434
      %p436 = scmp.ne.s32.totalorder %s424, %s425
      %p437 = scmp.eq.s32.totalorder %s37, 1
      %p438 = por %p436, %p437
      %p440 = scmp.ne.s32.totalorder %s425, %s439
      %p441 = scmp.eq.s32.totalorder %s37, 0
      %p442 = por %p440, %p441
      %s444 = sadd.s32 %s443, 1
      %p447 = scmp.eq.s32.totalorder %s31, 1
      %p448 = scmp.ne.s32.totalorder %s443, %s445
      %p449 = scmp.eq.s32.totalorder %s31, 0
      %p450 = por %p448, %p449
      %p451 = scmp.ne.s32.totalorder %s443, %s445
      %p452 = scmp.eq.s32.totalorder %s36, 1
      %p453 = por %p451, %p452
      %p454 = scmp.ne.s32.totalorder %s445, %s446
      %p455 = scmp.eq.s32.totalorder %s36, 0
      %p456 = por %p454, %p455
      %p457 = scmp.ne.s32.totalorder %s445, %s446
      %p458 = scmp.eq.s32.totalorder %s37, 1
      %p459 = por %p457, %p458
      %p461 = scmp.ne.s32.totalorder %s446, %s460
      %p462 = scmp.eq.s32.totalorder %s37, 0
      %p463 = por %p461, %p462
      %s465 = sadd.s32 %s464, 1
      %p468 = scmp.eq.s32.totalorder %s31, 1
      %p469 = scmp.ne.s32.totalorder %s464, %s466
      %p470 = scmp.eq.s32.totalorder %s31, 0
      %p471 = por %p469, %p470
      %p472 = scmp.ne.s32.totalorder %s464, %s466
      %p473 = scmp.eq.s32.totalorder %s36, 1
      %p474 = por %p472, %p473
      %p475 = scmp.ne.s32.totalorder %s466, %s467
      %p476 = scmp.eq.s32.totalorder %s36, 0
      %p477 = por %p475, %p476
      %p478 = scmp.ne.s32.totalorder %s466, %s467
      %p479 = scmp.eq.s32.totalorder %s37, 1
      %p480 = por %p478, %p479
      %p482 = scmp.ne.s32.totalorder %s467, %s481
      %p483 = scmp.eq.s32.totalorder %s37, 0
      %p484 = por %p482, %p483
      %s486 = sadd.s32 %s485, 1
      %p489 = scmp.eq.s32.totalorder %s31, 1
      %p490 = scmp.ne.s32.totalorder %s485, %s487
      %p491 = scmp.eq.s32.totalorder %s31, 0
      %p492 = por %p490, %p491
      %p493 = scmp.ne.s32.totalorder %s485, %s487
      %p494 = scmp.eq.s32.totalorder %s36, 1
      %p495 = por %p493, %p494
      %p496 = scmp.ne.s32.totalorder %s487, %s488
      %p497 = scmp.eq.s32.totalorder %s36, 0
      %p498 = por %p496, %p497
      %p499 = scmp.ne.s32.totalorder %s487, %s488
      %p500 = scmp.eq.s32.totalorder %s37, 1
      %p501 = por %p499, %p500
      %p503 = scmp.ne.s32.totalorder %s488, %s502
      %p504 = scmp.eq.s32.totalorder %s37, 0
      %p505 = por %p503, %p504
      %s506 = ssub.s32 %s31, %s38
      %p507 = scmp.eq.s32.totalorder %s506, 0
      %s509 = sadd.s32 %s508, 1
      %s510 = scalar_select %p507, %s508, %s509
      %p513 = pneg %p507
      %p514 = scmp.eq.s32.totalorder %s31, 1
      %p515 = por %p513, %p514
      %p516 = scmp.ne.s32.totalorder %s508, %s511
      %p517 = scmp.eq.s32.totalorder %s31, 0
      %p518 = por %p516, %p517
      %p519 = scmp.ne.s32.totalorder %s508, %s511
      %p520 = scmp.eq.s32.totalorder %s36, 1
      %p521 = por %p519, %p520
      %p522 = scmp.ne.s32.totalorder %s511, %s512
      %p523 = scmp.eq.s32.totalorder %s36, 0
      %p524 = por %p522, %p523
      %p525 = scmp.ne.s32.totalorder %s511, %s512
      %p526 = scmp.eq.s32.totalorder %s37, 1
      %p527 = por %p525, %p526
      %p529 = scmp.ne.s32.totalorder %s512, %s528
      %p530 = scmp.eq.s32.totalorder %s37, 0
      %p531 = por %p529, %p530
      %p532 = scmp.le.s32.totalorder 1, %s31
      %p533 = scmp.lt.s32.totalorder %s31, 3
      %p534 = pnand %p532, %p533
      %p535 = pneg %p534
      // Predicated region
      $region9: #{tpu_custom_call.1} parent=5 // pred_check
        _
      $region10: #{tpu_custom_call.1} parent=5 // pred_check_branch
        %537 = sbr.rel (%p534) target = $region12
      $region11: #{tpu_custom_call.1} parent=5 // pred_region
        %s538 = ssub.s32 %s31, 1
        // Predicated region
        $region13: #{tpu_custom_call.1} parent=11 // pred_check
          %p539 = pneg %p78
        $region14: #{tpu_custom_call.1} parent=11 // pred_check_branch
          %541 = sbr.rel (%p539) target = $region16
        $region15: #{tpu_custom_call.1} parent=11 // pred_region
          _
        $region16: #{tpu_custom_call.1} parent=11 // pred_fallthru
          _
        // Predicated region
        $region17: #{tpu_custom_call.1} parent=11 // pred_check
          %p542 = pneg %p99
        $region18: #{tpu_custom_call.1} parent=11 // pred_check_branch
          %544 = sbr.rel (%p542) target = $region20
        $region19: #{tpu_custom_call.1} parent=11 // pred_region
          _
        $region20: #{tpu_custom_call.1} parent=11 // pred_fallthru
          _
        // Predicated region
        $region21: #{tpu_custom_call.1} parent=11 // pred_check
          %p545 = pneg %p120
        $region22: #{tpu_custom_call.1} parent=11 // pred_check_branch
          %547 = sbr.rel (%p545) target = $region24
        $region23: #{tpu_custom_call.1} parent=11 // pred_region
          _
        $region24: #{tpu_custom_call.1} parent=11 // pred_fallthru
          _
        // Predicated region
        $region25: #{tpu_custom_call.1} parent=11 // pred_check
          %p548 = pneg %p141
        $region26: #{tpu_custom_call.1} parent=11 // pred_check_branch
          %550 = sbr.rel (%p548) target = $region28
        $region27: #{tpu_custom_call.1} parent=11 // pred_region
          _
        $region28: #{tpu_custom_call.1} parent=11 // pred_fallthru
          _
        // Predicated region
        $region29: #{tpu_custom_call.1} parent=11 // pred_check
          %p551 = pneg %p162
        $region30: #{tpu_custom_call.1} parent=11 // pred_check_branch
          %553 = sbr.rel (%p551) target = $region32
        $region31: #{tpu_custom_call.1} parent=11 // pred_region
          _
        $region32: #{tpu_custom_call.1} parent=11 // pred_fallthru
          _
        // Predicated region
        $region33: #{tpu_custom_call.1} parent=11 // pred_check
          %p554 = pneg %p183
        $region34: #{tpu_custom_call.1} parent=11 // pred_check_branch
          %556 = sbr.rel (%p554) target = $region36
        $region35: #{tpu_custom_call.1} parent=11 // pred_region
          _
        $region36: #{tpu_custom_call.1} parent=11 // pred_fallthru
          _
        // Predicated region
        $region37: #{tpu_custom_call.1} parent=11 // pred_check
          %p557 = pneg %p204
        $region38: #{tpu_custom_call.1} parent=11 // pred_check_branch
          %559 = sbr.rel (%p557) target = $region40
        $region39: #{tpu_custom_call.1} parent=11 // pred_region
          _
        $region40: #{tpu_custom_call.1} parent=11 // pred_fallthru
          _
        // Predicated region
        $region41: #{tpu_custom_call.1} parent=11 // pred_check
          %p560 = pneg %p225
        $region42: #{tpu_custom_call.1} parent=11 // pred_check_branch
          %562 = sbr.rel (%p560) target = $region44
        $region43: #{tpu_custom_call.1} parent=11 // pred_region
          _
        $region44: #{tpu_custom_call.1} parent=11 // pred_fallthru
          _
        // Predicated region
        $region45: #{tpu_custom_call.1} parent=11 // pred_check
          %p563 = pneg %p246
        $region46: #{tpu_custom_call.1} parent=11 // pred_check_branch
          %565 = sbr.rel (%p563) target = $region48
        $region47: #{tpu_custom_call.1} parent=11 // pred_region
          _
        $region48: #{tpu_custom_call.1} parent=11 // pred_fallthru
          _
        // Predicated region
        $region49: #{tpu_custom_call.1} parent=11 // pred_check
          %p566 = pneg %p267
        $region50: #{tpu_custom_call.1} parent=11 // pred_check_branch
          %568 = sbr.rel (%p566) target = $region52
        $region51: #{tpu_custom_call.1} parent=11 // pred_region
          _
        $region52: #{tpu_custom_call.1} parent=11 // pred_fallthru
          _
        // Predicated region
        $region53: #{tpu_custom_call.1} parent=11 // pred_check
          %p569 = pneg %p288
        $region54: #{tpu_custom_call.1} parent=11 // pred_check_branch
          %571 = sbr.rel (%p569) target = $region56
        $region55: #{tpu_custom_call.1} parent=11 // pred_region
          _
        $region56: #{tpu_custom_call.1} parent=11 // pred_fallthru
          _
        // Predicated region
        $region57: #{tpu_custom_call.1} parent=11 // pred_check
          %p572 = pneg %p309
        $region58: #{tpu_custom_call.1} parent=11 // pred_check_branch
          %574 = sbr.rel (%p572) target = $region60
        $region59: #{tpu_custom_call.1} parent=11 // pred_region
          _
        $region60: #{tpu_custom_call.1} parent=11 // pred_fallthru
          _
        // Predicated region
        $region61: #{tpu_custom_call.1} parent=11 // pred_check
          %p575 = pneg %p330
        $region62: #{tpu_custom_call.1} parent=11 // pred_check_branch
          %577 = sbr.rel (%p575) target = $region64
        $region63: #{tpu_custom_call.1} parent=11 // pred_region
          _
        $region64: #{tpu_custom_call.1} parent=11 // pred_fallthru
          _
        // Predicated region
        $region65: #{tpu_custom_call.1} parent=11 // pred_check
          %p578 = pneg %p351
        $region66: #{tpu_custom_call.1} parent=11 // pred_check_branch
          %580 = sbr.rel (%p578) target = $region68
        $region67: #{tpu_custom_call.1} parent=11 // pred_region
          _
        $region68: #{tpu_custom_call.1} parent=11 // pred_fallthru
          _
        // Predicated region
        $region69: #{tpu_custom_call.1} parent=11 // pred_check
          %p581 = pneg %p372
        $region70: #{tpu_custom_call.1} parent=11 // pred_check_branch
          %583 = sbr.rel (%p581) target = $region72
        $region71: #{tpu_custom_call.1} parent=11 // pred_region
          _
        $region72: #{tpu_custom_call.1} parent=11 // pred_fallthru
          _
        // Predicated region
        $region73: #{tpu_custom_call.1} parent=11 // pred_check
          %p584 = pneg %p393
        $region74: #{tpu_custom_call.1} parent=11 // pred_check_branch
          %586 = sbr.rel (%p584) target = $region76
        $region75: #{tpu_custom_call.1} parent=11 // pred_region
          _
        $region76: #{tpu_custom_call.1} parent=11 // pred_fallthru
          _
        // Predicated region
        $region77: #{tpu_custom_call.1} parent=11 // pred_check
          %p587 = pneg %p414
        $region78: #{tpu_custom_call.1} parent=11 // pred_check_branch
          %589 = sbr.rel (%p587) target = $region80
        $region79: #{tpu_custom_call.1} parent=11 // pred_region
          _
        $region80: #{tpu_custom_call.1} parent=11 // pred_fallthru
          _
        // Predicated region
        $region81: #{tpu_custom_call.1} parent=11 // pred_check
          %p590 = pneg %p435
        $region82: #{tpu_custom_call.1} parent=11 // pred_check_branch
          %592 = sbr.rel (%p590) target = $region84
        $region83: #{tpu_custom_call.1} parent=11 // pred_region
          _
        $region84: #{tpu_custom_call.1} parent=11 // pred_fallthru
          _
        // Predicated region
        $region85: #{tpu_custom_call.1} parent=11 // pred_check
          %p593 = pneg %p456
        $region86: #{tpu_custom_call.1} parent=11 // pred_check_branch
          %595 = sbr.rel (%p593) target = $region88
        $region87: #{tpu_custom_call.1} parent=11 // pred_region
          _
        $region88: #{tpu_custom_call.1} parent=11 // pred_fallthru
          _
        // Predicated region
        $region89: #{tpu_custom_call.1} parent=11 // pred_check
          %p596 = pneg %p477
        $region90: #{tpu_custom_call.1} parent=11 // pred_check_branch
          %598 = sbr.rel (%p596) target = $region92
        $region91: #{tpu_custom_call.1} parent=11 // pred_region
          _
        $region92: #{tpu_custom_call.1} parent=11 // pred_fallthru
          _
        // Predicated region
        $region93: #{tpu_custom_call.1} parent=11 // pred_check
          %p599 = pneg %p498
        $region94: #{tpu_custom_call.1} parent=11 // pred_check_branch
          %601 = sbr.rel (%p599) target = $region96
        $region95: #{tpu_custom_call.1} parent=11 // pred_region
          _
        $region96: #{tpu_custom_call.1} parent=11 // pred_fallthru
          _
      $region12: #{tpu_custom_call.1} parent=5 // pred_fallthru
        _
      %p602 = scmp.lt.s32.totalorder %s31, 2
      // Predicated region
      $region97: #{tpu_custom_call.1} parent=5 // pred_check
        %p603 = pneg %p602
      $region98: #{tpu_custom_call.1} parent=5 // pred_check_branch
        %605 = sbr.rel (%p603) target = $region100
      $region99: #{tpu_custom_call.1} parent=5 // pred_region
        // Predicated region
        $region101: #{tpu_custom_call.1} parent=99 // pred_check
          %p606 = pneg %p51
        $region102: #{tpu_custom_call.1} parent=99 // pred_check_branch
          %608 = sbr.rel (%p606) target = $region104
        $region103: #{tpu_custom_call.1} parent=99 // pred_region
          %p609 = scmp.lt.s32.totalorder %s31, 1
          %s610 = scalar_select %p609, %s31, 1
          %s611 = smul.addr %s610, 8
          %s612 = scalar_lea.vmem %s0, %s611
        $region104: #{tpu_custom_call.1} parent=99 // pred_fallthru
          _
      $region100: #{tpu_custom_call.1} parent=5 // pred_fallthru
        _
      %p613 = scmp.le.s32.totalorder 1, %s31
      %p614 = scmp.lt.s32.totalorder %s31, 3
      %p615 = pnand %p613, %p614
      %p616 = pneg %p615
      // Predicated region
      $region105: #{tpu_custom_call.1} parent=5 // pred_check
        _
      $region106: #{tpu_custom_call.1} parent=5 // pred_check_branch
        %618 = sbr.rel (%p615) target = $region108
      $region107: #{tpu_custom_call.1} parent=5 // pred_region
        %s619 = ssub.s32 %s31, 1
        %p620 = scmp.lt.s32.totalorder %s36, 1
        %s621 = scalar_select %p620, %s36, 1
        %s622 = smul.addr %s621, 8
        %s623 = scalar_lea.vmem %s0, %s622
        %p624 = pneg %p57
        %p625 = pneg %p54
        %p626 = pneg %p78
        %p627 = pneg %p75
        %p628 = pneg %p99
        %p629 = pneg %p96
        %p630 = pneg %p120
        %p631 = pneg %p117
        %p632 = pneg %p141
        %p633 = pneg %p138
        %p634 = pneg %p162
        %p635 = pneg %p159
        %p636 = pneg %p183
        %p637 = pneg %p180
        %p638 = pneg %p204
        %p639 = pneg %p201
        %p640 = pneg %p225
        %p641 = pneg %p222
        %p642 = pneg %p246
        %p643 = pneg %p243
        %p644 = pneg %p267
        %p645 = pneg %p264
        %p646 = pneg %p288
        %p647 = pneg %p285
        %p648 = pneg %p309
        %p649 = pneg %p306
        %p650 = pneg %p330
        %p651 = pneg %p327
        %p652 = pneg %p351
        %p653 = pneg %p348
        %p654 = pneg %p372
        %p655 = pneg %p369
        %p656 = pneg %p393
        %p657 = pneg %p390
        %p658 = pneg %p414
        %p659 = pneg %p411
        %p660 = pneg %p435
        %p661 = pneg %p432
        %p662 = pneg %p456
        %p663 = pneg %p453
        %p664 = pneg %p477
        %p665 = pneg %p474
        %p666 = pneg %p498
        %p667 = pneg %p495
        %p668 = pneg %p524
        %p669 = pneg %p521
        %s670 = sand.u32 %s511, 1
        %s671 = scalar_lea.sflag [#allocation3], %s670
        %s672 = sand.u32 %s511, 1
        %s673 = smul.addr %s672, 8
        %s674 = scalar_lea.vmem [#allocation2], %s673
        %p675 = scmp.lt.s32.totalorder %s36, 1
        %s676 = scalar_select %p675, %s36, 1
        %s677 = smul.addr %s676, 8
        %s678 = scalar_lea.vmem %s0, %s677
        %v680 = vld [vmem:[%s678] sm:$0xff]
        %v681 = vpack.c.bf16 %v680, %v680
        %v682 = vld [vmem:[%s2] sm:$0x3]
        %v683 = vld [vmem:[%s3] sm:$0x1]
        %v685 = vlaneseq
        %v686 = vshrl.u32 %v685, 7
        %v687 = vsub.s32 0, %v686
        %v688 = vrot.slane %v683, %v687
        %vm690 = vcmask 31744
        %v692 = vsel %vm690, %v681, 0
        %vm694 = vcmask 1041408
        %v696 = vsel %vm694, %v682, 0
        %698 = vmatprep.subr.bf16.mxu0 0
        %699 = vmatpush1.bf16.msra.mxu0 %v696
        %700 = vmatprep.subr.bf16.mxu0 0
        %701 = vmatpush1.bf16.msra.mxu0 0
        %702 = vmatprep.subr.bf16.mxu0 0
        %703 = vmatpush1.bf16.msra.mxu0 0
        %704 = vmatprep.subr.bf16.mxu0 0
        %705 = vmatpush1.bf16.msra.mxu0 0
        %706 = vmatprep.subr.bf16.mxu0 0
        %707 = vmatpush1.bf16.msra.mxu0 0
        %708 = vmatprep.subr.bf16.mxu0 0
        %709 = vmatpush1.bf16.msra.mxu0 0
        %710 = vmatprep.subr.bf16.mxu0 0
        %711 = vmatpush1.bf16.msra.mxu0 0
        %712 = vmatprep.subr.bf16.mxu0 0
        %713 = vmatpush1.bf16.msra.mxu0 0
        %714 = vmatprep.subr.bf16.mxu0 0
        %715 = vmatpush1.bf16.msra.mxu0 0
        %716 = vmatprep.subr.bf16.mxu0 0
        %717 = vmatpush1.bf16.msra.mxu0 0
        %718 = vmatprep.subr.bf16.mxu0 0
        %719 = vmatpush1.bf16.msra.mxu0 0
        %720 = vmatprep.subr.bf16.mxu0 0
        %721 = vmatpush1.bf16.msra.mxu0 0
        %722 = vmatprep.subr.bf16.mxu0 0
        %723 = vmatpush1.bf16.msra.mxu0 0
        %724 = vmatprep.subr.bf16.mxu0 0
        %725 = vmatpush1.bf16.msra.mxu0 0
        %726 = vmatprep.subr.bf16.mxu0 0
        %727 = vmatpush1.bf16.msra.mxu0 0
        %728 = vmatprep.subr.bf16.mxu0 0
        %729 = vmatpush1.bf16.msra.mxu0 0
        %730 = vmatprep.mubr.bf16.mxu0 0
        %731 = vmatmul.mubr.bf16.gmra.mrb[0].mxu0 %v692
        %v732 = vpop.f32.mrb[0].mxu0
        %v733 = vadd.f32 %v688, %v732
        %v734 = vpop.f32.mrb[0].mxu0
        %v735 = vpop.f32.mrb[0].mxu0
        %v736 = vpop.f32.mrb[0].mxu0
        %737 = vdwg.mxu0
        %v738 = vld [vmem:[%s1] sm:$0xff]
        %v739 = vadd.f32 %v733, %v738
        %v740 = vlaneseq
        %v741 = vshrl.u32 %v740, 7
        %v742 = vlaneseq
        %v743 = vand.u32 %v742, 127
        %vm744 = vcmp.le.s32.totalorder %v743, %v741
        %v745 = vsel %vm744, 0.0, -1e+30
        %v746 = vpack.c.bf16 %v739, %v739
        %v747 = vld [vmem:[%s4] sm:$0xf]
        %v748 = vld [vmem:[%s4 + $0x4] sm:$0xf]
        %v749 = vld [vmem:[%s4 + $0x8] sm:$0xf]
        %v750 = vld [vmem:[%s4 + $0xc] sm:$0xf]
        %v751 = vld [vmem:[%s4 + $0x10] sm:$0xf]
        %v752 = vld [vmem:[%s4 + $0x14] sm:$0xf]
        %v753 = vld [vmem:[%s4 + $0x18] sm:$0xf]
        %v754 = vld [vmem:[%s4 + $0x1c] sm:$0xf]
        %v755 = vld [vmem:[%s4 + $0x20] sm:$0xf]
        %v756 = vld [vmem:[%s4 + $0x24] sm:$0xf]
        %v757 = vld [vmem:[%s4 + $0x28] sm:$0xf]
        %v758 = vld [vmem:[%s4 + $0x2c] sm:$0xf]
        %v759 = vld [vmem:[%s4 + $0x30] sm:$0xf]
        %v760 = vld [vmem:[%s4 + $0x34] sm:$0xf]
        %v761 = vld [vmem:[%s4 + $0x38] sm:$0xf]
        %v762 = vld [vmem:[%s4 + $0x3c] sm:$0xf]
        %v763 = vld [vmem:[%s7] sm:$0x1]
        %v764 = vld [vmem:[%s7 + $0x1] sm:$0x1]
        %v765 = vld [vmem:[%s7 + $0x2] sm:$0x1]
        %v766 = vld [vmem:[%s7 + $0x3] sm:$0x1]
        %v771 = vlaneseq
        %v772 = vshrl.u32 %v771, 7
        %v773 = vsub.s32 0, %v772
        %v774 = vrot.slane %v763, %v773
        %v775 = vlaneseq
        %v776 = vshrl.u32 %v775, 7
        %v777 = vsub.s32 0, %v776
        %v778 = vrot.slane %v764, %v777
        %v779 = vlaneseq
        %v780 = vshrl.u32 %v779, 7
        %v781 = vsub.s32 0, %v780
        %v782 = vrot.slane %v765, %v781
        %v783 = vlaneseq
        %v784 = vshrl.u32 %v783, 7
        %v785 = vsub.s32 0, %v784
        %v786 = vrot.slane %v766, %v785
        %v795 = vunpack.c.l.b16 %v747
        %v796 = vunpack.c.l.b16 %v748
        %v797 = vunpack.c.l.b16 %v749
        %v798 = vunpack.c.l.b16 %v750
        %v799 = vpack.c.b16 %v796, %v795
        %v800 = vpack.c.b16 %v798, %v797
        %vm803 = vcmask 261120
        %v805 = vsel %vm803, %v746, 0
        %807 = vmatprep.subr.bf16.mxu0 0
        %808 = vmatpush1.bf16.msra.mxu0 %v799
        %809 = vmatprep.subr.bf16.mxu0 0
        %810 = vmatpush1.bf16.msra.mxu0 %v800
        %811 = vmatprep.subr.bf16.mxu0 0
        %812 = vmatpush1.bf16.msra.mxu0 0
        %813 = vmatprep.subr.bf16.mxu0 0
        %814 = vmatpush1.bf16.msra.mxu0 0
        %815 = vmatprep.subr.bf16.mxu0 0
        %816 = vmatpush1.bf16.msra.mxu0 0
        %817 = vmatprep.subr.bf16.mxu0 0
        %818 = vmatpush1.bf16.msra.mxu0 0
        %819 = vmatprep.subr.bf16.mxu0 0
        %820 = vmatpush1.bf16.msra.mxu0 0
        %821 = vmatprep.subr.bf16.mxu0 0
        %822 = vmatpush1.bf16.msra.mxu0 0
        %823 = vmatprep.subr.bf16.mxu0 0
        %824 = vmatpush1.bf16.msra.mxu0 0
        %825 = vmatprep.subr.bf16.mxu0 0
        %826 = vmatpush1.bf16.msra.mxu0 0
        %827 = vmatprep.subr.bf16.mxu0 0
        %828 = vmatpush1.bf16.msra.mxu0 0
        %829 = vmatprep.subr.bf16.mxu0 0
        %830 = vmatpush1.bf16.msra.mxu0 0
        %831 = vmatprep.subr.bf16.mxu0 0
        %832 = vmatpush1.bf16.msra.mxu0 0
        %833 = vmatprep.subr.bf16.mxu0 0
        %834 = vmatpush1.bf16.msra.mxu0 0
        %835 = vmatprep.subr.bf16.mxu0 0
        %836 = vmatpush1.bf16.msra.mxu0 0
        %837 = vmatprep.subr.bf16.mxu0 0
        %838 = vmatpush1.bf16.msra.mxu0 0
        %839 = vmatprep.mubr.bf16.mxu0 0
        %840 = vmatmul.mubr.bf16.gmra.mrb[0].mxu0 %v805
        %v841 = vpop.f32.mrb[0].mxu0
        %v842 = vadd.f32 %v774, %v841
        %v843 = vpop.f32.mrb[0].mxu0
        %v844 = vpop.f32.mrb[0].mxu0
        %v845 = vpop.f32.mrb[0].mxu0
        %846 = vdwg.mxu0
        %v851 = vunpack.c.l.b16 %v751
        %v852 = vunpack.c.l.b16 %v752
        %v853 = vunpack.c.l.b16 %v753
        %v854 = vunpack.c.l.b16 %v754
        %v855 = vpack.c.b16 %v852, %v851
        %v856 = vpack.c.b16 %v854, %v853
        %859 = vmatprep.subr.bf16.mxu0 0
        %860 = vmatpush1.bf16.msra.mxu0 %v855
        %861 = vmatprep.subr.bf16.mxu0 0
        %862 = vmatpush1.bf16.msra.mxu0 %v856
        %863 = vmatprep.subr.bf16.mxu0 0
        %864 = vmatpush1.bf16.msra.mxu0 0
        %865 = vmatprep.subr.bf16.mxu0 0
        %866 = vmatpush1.bf16.msra.mxu0 0
        %867 = vmatprep.subr.bf16.mxu0 0
        %868 = vmatpush1.bf16.msra.mxu0 0
        %869 = vmatprep.subr.bf16.mxu0 0
        %870 = vmatpush1.bf16.msra.mxu0 0
        %871 = vmatprep.subr.bf16.mxu0 0
        %872 = vmatpush1.bf16.msra.mxu0 0
        %873 = vmatprep.subr.bf16.mxu0 0
        %874 = vmatpush1.bf16.msra.mxu0 0
        %875 = vmatprep.subr.bf16.mxu0 0
        %876 = vmatpush1.bf16.msra.mxu0 0
        %877 = vmatprep.subr.bf16.mxu0 0
        %878 = vmatpush1.bf16.msra.mxu0 0
        %879 = vmatprep.subr.bf16.mxu0 0
        %880 = vmatpush1.bf16.msra.mxu0 0
        %881 = vmatprep.subr.bf16.mxu0 0
        %882 = vmatpush1.bf16.msra.mxu0 0
        %883 = vmatprep.subr.bf16.mxu0 0
        %884 = vmatpush1.bf16.msra.mxu0 0
        %885 = vmatprep.subr.bf16.mxu0 0
        %886 = vmatpush1.bf16.msra.mxu0 0
        %887 = vmatprep.subr.bf16.mxu0 0
        %888 = vmatpush1.bf16.msra.mxu0 0
        %889 = vmatprep.subr.bf16.mxu0 0
        %890 = vmatpush1.bf16.msra.mxu0 0
        %891 = vmatprep.mubr.bf16.mxu0 0
        %892 = vmatmul.mubr.bf16.gmra.mrb[0].mxu0 %v805
        %v893 = vpop.f32.mrb[0].mxu0
        %v894 = vadd.f32 %v778, %v893
        %v895 = vpop.f32.mrb[0].mxu0
        %v896 = vpop.f32.mrb[0].mxu0
        %v897 = vpop.f32.mrb[0].mxu0
        %898 = vdwg.mxu0
        %v903 = vunpack.c.l.b16 %v755
        %v904 = vunpack.c.l.b16 %v756
        %v905 = vunpack.c.l.b16 %v757
        %v906 = vunpack.c.l.b16 %v758
        %v907 = vpack.c.b16 %v904, %v903
        %v908 = vpack.c.b16 %v906, %v905
        %911 = vmatprep.subr.bf16.mxu0 0
        %912 = vmatpush1.bf16.msra.mxu0 %v907
        %913 = vmatprep.subr.bf16.mxu0 0
        %914 = vmatpush1.bf16.msra.mxu0 %v908
        %915 = vmatprep.subr.bf16.mxu0 0
        %916 = vmatpush1.bf16.msra.mxu0 0
        %917 = vmatprep.subr.bf16.mxu0 0
        %918 = vmatpush1.bf16.msra.mxu0 0
        %919 = vmatprep.subr.bf16.mxu0 0
        %920 = vmatpush1.bf16.msra.mxu0 0
        %921 = vmatprep.subr.bf16.mxu0 0
        %922 = vmatpush1.bf16.msra.mxu0 0
        %923 = vmatprep.subr.bf16.mxu0 0
        %924 = vmatpush1.bf16.msra.mxu0 0
        %925 = vmatprep.subr.bf16.mxu0 0
        %926 = vmatpush1.bf16.msra.mxu0 0
        %927 = vmatprep.subr.bf16.mxu0 0
        %928 = vmatpush1.bf16.msra.mxu0 0
        %929 = vmatprep.subr.bf16.mxu0 0
        %930 = vmatpush1.bf16.msra.mxu0 0
        %931 = vmatprep.subr.bf16.mxu0 0
        %932 = vmatpush1.bf16.msra.mxu0 0
        %933 = vmatprep.subr.bf16.mxu0 0
        %934 = vmatpush1.bf16.msra.mxu0 0
        %935 = vmatprep.subr.bf16.mxu0 0
        %936 = vmatpush1.bf16.msra.mxu0 0
        %937 = vmatprep.subr.bf16.mxu0 0
        %938 = vmatpush1.bf16.msra.mxu0 0
        %939 = vmatprep.subr.bf16.mxu0 0
        %940 = vmatpush1.bf16.msra.mxu0 0
        %941 = vmatprep.subr.bf16.mxu0 0
        %942 = vmatpush1.bf16.msra.mxu0 0
        %943 = vmatprep.mubr.bf16.mxu0 0
        %944 = vmatmul.mubr.bf16.gmra.mrb[0].mxu0 %v805
        %v945 = vpop.f32.mrb[0].mxu0
        %v946 = vadd.f32 %v782, %v945
        %v947 = vpop.f32.mrb[0].mxu0
        %v948 = vpop.f32.mrb[0].mxu0
        %v949 = vpop.f32.mrb[0].mxu0
        %950 = vdwg.mxu0
        %v955 = vunpack.c.l.b16 %v759
        %v956 = vunpack.c.l.b16 %v760
        %v957 = vunpack.c.l.b16 %v761
        %v958 = vunpack.c.l.b16 %v762
        %v959 = vpack.c.b16 %v956, %v955
        %v960 = vpack.c.b16 %v958, %v957
        %963 = vmatprep.subr.bf16.mxu0 0
        %964 = vmatpush1.bf16.msra.mxu0 %v959
        %965 = vmatprep.subr.bf16.mxu0 0
        %966 = vmatpush1.bf16.msra.mxu0 %v960
        %967 = vmatprep.subr.bf16.mxu0 0
        %968 = vmatpush1.bf16.msra.mxu0 0
        %969 = vmatprep.subr.bf16.mxu0 0
        %970 = vmatpush1.bf16.msra.mxu0 0
        %971 = vmatprep.subr.bf16.mxu0 0
        %972 = vmatpush1.bf16.msra.mxu0 0
        %973 = vmatprep.subr.bf16.mxu0 0
        %974 = vmatpush1.bf16.msra.mxu0 0
        %975 = vmatprep.subr.bf16.mxu0 0
        %976 = vmatpush1.bf16.msra.mxu0 0
        %977 = vmatprep.subr.bf16.mxu0 0
        %978 = vmatpush1.bf16.msra.mxu0 0
        %979 = vmatprep.subr.bf16.mxu0 0
        %980 = vmatpush1.bf16.msra.mxu0 0
        %981 = vmatprep.subr.bf16.mxu0 0
        %982 = vmatpush1.bf16.msra.mxu0 0
        %983 = vmatprep.subr.bf16.mxu0 0
        %984 = vmatpush1.bf16.msra.mxu0 0
        %985 = vmatprep.subr.bf16.mxu0 0
        %986 = vmatpush1.bf16.msra.mxu0 0
        %987 = vmatprep.subr.bf16.mxu0 0
        %988 = vmatpush1.bf16.msra.mxu0 0
        %989 = vmatprep.subr.bf16.mxu0 0
        %990 = vmatpush1.bf16.msra.mxu0 0
        %991 = vmatprep.subr.bf16.mxu0 0
        %992 = vmatpush1.bf16.msra.mxu0 0
        %993 = vmatprep.subr.bf16.mxu0 0
        %994 = vmatpush1.bf16.msra.mxu0 0
        %995 = vmatprep.mubr.bf16.mxu0 0
        %996 = vmatmul.mubr.bf16.gmra.mrb[0].mxu0 %v805
        %v997 = vpop.f32.mrb[0].mxu0
        %v998 = vadd.f32 %v786, %v997
        %v999 = vpop.f32.mrb[0].mxu0
        %v1000 = vpop.f32.mrb[0].mxu0
        %v1001 = vpop.f32.mrb[0].mxu0
        %1002 = vdwg.mxu0
        %v1003 = vld [vmem:[%s5] sm:$0xf]
        %v1004 = vld [vmem:[%s5 + $0x4] sm:$0xf]
        %v1005 = vld [vmem:[%s5 + $0x8] sm:$0xf]
        %v1006 = vld [vmem:[%s5 + $0xc] sm:$0xf]
        %v1007 = vld [vmem:[%s5 + $0x10] sm:$0xf]
        %v1008 = vld [vmem:[%s5 + $0x14] sm:$0xf]
        %v1009 = vld [vmem:[%s5 + $0x18] sm:$0xf]
        %v1010 = vld [vmem:[%s5 + $0x1c] sm:$0xf]
        %v1011 = vld [vmem:[%s5 + $0x20] sm:$0xf]
        %v1012 = vld [vmem:[%s5 + $0x24] sm:$0xf]
        %v1013 = vld [vmem:[%s5 + $0x28] sm:$0xf]
        %v1014 = vld [vmem:[%s5 + $0x2c] sm:$0xf]
        %v1015 = vld [vmem:[%s5 + $0x30] sm:$0xf]
        %v1016 = vld [vmem:[%s5 + $0x34] sm:$0xf]
        %v1017 = vld [vmem:[%s5 + $0x38] sm:$0xf]
        %v1018 = vld [vmem:[%s5 + $0x3c] sm:$0xf]
        %v1019 = vld [vmem:[%s8] sm:$0x1]
        %v1020 = vld [vmem:[%s8 + $0x1] sm:$0x1]
        %v1021 = vld [vmem:[%s8 + $0x2] sm:$0x1]
        %v1022 = vld [vmem:[%s8 + $0x3] sm:$0x1]
        %v1027 = vlaneseq
        %v1028 = vshrl.u32 %v1027, 7
        %v1029 = vsub.s32 0, %v1028
        %v1030 = vrot.slane %v1019, %v1029
        %v1031 = vlaneseq
        %v1032 = vshrl.u32 %v1031, 7
        %v1033 = vsub.s32 0, %v1032
        %v1034 = vrot.slane %v1020, %v1033
        %v1035 = vlaneseq
        %v1036 = vshrl.u32 %v1035, 7
        %v1037 = vsub.s32 0, %v1036
        %v1038 = vrot.slane %v1021, %v1037
        %v1039 = vlaneseq
        %v1040 = vshrl.u32 %v1039, 7
        %v1041 = vsub.s32 0, %v1040
        %v1042 = vrot.slane %v1022, %v1041
        %v1051 = vunpack.c.l.b16 %v1003
        %v1052 = vunpack.c.l.b16 %v1004
        %v1053 = vunpack.c.l.b16 %v1005
        %v1054 = vunpack.c.l.b16 %v1006
        %v1055 = vpack.c.b16 %v1052, %v1051
        %v1056 = vpack.c.b16 %v1054, %v1053
        %1059 = vmatprep.subr.bf16.mxu0 0
        %1060 = vmatpush1.bf16.msra.mxu0 %v1055
        %1061 = vmatprep.subr.bf16.mxu0 0
        %1062 = vmatpush1.bf16.msra.mxu0 %v1056
        %1063 = vmatprep.subr.bf16.mxu0 0
        %1064 = vmatpush1.bf16.msra.mxu0 0
        %1065 = vmatprep.subr.bf16.mxu0 0
        %1066 = vmatpush1.bf16.msra.mxu0 0
        %1067 = vmatprep.subr.bf16.mxu0 0
        %1068 = vmatpush1.bf16.msra.mxu0 0
        %1069 = vmatprep.subr.bf16.mxu0 0
        %1070 = vmatpush1.bf16.msra.mxu0 0
        %1071 = vmatprep.subr.bf16.mxu0 0
        %1072 = vmatpush1.bf16.msra.mxu0 0
        %1073 = vmatprep.subr.bf16.mxu0 0
        %1074 = vmatpush1.bf16.msra.mxu0 0
        %1075 = vmatprep.subr.bf16.mxu0 0
        %1076 = vmatpush1.bf16.msra.mxu0 0
        %1077 = vmatprep.subr.bf16.mxu0 0
        %1078 = vmatpush1.bf16.msra.mxu0 0
        %1079 = vmatprep.subr.bf16.mxu0 0
        %1080 = vmatpush1.bf16.msra.mxu0 0
        %1081 = vmatprep.subr.bf16.mxu0 0
        %1082 = vmatpush1.bf16.msra.mxu0 0
        %1083 = vmatprep.subr.bf16.mxu0 0
        %1084 = vmatpush1.bf16.msra.mxu0 0
        %1085 = vmatprep.subr.bf16.mxu0 0
        %1086 = vmatpush1.bf16.msra.mxu0 0
        %1087 = vmatprep.subr.bf16.mxu0 0
        %1088 = vmatpush1.bf16.msra.mxu0 0
        %1089 = vmatprep.subr.bf16.mxu0 0
        %1090 = vmatpush1.bf16.msra.mxu0 0
        %1091 = vmatprep.mubr.bf16.mxu0 0
        %1092 = vmatmul.mubr.bf16.gmra.mrb[0].mxu0 %v805
        %v1093 = vpop.f32.mrb[0].mxu0
        %v1094 = vadd.f32 %v1030, %v1093
        %v1095 = vpop.f32.mrb[0].mxu0
        %v1096 = vpop.f32.mrb[0].mxu0
        %v1097 = vpop.f32.mrb[0].mxu0
        %1098 = vdwg.mxu0
        %v1103 = vunpack.c.l.b16 %v1007
        %v1104 = vunpack.c.l.b16 %v1008
        %v1105 = vunpack.c.l.b16 %v1009
        %v1106 = vunpack.c.l.b16 %v1010
        %v1107 = vpack.c.b16 %v1104, %v1103
        %v1108 = vpack.c.b16 %v1106, %v1105
        %1111 = vmatprep.subr.bf16.mxu0 0
        %1112 = vmatpush1.bf16.msra.mxu0 %v1107
        %1113 = vmatprep.subr.bf16.mxu0 0
        %1114 = vmatpush1.bf16.msra.mxu0 %v1108
        %1115 = vmatprep.subr.bf16.mxu0 0
        %1116 = vmatpush1.bf16.msra.mxu0 0
        %1117 = vmatprep.subr.bf16.mxu0 0
        %1118 = vmatpush1.bf16.msra.mxu0 0
        %1119 = vmatprep.subr.bf16.mxu0 0
        %1120 = vmatpush1.bf16.msra.mxu0 0
        %1121 = vmatprep.subr.bf16.mxu0 0
        %1122 = vmatpush1.bf16.msra.mxu0 0
        %1123 = vmatprep.subr.bf16.mxu0 0
        %1124 = vmatpush1.bf16.msra.mxu0 0
        %1125 = vmatprep.subr.bf16.mxu0 0
        %1126 = vmatpush1.bf16.msra.mxu0 0
        %1127 = vmatprep.subr.bf16.mxu0 0
        %1128 = vmatpush1.bf16.msra.mxu0 0
        %1129 = vmatprep.subr.bf16.mxu0 0
        %1130 = vmatpush1.bf16.msra.mxu0 0
        %1131 = vmatprep.subr.bf16.mxu0 0
        %1132 = vmatpush1.bf16.msra.mxu0 0
        %1133 = vmatprep.subr.bf16.mxu0 0
        %1134 = vmatpush1.bf16.msra.mxu0 0
        %1135 = vmatprep.subr.bf16.mxu0 0
        %1136 = vmatpush1.bf16.msra.mxu0 0
        %1137 = vmatprep.subr.bf16.mxu0 0
        %1138 = vmatpush1.bf16.msra.mxu0 0
        %1139 = vmatprep.subr.bf16.mxu0 0
        %1140 = vmatpush1.bf16.msra.mxu0 0
        %1141 = vmatprep.subr.bf16.mxu0 0
        %1142 = vmatpush1.bf16.msra.mxu0 0
        %1143 = vmatprep.mubr.bf16.mxu0 0
        %1144 = vmatmul.mubr.bf16.gmra.mrb[0].mxu0 %v805
        %v1145 = vpop.f32.mrb[0].mxu0
        %v1146 = vadd.f32 %v1034, %v1145
        %v1147 = vpop.f32.mrb[0].mxu0
        %v1148 = vpop.f32.mrb[0].mxu0
        %v1149 = vpop.f32.mrb[0].mxu0
        %1150 = vdwg.mxu0
        %v1155 = vunpack.c.l.b16 %v1011
        %v1156 = vunpack.c.l.b16 %v1012
        %v1157 = vunpack.c.l.b16 %v1013
        %v1158 = vunpack.c.l.b16 %v1014
        %v1159 = vpack.c.b16 %v1156, %v1155
        %v1160 = vpack.c.b16 %v1158, %v1157
        %1163 = vmatprep.subr.bf16.mxu0 0
        %1164 = vmatpush1.bf16.msra.mxu0 %v1159
        %1165 = vmatprep.subr.bf16.mxu0 0
        %1166 = vmatpush1.bf16.msra.mxu0 %v1160
        %1167 = vmatprep.subr.bf16.mxu0 0
        %1168 = vmatpush1.bf16.msra.mxu0 0
        %1169 = vmatprep.subr.bf16.mxu0 0
        %1170 = vmatpush1.bf16.msra.mxu0 0
        %1171 = vmatprep.subr.bf16.mxu0 0
        %1172 = vmatpush1.bf16.msra.mxu0 0
        %1173 = vmatprep.subr.bf16.mxu0 0
        %1174 = vmatpush1.bf16.msra.mxu0 0
        %1175 = vmatprep.subr.bf16.mxu0 0
        %1176 = vmatpush1.bf16.msra.mxu0 0
        %1177 = vmatprep.subr.bf16.mxu0 0
        %1178 = vmatpush1.bf16.msra.mxu0 0
        %1179 = vmatprep.subr.bf16.mxu0 0
        %1180 = vmatpush1.bf16.msra.mxu0 0
        %1181 = vmatprep.subr.bf16.mxu0 0
        %1182 = vmatpush1.bf16.msra.mxu0 0
        %1183 = vmatprep.subr.bf16.mxu0 0
        %1184 = vmatpush1.bf16.msra.mxu0 0
        %1185 = vmatprep.subr.bf16.mxu0 0
        %1186 = vmatpush1.bf16.msra.mxu0 0
        %1187 = vmatprep.subr.bf16.mxu0 0
        %1188 = vmatpush1.bf16.msra.mxu0 0
        %1189 = vmatprep.subr.bf16.mxu0 0
        %1190 = vmatpush1.bf16.msra.mxu0 0
        %1191 = vmatprep.subr.bf16.mxu0 0
        %1192 = vmatpush1.bf16.msra.mxu0 0
        %1193 = vmatprep.subr.bf16.mxu0 0
        %1194 = vmatpush1.bf16.msra.mxu0 0
        %1195 = vmatprep.mubr.bf16.mxu0 0
        %1196 = vmatmul.mubr.bf16.gmra.mrb[0].mxu0 %v805
        %v1197 = vpop.f32.mrb[0].mxu0
        %v1198 = vadd.f32 %v1038, %v1197
        %v1199 = vpop.f32.mrb[0].mxu0
        %v1200 = vpop.f32.mrb[0].mxu0
        %v1201 = vpop.f32.mrb[0].mxu0
        %1202 = vdwg.mxu0
        %v1207 = vunpack.c.l.b16 %v1015
        %v1208 = vunpack.c.l.b16 %v1016
        %v1209 = vunpack.c.l.b16 %v1017
        %v1210 = vunpack.c.l.b16 %v1018
        %v1211 = vpack.c.b16 %v1208, %v1207
        %v1212 = vpack.c.b16 %v1210, %v1209
        %1215 = vmatprep.subr.bf16.mxu0 0
        %1216 = vmatpush1.bf16.msra.mxu0 %v1211
        %1217 = vmatprep.subr.bf16.mxu0 0
        %1218 = vmatpush1.bf16.msra.mxu0 %v1212
        %1219 = vmatprep.subr.bf16.mxu0 0
        %1220 = vmatpush1.bf16.msra.mxu0 0
        %1221 = vmatprep.subr.bf16.mxu0 0
        %1222 = vmatpush1.bf16.msra.mxu0 0
        %1223 = vmatprep.subr.bf16.mxu0 0
        %1224 = vmatpush1.bf16.msra.mxu0 0
        %1225 = vmatprep.subr.bf16.mxu0 0
        %1226 = vmatpush1.bf16.msra.mxu0 0
        %1227 = vmatprep.subr.bf16.mxu0 0
        %1228 = vmatpush1.bf16.msra.mxu0 0
        %1229 = vmatprep.subr.bf16.mxu0 0
        %1230 = vmatpush1.bf16.msra.mxu0 0
        %1231 = vmatprep.subr.bf16.mxu0 0
        %1232 = vmatpush1.bf16.msra.mxu0 0
        %1233 = vmatprep.subr.bf16.mxu0 0
        %1234 = vmatpush1.bf16.msra.mxu0 0
        %1235 = vmatprep.subr.bf16.mxu0 0
        %1236 = vmatpush1.bf16.msra.mxu0 0
        %1237 = vmatprep.subr.bf16.mxu0 0
        %1238 = vmatpush1.bf16.msra.mxu0 0
        %1239 = vmatprep.subr.bf16.mxu0 0
        %1240 = vmatpush1.bf16.msra.mxu0 0
        %1241 = vmatprep.subr.bf16.mxu0 0
        %1242 = vmatpush1.bf16.msra.mxu0 0
        %1243 = vmatprep.subr.bf16.mxu0 0
        %1244 = vmatpush1.bf16.msra.mxu0 0
        %1245 = vmatprep.subr.bf16.mxu0 0
        %1246 = vmatpush1.bf16.msra.mxu0 0
        %1247 = vmatprep.mubr.bf16.mxu0 0
        %1248 = vmatmul.mubr.bf16.gmra.mrb[0].mxu0 %v805
        %v1249 = vpop.f32.mrb[0].mxu0
        %v1250 = vadd.f32 %v1042, %v1249
        %v1251 = vpop.f32.mrb[0].mxu0
        %v1252 = vpop.f32.mrb[0].mxu0
        %v1253 = vpop.f32.mrb[0].mxu0
        %1254 = vdwg.mxu0
        %v1255 = vld [vmem:[%s6] sm:$0xf]
        %v1256 = vld [vmem:[%s6 + $0x4] sm:$0xf]
        %v1257 = vld [vmem:[%s6 + $0x8] sm:$0xf]
        %v1258 = vld [vmem:[%s6 + $0xc] sm:$0xf]
        %v1259 = vld [vmem:[%s6 + $0x10] sm:$0xf]
        %v1260 = vld [vmem:[%s6 + $0x14] sm:$0xf]
        %v1261 = vld [vmem:[%s6 + $0x18] sm:$0xf]
        %v1262 = vld [vmem:[%s6 + $0x1c] sm:$0xf]
        %v1263 = vld [vmem:[%s6 + $0x20] sm:$0xf]
        %v1264 = vld [vmem:[%s6 + $0x24] sm:$0xf]
        %v1265 = vld [vmem:[%s6 + $0x28] sm:$0xf]
        %v1266 = vld [vmem:[%s6 + $0x2c] sm:$0xf]
        %v1267 = vld [vmem:[%s6 + $0x30] sm:$0xf]
        %v1268 = vld [vmem:[%s6 + $0x34] sm:$0xf]
        %v1269 = vld [vmem:[%s6 + $0x38] sm:$0xf]
        %v1270 = vld [vmem:[%s6 + $0x3c] sm:$0xf]
        %v1271 = vld [vmem:[%s9] sm:$0x1]
        %v1272 = vld [vmem:[%s9 + $0x1] sm:$0x1]
        %v1273 = vld [vmem:[%s9 + $0x2] sm:$0x1]
        %v1274 = vld [vmem:[%s9 + $0x3] sm:$0x1]
        %v1279 = vlaneseq
        %v1280 = vshrl.u32 %v1279, 7
        %v1281 = vsub.s32 0, %v1280
        %v1282 = vrot.slane %v1271, %v1281
        %v1283 = vlaneseq
        %v1284 = vshrl.u32 %v1283, 7
        %v1285 = vsub.s32 0, %v1284
        %v1286 = vrot.slane %v1272, %v1285
        %v1287 = vlaneseq
        %v1288 = vshrl.u32 %v1287, 7
        %v1289 = vsub.s32 0, %v1288
        %v1290 = vrot.slane %v1273, %v1289
        %v1291 = vlaneseq
        %v1292 = vshrl.u32 %v1291, 7
        %v1293 = vsub.s32 0, %v1292
        %v1294 = vrot.slane %v1274, %v1293
        %v1303 = vunpack.c.l.b16 %v1255
        %v1304 = vunpack.c.l.b16 %v1256
        %v1305 = vunpack.c.l.b16 %v1257
        %v1306 = vunpack.c.l.b16 %v1258
        %v1307 = vpack.c.b16 %v1304, %v1303
        %v1308 = vpack.c.b16 %v1306, %v1305
        %1311 = vmatprep.subr.bf16.mxu0 0
        %1312 = vmatpush1.bf16.msra.mxu0 %v1307
        %1313 = vmatprep.subr.bf16.mxu0 0
        %1314 = vmatpush1.bf16.msra.mxu0 %v1308
        %1315 = vmatprep.subr.bf16.mxu0 0
        %1316 = vmatpush1.bf16.msra.mxu0 0
        %1317 = vmatprep.subr.bf16.mxu0 0
        %1318 = vmatpush1.bf16.msra.mxu0 0
        %1319 = vmatprep.subr.bf16.mxu0 0
        %1320 = vmatpush1.bf16.msra.mxu0 0
        %1321 = vmatprep.subr.bf16.mxu0 0
        %1322 = vmatpush1.bf16.msra.mxu0 0
        %1323 = vmatprep.subr.bf16.mxu0 0
        %1324 = vmatpush1.bf16.msra.mxu0 0
        %1325 = vmatprep.subr.bf16.mxu0 0
        %1326 = vmatpush1.bf16.msra.mxu0 0
        %1327 = vmatprep.subr.bf16.mxu0 0
        %1328 = vmatpush1.bf16.msra.mxu0 0
        %1329 = vmatprep.subr.bf16.mxu0 0
        %1330 = vmatpush1.bf16.msra.mxu0 0
        %1331 = vmatprep.subr.bf16.mxu0 0
        %1332 = vmatpush1.bf16.msra.mxu0 0
        %1333 = vmatprep.subr.bf16.mxu0 0
        %1334 = vmatpush1.bf16.msra.mxu0 0
        %1335 = vmatprep.subr.bf16.mxu0 0
        %1336 = vmatpush1.bf16.msra.mxu0 0
        %1337 = vmatprep.subr.bf16.mxu0 0
        %1338 = vmatpush1.bf16.msra.mxu0 0
        %1339 = vmatprep.subr.bf16.mxu0 0
        %1340 = vmatpush1.bf16.msra.mxu0 0
        %1341 = vmatprep.subr.bf16.mxu0 0
        %1342 = vmatpush1.bf16.msra.mxu0 0
        %1343 = vmatprep.mubr.bf16.mxu0 0
        %1344 = vmatmul.mubr.bf16.gmra.mrb[0].mxu0 %v805
        %v1345 = vpop.f32.mrb[0].mxu0
        %v1346 = vadd.f32 %v1282, %v1345
        %v1347 = vpop.f32.mrb[0].mxu0
        %v1348 = vpop.f32.mrb[0].mxu0
        %v1349 = vpop.f32.mrb[0].mxu0
        %1350 = vdwg.mxu0
        %v1355 = vunpack.c.l.b16 %v1259
        %v1356 = vunpack.c.l.b16 %v1260
        %v1357 = vunpack.c.l.b16 %v1261
        %v1358 = vunpack.c.l.b16 %v1262
        %v1359 = vpack.c.b16 %v1356, %v1355
        %v1360 = vpack.c.b16 %v1358, %v1357
        %1363 = vmatprep.subr.bf16.mxu0 0
        %1364 = vmatpush1.bf16.msra.mxu0 %v1359
        %1365 = vmatprep.subr.bf16.mxu0 0
        %1366 = vmatpush1.bf16.msra.mxu0 %v1360
        %1367 = vmatprep.subr.bf16.mxu0 0
        %1368 = vmatpush1.bf16.msra.mxu0 0
        %1369 = vmatprep.subr.bf16.mxu0 0
        %1370 = vmatpush1.bf16.msra.mxu0 0
        %1371 = vmatprep.subr.bf16.mxu0 0
        %1372 = vmatpush1.bf16.msra.mxu0 0
        %1373 = vmatprep.subr.bf16.mxu0 0
        %1374 = vmatpush1.bf16.msra.mxu0 0
        %1375 = vmatprep.subr.bf16.mxu0 0
        %1376 = vmatpush1.bf16.msra.mxu0 0
        %1377 = vmatprep.subr.bf16.mxu0 0
        %1378 = vmatpush1.bf16.msra.mxu0 0
        %1379 = vmatprep.subr.bf16.mxu0 0
        %1380 = vmatpush1.bf16.msra.mxu0 0
        %1381 = vmatprep.subr.bf16.mxu0 0
        %1382 = vmatpush1.bf16.msra.mxu0 0
        %1383 = vmatprep.subr.bf16.mxu0 0
        %1384 = vmatpush1.bf16.msra.mxu0 0
        %1385 = vmatprep.subr.bf16.mxu0 0
        %1386 = vmatpush1.bf16.msra.mxu0 0
        %1387 = vmatprep.subr.bf16.mxu0 0
        %1388 = vmatpush1.bf16.msra.mxu0 0
        %1389 = vmatprep.subr.bf16.mxu0 0
        %1390 = vmatpush1.bf16.msra.mxu0 0
        %1391 = vmatprep.subr.bf16.mxu0 0
        %1392 = vmatpush1.bf16.msra.mxu0 0
        %1393 = vmatprep.subr.bf16.mxu0 0
        %1394 = vmatpush1.bf16.msra.mxu0 0
        %1395 = vmatprep.mubr.bf16.mxu0 0
        %1396 = vmatmul.mubr.bf16.gmra.mrb[0].mxu0 %v805
        %v1397 = vpop.f32.mrb[0].mxu0
        %v1398 = vadd.f32 %v1286, %v1397
        %v1399 = vpop.f32.mrb[0].mxu0
        %v1400 = vpop.f32.mrb[0].mxu0
        %v1401 = vpop.f32.mrb[0].mxu0
        %1402 = vdwg.mxu0
        %v1407 = vunpack.c.l.b16 %v1263
        %v1408 = vunpack.c.l.b16 %v1264
        %v1409 = vunpack.c.l.b16 %v1265
        %v1410 = vunpack.c.l.b16 %v1266
        %v1411 = vpack.c.b16 %v1408, %v1407
        %v1412 = vpack.c.b16 %v1410, %v1409
        %1415 = vmatprep.subr.bf16.mxu0 0
        %1416 = vmatpush1.bf16.msra.mxu0 %v1411
        %1417 = vmatprep.subr.bf16.mxu0 0
        %1418 = vmatpush1.bf16.msra.mxu0 %v1412
        %1419 = vmatprep.subr.bf16.mxu0 0
        %1420 = vmatpush1.bf16.msra.mxu0 0
        %1421 = vmatprep.subr.bf16.mxu0 0
        %1422 = vmatpush1.bf16.msra.mxu0 0
        %1423 = vmatprep.subr.bf16.mxu0 0
        %1424 = vmatpush1.bf16.msra.mxu0 0
        %1425 = vmatprep.subr.bf16.mxu0 0
        %1426 = vmatpush1.bf16.msra.mxu0 0
        %1427 = vmatprep.subr.bf16.mxu0 0
        %1428 = vmatpush1.bf16.msra.mxu0 0
        %1429 = vmatprep.subr.bf16.mxu0 0
        %1430 = vmatpush1.bf16.msra.mxu0 0
        %1431 = vmatprep.subr.bf16.mxu0 0
        %1432 = vmatpush1.bf16.msra.mxu0 0
        %1433 = vmatprep.subr.bf16.mxu0 0
        %1434 = vmatpush1.bf16.msra.mxu0 0
        %1435 = vmatprep.subr.bf16.mxu0 0
        %1436 = vmatpush1.bf16.msra.mxu0 0
        %1437 = vmatprep.subr.bf16.mxu0 0
        %1438 = vmatpush1.bf16.msra.mxu0 0
        %1439 = vmatprep.subr.bf16.mxu0 0
        %1440 = vmatpush1.bf16.msra.mxu0 0
        %1441 = vmatprep.subr.bf16.mxu0 0
        %1442 = vmatpush1.bf16.msra.mxu0 0
        %1443 = vmatprep.subr.bf16.mxu0 0
        %1444 = vmatpush1.bf16.msra.mxu0 0
        %1445 = vmatprep.subr.bf16.mxu0 0
        %1446 = vmatpush1.bf16.msra.mxu0 0
        %1447 = vmatprep.mubr.bf16.mxu0 0
        %1448 = vmatmul.mubr.bf16.gmra.mrb[0].mxu0 %v805
        %v1449 = vpop.f32.mrb[0].mxu0
        %v1450 = vadd.f32 %v1290, %v1449
        %v1451 = vpop.f32.mrb[0].mxu0
        %v1452 = vpop.f32.mrb[0].mxu0
        %v1453 = vpop.f32.mrb[0].mxu0
        %1454 = vdwg.mxu0
        %v1459 = vunpack.c.l.b16 %v1267
        %v1460 = vunpack.c.l.b16 %v1268
        %v1461 = vunpack.c.l.b16 %v1269
        %v1462 = vunpack.c.l.b16 %v1270
        %v1463 = vpack.c.b16 %v1460, %v1459
        %v1464 = vpack.c.b16 %v1462, %v1461
        %1467 = vmatprep.subr.bf16.mxu0 0
        %1468 = vmatpush1.bf16.msra.mxu0 %v1463
        %1469 = vmatprep.subr.bf16.mxu0 0
        %1470 = vmatpush1.bf16.msra.mxu0 %v1464
        %1471 = vmatprep.subr.bf16.mxu0 0
        %1472 = vmatpush1.bf16.msra.mxu0 0
        %1473 = vmatprep.subr.bf16.mxu0 0
        %1474 = vmatpush1.bf16.msra.mxu0 0
        %1475 = vmatprep.subr.bf16.mxu0 0
        %1476 = vmatpush1.bf16.msra.mxu0 0
        %1477 = vmatprep.subr.bf16.mxu0 0
        %1478 = vmatpush1.bf16.msra.mxu0 0
        %1479 = vmatprep.subr.bf16.mxu0 0
        %1480 = vmatpush1.bf16.msra.mxu0 0
        %1481 = vmatprep.subr.bf16.mxu0 0
        %1482 = vmatpush1.bf16.msra.mxu0 0
        %1483 = vmatprep.subr.bf16.mxu0 0
        %1484 = vmatpush1.bf16.msra.mxu0 0
        %1485 = vmatprep.subr.bf16.mxu0 0
        %1486 = vmatpush1.bf16.msra.mxu0 0
        %1487 = vmatprep.subr.bf16.mxu0 0
        %1488 = vmatpush1.bf16.msra.mxu0 0
        %1489 = vmatprep.subr.bf16.mxu0 0
        %1490 = vmatpush1.bf16.msra.mxu0 0
        %1491 = vmatprep.subr.bf16.mxu0 0
        %1492 = vmatpush1.bf16.msra.mxu0 0
        %1493 = vmatprep.subr.bf16.mxu0 0
        %1494 = vmatpush1.bf16.msra.mxu0 0
        %1495 = vmatprep.subr.bf16.mxu0 0
        %1496 = vmatpush1.bf16.msra.mxu0 0
        %1497 = vmatprep.subr.bf16.mxu0 0
        %1498 = vmatpush1.bf16.msra.mxu0 0
        %1499 = vmatprep.mubr.bf16.mxu0 0
        %1500 = vmatmul.mubr.bf16.gmra.mrb[0].mxu0 %v805
        %v1501 = vpop.f32.mrb[0].mxu0
        %v1502 = vadd.f32 %v1294, %v1501
        %v1503 = vpop.f32.mrb[0].mxu0
        %v1504 = vpop.f32.mrb[0].mxu0
        %v1505 = vpop.f32.mrb[0].mxu0
        %1506 = vdwg.mxu0
        %v1507 = vpack.c.bf16 %v842, %v842
        %v1508 = vpack.c.bf16 %v894, %v894
        %v1509 = vpack.c.bf16 %v946, %v946
        %v1510 = vpack.c.bf16 %v998, %v998
        %v1511 = vpack.c.bf16 %v1094, %v1094
        %v1512 = vpack.c.bf16 %v1146, %v1146
        %v1513 = vpack.c.bf16 %v1198, %v1198
        %v1514 = vpack.c.bf16 %v1250, %v1250
        %vm1515 = vcmask 64512
        %v1517 = vsel %vm1515, %v1507, 0
        %v1520 = vsel %vm1515, %v1511, 0
        %1522 = vmatprep.subr.bf16.mxu0 0
        %1523 = vmatpush1.bf16.xpose.msra.mxu0 %v1520
        %1524 = vmatprep.subr.bf16.mxu0 0
        %1525 = vmatpush1.bf16.xpose.msra.mxu0 0
        %1526 = vmatprep.subr.bf16.mxu0 0
        %1527 = vmatpush1.bf16.xpose.msra.mxu0 0
        %1528 = vmatprep.subr.bf16.mxu0 0
        %1529 = vmatpush1.bf16.xpose.msra.mxu0 0
        %1530 = vmatprep.subr.bf16.mxu0 0
        %1531 = vmatpush1.bf16.xpose.msra.mxu0 0
        %1532 = vmatprep.subr.bf16.mxu0 0
        %1533 = vmatpush1.bf16.xpose.msra.mxu0 0
        %1534 = vmatprep.subr.bf16.mxu0 0
        %1535 = vmatpush1.bf16.xpose.msra.mxu0 0
        %1536 = vmatprep.subr.bf16.mxu0 0
        %1537 = vmatpush1.bf16.xpose.msra.mxu0 0
        %1538 = vmatprep.subr.bf16.mxu0 0
        %1539 = vmatpush1.bf16.xpose.msra.mxu0 0
        %1540 = vmatprep.subr.bf16.mxu0 0
        %1541 = vmatpush1.bf16.xpose.msra.mxu0 0
        %1542 = vmatprep.subr.bf16.mxu0 0
        %1543 = vmatpush1.bf16.xpose.msra.mxu0 0
        %1544 = vmatprep.subr.bf16.mxu0 0
        %1545 = vmatpush1.bf16.xpose.msra.mxu0 0
        %1546 = vmatprep.subr.bf16.mxu0 0
        %1547 = vmatpush1.bf16.xpose.msra.mxu0 0
        %1548 = vmatprep.subr.bf16.mxu0 0
        %1549 = vmatpush1.bf16.xpose.msra.mxu0 0
        %1550 = vmatprep.subr.bf16.mxu0 0
        %1551 = vmatpush1.bf16.xpose.msra.mxu0 0
        %1552 = vmatprep.subr.bf16.mxu0 0
        %1553 = vmatpush1.bf16.xpose.msra.mxu0 0
        %1554 = vmatprep.mubr.bf16.mxu0 0
        %1555 = vmatmul.mubr.bf16.gmra.mrb[0].mxu0 %v1517
        %v1556 = vpop.f32.mrb[0].mxu0
        %v1557 = vadd.f32 0.0, %v1556
        %v1558 = vpop.f32.mrb[0].mxu0
        %v1559 = vpop.f32.mrb[0].mxu0
        %v1560 = vpop.f32.mrb[0].mxu0
        %1561 = vdwg.mxu0
        %v1563 = vsel %vm1515, %v1508, 0
        %v1566 = vsel %vm1515, %v1512, 0
        %1568 = vmatprep.subr.bf16.mxu0 0
        %1569 = vmatpush1.bf16.xpose.msra.mxu0 %v1566
        %1570 = vmatprep.subr.bf16.mxu0 0
        %1571 = vmatpush1.bf16.xpose.msra.mxu0 0
        %1572 = vmatprep.subr.bf16.mxu0 0
        %1573 = vmatpush1.bf16.xpose.msra.mxu0 0
        %1574 = vmatprep.subr.bf16.mxu0 0
        %1575 = vmatpush1.bf16.xpose.msra.mxu0 0
        %1576 = vmatprep.subr.bf16.mxu0 0
        %1577 = vmatpush1.bf16.xpose.msra.mxu0 0
        %1578 = vmatprep.subr.bf16.mxu0 0
        %1579 = vmatpush1.bf16.xpose.msra.mxu0 0
        %1580 = vmatprep.subr.bf16.mxu0 0
        %1581 = vmatpush1.bf16.xpose.msra.mxu0 0
        %1582 = vmatprep.subr.bf16.mxu0 0
        %1583 = vmatpush1.bf16.xpose.msra.mxu0 0
        %1584 = vmatprep.subr.bf16.mxu0 0
        %1585 = vmatpush1.bf16.xpose.msra.mxu0 0
        %1586 = vmatprep.subr.bf16.mxu0 0
        %1587 = vmatpush1.bf16.xpose.msra.mxu0 0
        %1588 = vmatprep.subr.bf16.mxu0 0
        %1589 = vmatpush1.bf16.xpose.msra.mxu0 0
        %1590 = vmatprep.subr.bf16.mxu0 0
        %1591 = vmatpush1.bf16.xpose.msra.mxu0 0
        %1592 = vmatprep.subr.bf16.mxu0 0
        %1593 = vmatpush1.bf16.xpose.msra.mxu0 0
        %1594 = vmatprep.subr.bf16.mxu0 0
        %1595 = vmatpush1.bf16.xpose.msra.mxu0 0
        %1596 = vmatprep.subr.bf16.mxu0 0
        %1597 = vmatpush1.bf16.xpose.msra.mxu0 0
        %1598 = vmatprep.subr.bf16.mxu0 0
        %1599 = vmatpush1.bf16.xpose.msra.mxu0 0
        %1600 = vmatprep.mubr.bf16.mxu0 0
        %1601 = vmatmul.mubr.bf16.gmra.mrb[0].mxu0 %v1563
        %v1602 = vpop.f32.mrb[0].mxu0
        %v1603 = vadd.f32 0.0, %v1602
        %v1604 = vpop.f32.mrb[0].mxu0
        %v1605 = vpop.f32.mrb[0].mxu0
        %v1606 = vpop.f32.mrb[0].mxu0
        %1607 = vdwg.mxu0
        %v1609 = vsel %vm1515, %v1509, 0
        %v1612 = vsel %vm1515, %v1513, 0
        %1614 = vmatprep.subr.bf16.mxu0 0
        %1615 = vmatpush1.bf16.xpose.msra.mxu0 %v1612
        %1616 = vmatprep.subr.bf16.mxu0 0
        %1617 = vmatpush1.bf16.xpose.msra.mxu0 0
        %1618 = vmatprep.subr.bf16.mxu0 0
        %1619 = vmatpush1.bf16.xpose.msra.mxu0 0
        %1620 = vmatprep.subr.bf16.mxu0 0
        %1621 = vmatpush1.bf16.xpose.msra.mxu0 0
        %1622 = vmatprep.subr.bf16.mxu0 0
        %1623 = vmatpush1.bf16.xpose.msra.mxu0 0
        %1624 = vmatprep.subr.bf16.mxu0 0
        %1625 = vmatpush1.bf16.xpose.msra.mxu0 0
        %1626 = vmatprep.subr.bf16.mxu0 0
        %1627 = vmatpush1.bf16.xpose.msra.mxu0 0
        %1628 = vmatprep.subr.bf16.mxu0 0
        %1629 = vmatpush1.bf16.xpose.msra.mxu0 0
        %1630 = vmatprep.subr.bf16.mxu0 0
        %1631 = vmatpush1.bf16.xpose.msra.mxu0 0
        %1632 = vmatprep.subr.bf16.mxu0 0
        %1633 = vmatpush1.bf16.xpose.msra.mxu0 0
        %1634 = vmatprep.subr.bf16.mxu0 0
        %1635 = vmatpush1.bf16.xpose.msra.mxu0 0
        %1636 = vmatprep.subr.bf16.mxu0 0
        %1637 = vmatpush1.bf16.xpose.msra.mxu0 0
        %1638 = vmatprep.subr.bf16.mxu0 0
        %1639 = vmatpush1.bf16.xpose.msra.mxu0 0
        %1640 = vmatprep.subr.bf16.mxu0 0
        %1641 = vmatpush1.bf16.xpose.msra.mxu0 0
        %1642 = vmatprep.subr.bf16.mxu0 0
        %1643 = vmatpush1.bf16.xpose.msra.mxu0 0
        %1644 = vmatprep.subr.bf16.mxu0 0
        %1645 = vmatpush1.bf16.xpose.msra.mxu0 0
        %1646 = vmatprep.mubr.bf16.mxu0 0
        %1647 = vmatmul.mubr.bf16.gmra.mrb[0].mxu0 %v1609
        %v1648 = vpop.f32.mrb[0].mxu0
        %v1649 = vadd.f32 0.0, %v1648
        %v1650 = vpop.f32.mrb[0].mxu0
        %v1651 = vpop.f32.mrb[0].mxu0
        %v1652 = vpop.f32.mrb[0].mxu0
        %1653 = vdwg.mxu0
        %v1655 = vsel %vm1515, %v1510, 0
        %v1658 = vsel %vm1515, %v1514, 0
        %1660 = vmatprep.subr.bf16.mxu0 0
        %1661 = vmatpush1.bf16.xpose.msra.mxu0 %v1658
        %1662 = vmatprep.subr.bf16.mxu0 0
        %1663 = vmatpush1.bf16.xpose.msra.mxu0 0
        %1664 = vmatprep.subr.bf16.mxu0 0
        %1665 = vmatpush1.bf16.xpose.msra.mxu0 0
        %1666 = vmatprep.subr.bf16.mxu0 0
        %1667 = vmatpush1.bf16.xpose.msra.mxu0 0
        %1668 = vmatprep.subr.bf16.mxu0 0
        %1669 = vmatpush1.bf16.xpose.msra.mxu0 0
        %1670 = vmatprep.subr.bf16.mxu0 0
        %1671 = vmatpush1.bf16.xpose.msra.mxu0 0
        %1672 = vmatprep.subr.bf16.mxu0 0
        %1673 = vmatpush1.bf16.xpose.msra.mxu0 0
        %1674 = vmatprep.subr.bf16.mxu0 0
        %1675 = vmatpush1.bf16.xpose.msra.mxu0 0
        %1676 = vmatprep.subr.bf16.mxu0 0
        %1677 = vmatpush1.bf16.xpose.msra.mxu0 0
        %1678 = vmatprep.subr.bf16.mxu0 0
        %1679 = vmatpush1.bf16.xpose.msra.mxu0 0
        %1680 = vmatprep.subr.bf16.mxu0 0
        %1681 = vmatpush1.bf16.xpose.msra.mxu0 0
        %1682 = vmatprep.subr.bf16.mxu0 0
        %1683 = vmatpush1.bf16.xpose.msra.mxu0 0
        %1684 = vmatprep.subr.bf16.mxu0 0
        %1685 = vmatpush1.bf16.xpose.msra.mxu0 0
        %1686 = vmatprep.subr.bf16.mxu0 0
        %1687 = vmatpush1.bf16.xpose.msra.mxu0 0
        %1688 = vmatprep.subr.bf16.mxu0 0
        %1689 = vmatpush1.bf16.xpose.msra.mxu0 0
        %1690 = vmatprep.subr.bf16.mxu0 0
        %1691 = vmatpush1.bf16.xpose.msra.mxu0 0
        %1692 = vmatprep.mubr.bf16.mxu0 0
        %1693 = vmatmul.mubr.bf16.gmra.mrb[0].mxu0 %v1655
        %v1694 = vpop.f32.mrb[0].mxu0
        %v1695 = vadd.f32 0.0, %v1694
        %v1696 = vpop.f32.mrb[0].mxu0
        %v1697 = vpop.f32.mrb[0].mxu0
        %v1698 = vpop.f32.mrb[0].mxu0
        %1699 = vdwg.mxu0
        %v1700 = vmul.f32 %v1557, 0.35355338
        %v1701 = vmul.f32 %v1603, 0.35355338
        %v1702 = vmul.f32 %v1649, 0.35355338
        %v1703 = vmul.f32 %v1695, 0.35355338
        %v1704 = vadd.f32 %v1700, %v745
        %v1705 = vadd.f32 %v1701, %v745
        %v1706 = vadd.f32 %v1702, %v745
        %v1707 = vadd.f32 %v1703, %v745
        %v1708 = vsel %vm1515, %v1704, -inf
        %1709 = vmax.xlane.f32.xlu0 %v1708
        %v1710 = vpop.xlane.xlu0 %1709
        %v1711 = vsel %vm1515, %v1705, -inf
        %1712 = vmax.xlane.f32.xlu0 %v1711
        %v1713 = vpop.xlane.xlu0 %1712
        %v1714 = vsel %vm1515, %v1706, -inf
        %1715 = vmax.xlane.f32.xlu0 %v1714
        %v1716 = vpop.xlane.xlu0 %1715
        %v1717 = vsel %vm1515, %v1707, -inf
        %1718 = vmax.xlane.f32.xlu0 %v1717
        %v1719 = vpop.xlane.xlu0 %1718
        %v1720 = vsub.f32 %v1704, %v1710
        %v1721 = vsub.f32 %v1705, %v1713
        %v1722 = vsub.f32 %v1706, %v1716
        %v1723 = vsub.f32 %v1707, %v1719
        %v1724 = vmul.f32 %v1720, 1.442695
        %v1725 = vpow.pop %v1724
        %v1726 = vmul.f32 %v1721, 1.442695
        %v1727 = vpow.pop %v1726
        %v1728 = vmul.f32 %v1722, 1.442695
        %v1729 = vpow.pop %v1728
        %v1730 = vmul.f32 %v1723, 1.442695
        %v1731 = vpow.pop %v1730
        %v1732 = vsel %vm1515, %v1725, 0.0
        %1733 = vadd.xlane.f32.xlu0 %v1732
        %v1734 = vpop.xlane.xlu0 %1733
        %v1735 = vsel %vm1515, %v1727, 0.0
        %1736 = vadd.xlane.f32.xlu0 %v1735
        %v1737 = vpop.xlane.xlu0 %1736
        %v1738 = vsel %vm1515, %v1729, 0.0
        %1739 = vadd.xlane.f32.xlu0 %v1738
        %v1740 = vpop.xlane.xlu0 %1739
        %v1741 = vsel %vm1515, %v1731, 0.0
        %1742 = vadd.xlane.f32.xlu0 %v1741
        %v1743 = vpop.xlane.xlu0 %1742
        %v1744 = vrcp.pop %v1734
        %v1745 = vrcp.pop %v1737
        %v1746 = vrcp.pop %v1740
        %v1747 = vrcp.pop %v1743
        %v1748 = vmul.f32 %v1725, %v1744
        %v1749 = vmul.f32 %v1727, %v1745
        %v1750 = vmul.f32 %v1729, %v1746
        %v1751 = vmul.f32 %v1731, %v1747
        %v1752 = vpack.c.bf16 %v1748, %v1748
        %v1753 = vpack.c.bf16 %v1749, %v1749
        %v1754 = vpack.c.bf16 %v1750, %v1750
        %v1755 = vpack.c.bf16 %v1751, %v1751
        %v1756 = vpack.c.bf16 %v1346, %v1346
        %v1757 = vpack.c.bf16 %v1398, %v1398
        %v1758 = vpack.c.bf16 %v1450, %v1450
        %v1759 = vpack.c.bf16 %v1502, %v1502
        %v1761 = vsel %vm1515, %v1752, 0
        %vm1763 = vcmask 1043456
        %v1765 = vsel %vm1763, %v1756, 0
        %1767 = vmatprep.subr.bf16.mxu0 0
        %1768 = vmatpush1.bf16.msra.mxu0 %v1765
        %1769 = vmatprep.subr.bf16.mxu0 0
        %1770 = vmatpush1.bf16.msra.mxu0 0
        %1771 = vmatprep.subr.bf16.mxu0 0
        %1772 = vmatpush1.bf16.msra.mxu0 0
        %1773 = vmatprep.subr.bf16.mxu0 0
        %1774 = vmatpush1.bf16.msra.mxu0 0
        %1775 = vmatprep.subr.bf16.mxu0 0
        %1776 = vmatpush1.bf16.msra.mxu0 0
        %1777 = vmatprep.subr.bf16.mxu0 0
        %1778 = vmatpush1.bf16.msra.mxu0 0
        %1779 = vmatprep.subr.bf16.mxu0 0
        %1780 = vmatpush1.bf16.msra.mxu0 0
        %1781 = vmatprep.subr.bf16.mxu0 0
        %1782 = vmatpush1.bf16.msra.mxu0 0
        %1783 = vmatprep.subr.bf16.mxu0 0
        %1784 = vmatpush1.bf16.msra.mxu0 0
        %1785 = vmatprep.subr.bf16.mxu0 0
        %1786 = vmatpush1.bf16.msra.mxu0 0
        %1787 = vmatprep.subr.bf16.mxu0 0
        %1788 = vmatpush1.bf16.msra.mxu0 0
        %1789 = vmatprep.subr.bf16.mxu0 0
        %1790 = vmatpush1.bf16.msra.mxu0 0
        %1791 = vmatprep.subr.bf16.mxu0 0
        %1792 = vmatpush1.bf16.msra.mxu0 0
        %1793 = vmatprep.subr.bf16.mxu0 0
        %1794 = vmatpush1.bf16.msra.mxu0 0
        %1795 = vmatprep.subr.bf16.mxu0 0
        %1796 = vmatpush1.bf16.msra.mxu0 0
        %1797 = vmatprep.subr.bf16.mxu0 0
        %1798 = vmatpush1.bf16.msra.mxu0 0
        %1799 = vmatprep.mubr.bf16.mxu0 0
        %1800 = vmatmul.mubr.bf16.gmra.mrb[0].mxu0 %v1761
        %v1801 = vpop.f32.mrb[0].mxu0
        %v1802 = vadd.f32 0.0, %v1801
        %v1803 = vpop.f32.mrb[0].mxu0
        %v1804 = vpop.f32.mrb[0].mxu0
        %v1805 = vpop.f32.mrb[0].mxu0
        %1806 = vdwg.mxu0
        %v1808 = vsel %vm1515, %v1753, 0
        %v1811 = vsel %vm1763, %v1757, 0
        %1813 = vmatprep.subr.bf16.mxu0 0
        %1814 = vmatpush1.bf16.msra.mxu0 %v1811
        %1815 = vmatprep.subr.bf16.mxu0 0
        %1816 = vmatpush1.bf16.msra.mxu0 0
        %1817 = vmatprep.subr.bf16.mxu0 0
        %1818 = vmatpush1.bf16.msra.mxu0 0
        %1819 = vmatprep.subr.bf16.mxu0 0
        %1820 = vmatpush1.bf16.msra.mxu0 0
        %1821 = vmatprep.subr.bf16.mxu0 0
        %1822 = vmatpush1.bf16.msra.mxu0 0
        %1823 = vmatprep.subr.bf16.mxu0 0
        %1824 = vmatpush1.bf16.msra.mxu0 0
        %1825 = vmatprep.subr.bf16.mxu0 0
        %1826 = vmatpush1.bf16.msra.mxu0 0
        %1827 = vmatprep.subr.bf16.mxu0 0
        %1828 = vmatpush1.bf16.msra.mxu0 0
        %1829 = vmatprep.subr.bf16.mxu0 0
        %1830 = vmatpush1.bf16.msra.mxu0 0
        %1831 = vmatprep.subr.bf16.mxu0 0
        %1832 = vmatpush1.bf16.msra.mxu0 0
        %1833 = vmatprep.subr.bf16.mxu0 0
        %1834 = vmatpush1.bf16.msra.mxu0 0
        %1835 = vmatprep.subr.bf16.mxu0 0
        %1836 = vmatpush1.bf16.msra.mxu0 0
        %1837 = vmatprep.subr.bf16.mxu0 0
        %1838 = vmatpush1.bf16.msra.mxu0 0
        %1839 = vmatprep.subr.bf16.mxu0 0
        %1840 = vmatpush1.bf16.msra.mxu0 0
        %1841 = vmatprep.subr.bf16.mxu0 0
        %1842 = vmatpush1.bf16.msra.mxu0 0
        %1843 = vmatprep.subr.bf16.mxu0 0
        %1844 = vmatpush1.bf16.msra.mxu0 0
        %1845 = vmatprep.mubr.bf16.mxu0 0
        %1846 = vmatmul.mubr.bf16.gmra.mrb[0].mxu0 %v1808
        %v1847 = vpop.f32.mrb[0].mxu0
        %v1848 = vadd.f32 0.0, %v1847
        %v1849 = vpop.f32.mrb[0].mxu0
        %v1850 = vpop.f32.mrb[0].mxu0
        %v1851 = vpop.f32.mrb[0].mxu0
        %1852 = vdwg.mxu0
        %v1854 = vsel %vm1515, %v1754, 0
        %v1857 = vsel %vm1763, %v1758, 0
        %1859 = vmatprep.subr.bf16.mxu0 0
        %1860 = vmatpush1.bf16.msra.mxu0 %v1857
        %1861 = vmatprep.subr.bf16.mxu0 0
        %1862 = vmatpush1.bf16.msra.mxu0 0
        %1863 = vmatprep.subr.bf16.mxu0 0
        %1864 = vmatpush1.bf16.msra.mxu0 0
        %1865 = vmatprep.subr.bf16.mxu0 0
        %1866 = vmatpush1.bf16.msra.mxu0 0
        %1867 = vmatprep.subr.bf16.mxu0 0
        %1868 = vmatpush1.bf16.msra.mxu0 0
        %1869 = vmatprep.subr.bf16.mxu0 0
        %1870 = vmatpush1.bf16.msra.mxu0 0
        %1871 = vmatprep.subr.bf16.mxu0 0
        %1872 = vmatpush1.bf16.msra.mxu0 0
        %1873 = vmatprep.subr.bf16.mxu0 0
        %1874 = vmatpush1.bf16.msra.mxu0 0
        %1875 = vmatprep.subr.bf16.mxu0 0
        %1876 = vmatpush1.bf16.msra.mxu0 0
        %1877 = vmatprep.subr.bf16.mxu0 0
        %1878 = vmatpush1.bf16.msra.mxu0 0
        %1879 = vmatprep.subr.bf16.mxu0 0
        %1880 = vmatpush1.bf16.msra.mxu0 0
        %1881 = vmatprep.subr.bf16.mxu0 0
        %1882 = vmatpush1.bf16.msra.mxu0 0
        %1883 = vmatprep.subr.bf16.mxu0 0
        %1884 = vmatpush1.bf16.msra.mxu0 0
        %1885 = vmatprep.subr.bf16.mxu0 0
        %1886 = vmatpush1.bf16.msra.mxu0 0
        %1887 = vmatprep.subr.bf16.mxu0 0
        %1888 = vmatpush1.bf16.msra.mxu0 0
        %1889 = vmatprep.subr.bf16.mxu0 0
        %1890 = vmatpush1.bf16.msra.mxu0 0
        %1891 = vmatprep.mubr.bf16.mxu0 0
        %1892 = vmatmul.mubr.bf16.gmra.mrb[0].mxu0 %v1854
        %v1893 = vpop.f32.mrb[0].mxu0
        %v1894 = vadd.f32 0.0, %v1893
        %v1895 = vpop.f32.mrb[0].mxu0
        %v1896 = vpop.f32.mrb[0].mxu0
        %v1897 = vpop.f32.mrb[0].mxu0
        %1898 = vdwg.mxu0
        %v1900 = vsel %vm1515, %v1755, 0
        %v1903 = vsel %vm1763, %v1759, 0
        %1905 = vmatprep.subr.bf16.mxu0 0
        %1906 = vmatpush1.bf16.msra.mxu0 %v1903
        %1907 = vmatprep.subr.bf16.mxu0 0
        %1908 = vmatpush1.bf16.msra.mxu0 0
        %1909 = vmatprep.subr.bf16.mxu0 0
        %1910 = vmatpush1.bf16.msra.mxu0 0
        %1911 = vmatprep.subr.bf16.mxu0 0
        %1912 = vmatpush1.bf16.msra.mxu0 0
        %1913 = vmatprep.subr.bf16.mxu0 0
        %1914 = vmatpush1.bf16.msra.mxu0 0
        %1915 = vmatprep.subr.bf16.mxu0 0
        %1916 = vmatpush1.bf16.msra.mxu0 0
        %1917 = vmatprep.subr.bf16.mxu0 0
        %1918 = vmatpush1.bf16.msra.mxu0 0
        %1919 = vmatprep.subr.bf16.mxu0 0
        %1920 = vmatpush1.bf16.msra.mxu0 0
        %1921 = vmatprep.subr.bf16.mxu0 0
        %1922 = vmatpush1.bf16.msra.mxu0 0
        %1923 = vmatprep.subr.bf16.mxu0 0
        %1924 = vmatpush1.bf16.msra.mxu0 0
        %1925 = vmatprep.subr.bf16.mxu0 0
        %1926 = vmatpush1.bf16.msra.mxu0 0
        %1927 = vmatprep.subr.bf16.mxu0 0
        %1928 = vmatpush1.bf16.msra.mxu0 0
        %1929 = vmatprep.subr.bf16.mxu0 0
        %1930 = vmatpush1.bf16.msra.mxu0 0
        %1931 = vmatprep.subr.bf16.mxu0 0
        %1932 = vmatpush1.bf16.msra.mxu0 0
        %1933 = vmatprep.subr.bf16.mxu0 0
        %1934 = vmatpush1.bf16.msra.mxu0 0
        %1935 = vmatprep.subr.bf16.mxu0 0
        %1936 = vmatpush1.bf16.msra.mxu0 0
        %1937 = vmatprep.mubr.bf16.mxu0 0
        %1938 = vmatmul.mubr.bf16.gmra.mrb[0].mxu0 %v1900
        %v1939 = vpop.f32.mrb[0].mxu0
        %v1940 = vadd.f32 0.0, %v1939
        %v1941 = vpop.f32.mrb[0].mxu0
        %v1942 = vpop.f32.mrb[0].mxu0
        %v1943 = vpop.f32.mrb[0].mxu0
        %1944 = vdwg.mxu0
        %v1945 = vpack.c.bf16 %v1802, %v1802
        %v1946 = vpack.c.bf16 %v1848, %v1848
        %v1947 = vpack.c.bf16 %v1894, %v1894
        %v1948 = vpack.c.bf16 %v1940, %v1940
        %v1949 = vld [vmem:[%s10] sm:$0xf]
        %v1950 = vld [vmem:[%s10 + $0x4] sm:$0xf]
        %v1951 = vld [vmem:[%s10 + $0x8] sm:$0xf]
        %v1952 = vld [vmem:[%s10 + $0xc] sm:$0xf]
        %v1954 = vsel %vm1515, %v1945, 0
        %v1957 = vsel %vm1763, %v1949, 0
        %1959 = vmatprep.subr.bf16.mxu0 0
        %1960 = vmatpush1.bf16.msra.mxu0 %v1957
        %1961 = vmatprep.subr.bf16.mxu0 0
        %1962 = vmatpush1.bf16.msra.mxu0 0
        %1963 = vmatprep.subr.bf16.mxu0 0
        %1964 = vmatpush1.bf16.msra.mxu0 0
        %1965 = vmatprep.subr.bf16.mxu0 0
        %1966 = vmatpush1.bf16.msra.mxu0 0
        %1967 = vmatprep.subr.bf16.mxu0 0
        %1968 = vmatpush1.bf16.msra.mxu0 0
        %1969 = vmatprep.subr.bf16.mxu0 0
        %1970 = vmatpush1.bf16.msra.mxu0 0
        %1971 = vmatprep.subr.bf16.mxu0 0
        %1972 = vmatpush1.bf16.msra.mxu0 0
        %1973 = vmatprep.subr.bf16.mxu0 0
        %1974 = vmatpush1.bf16.msra.mxu0 0
        %1975 = vmatprep.subr.bf16.mxu0 0
        %1976 = vmatpush1.bf16.msra.mxu0 0
        %1977 = vmatprep.subr.bf16.mxu0 0
        %1978 = vmatpush1.bf16.msra.mxu0 0
        %1979 = vmatprep.subr.bf16.mxu0 0
        %1980 = vmatpush1.bf16.msra.mxu0 0
        %1981 = vmatprep.subr.bf16.mxu0 0
        %1982 = vmatpush1.bf16.msra.mxu0 0
        %1983 = vmatprep.subr.bf16.mxu0 0
        %1984 = vmatpush1.bf16.msra.mxu0 0
        %1985 = vmatprep.subr.bf16.mxu0 0
        %1986 = vmatpush1.bf16.msra.mxu0 0
        %1987 = vmatprep.subr.bf16.mxu0 0
        %1988 = vmatpush1.bf16.msra.mxu0 0
        %1989 = vmatprep.subr.bf16.mxu0 0
        %1990 = vmatpush1.bf16.msra.mxu0 0
        %1991 = vmatprep.mubr.bf16.mxu0 0
        %1992 = vmatmul.mubr.bf16.gmra.mrb[0].mxu0 %v1954
        %v1993 = vpop.f32.mrb[0].mxu0
        %v1994 = vadd.f32 0.0, %v1993
        %v1995 = vpop.f32.mrb[0].mxu0
        %v1996 = vpop.f32.mrb[0].mxu0
        %v1997 = vpop.f32.mrb[0].mxu0
        %1998 = vdwg.mxu0
        %v2000 = vsel %vm1515, %v1946, 0
        %v2003 = vsel %vm1763, %v1950, 0
        %2005 = vmatprep.subr.bf16.mxu0 0
        %2006 = vmatpush1.bf16.msra.mxu0 %v2003
        %2007 = vmatprep.subr.bf16.mxu0 0
        %2008 = vmatpush1.bf16.msra.mxu0 0
        %2009 = vmatprep.subr.bf16.mxu0 0
        %2010 = vmatpush1.bf16.msra.mxu0 0
        %2011 = vmatprep.subr.bf16.mxu0 0
        %2012 = vmatpush1.bf16.msra.mxu0 0
        %2013 = vmatprep.subr.bf16.mxu0 0
        %2014 = vmatpush1.bf16.msra.mxu0 0
        %2015 = vmatprep.subr.bf16.mxu0 0
        %2016 = vmatpush1.bf16.msra.mxu0 0
        %2017 = vmatprep.subr.bf16.mxu0 0
        %2018 = vmatpush1.bf16.msra.mxu0 0
        %2019 = vmatprep.subr.bf16.mxu0 0
        %2020 = vmatpush1.bf16.msra.mxu0 0
        %2021 = vmatprep.subr.bf16.mxu0 0
        %2022 = vmatpush1.bf16.msra.mxu0 0
        %2023 = vmatprep.subr.bf16.mxu0 0
        %2024 = vmatpush1.bf16.msra.mxu0 0
        %2025 = vmatprep.subr.bf16.mxu0 0
        %2026 = vmatpush1.bf16.msra.mxu0 0
        %2027 = vmatprep.subr.bf16.mxu0 0
        %2028 = vmatpush1.bf16.msra.mxu0 0
        %2029 = vmatprep.subr.bf16.mxu0 0
        %2030 = vmatpush1.bf16.msra.mxu0 0
        %2031 = vmatprep.subr.bf16.mxu0 0
        %2032 = vmatpush1.bf16.msra.mxu0 0
        %2033 = vmatprep.subr.bf16.mxu0 0
        %2034 = vmatpush1.bf16.msra.mxu0 0
        %2035 = vmatprep.subr.bf16.mxu0 0
        %2036 = vmatpush1.bf16.msra.mxu0 0
        %2037 = vmatprep.mubr.bf16.mxu0 0
        %2038 = vmatmul.mubr.bf16.gmra.mrb[0].mxu0 %v2000
        %v2039 = vpop.f32.mrb[0].mxu0
        %v2040 = vadd.f32 0.0, %v2039
        %v2041 = vpop.f32.mrb[0].mxu0
        %v2042 = vpop.f32.mrb[0].mxu0
        %v2043 = vpop.f32.mrb[0].mxu0
        %2044 = vdwg.mxu0
        %v2046 = vsel %vm1515, %v1947, 0
        %v2049 = vsel %vm1763, %v1951, 0
        %2051 = vmatprep.subr.bf16.mxu0 0
        %2052 = vmatpush1.bf16.msra.mxu0 %v2049
        %2053 = vmatprep.subr.bf16.mxu0 0
        %2054 = vmatpush1.bf16.msra.mxu0 0
        %2055 = vmatprep.subr.bf16.mxu0 0
        %2056 = vmatpush1.bf16.msra.mxu0 0
        %2057 = vmatprep.subr.bf16.mxu0 0
        %2058 = vmatpush1.bf16.msra.mxu0 0
        %2059 = vmatprep.subr.bf16.mxu0 0
        %2060 = vmatpush1.bf16.msra.mxu0 0
        %2061 = vmatprep.subr.bf16.mxu0 0
        %2062 = vmatpush1.bf16.msra.mxu0 0
        %2063 = vmatprep.subr.bf16.mxu0 0
        %2064 = vmatpush1.bf16.msra.mxu0 0
        %2065 = vmatprep.subr.bf16.mxu0 0
        %2066 = vmatpush1.bf16.msra.mxu0 0
        %2067 = vmatprep.subr.bf16.mxu0 0
        %2068 = vmatpush1.bf16.msra.mxu0 0
        %2069 = vmatprep.subr.bf16.mxu0 0
        %2070 = vmatpush1.bf16.msra.mxu0 0
        %2071 = vmatprep.subr.bf16.mxu0 0
        %2072 = vmatpush1.bf16.msra.mxu0 0
        %2073 = vmatprep.subr.bf16.mxu0 0
        %2074 = vmatpush1.bf16.msra.mxu0 0
        %2075 = vmatprep.subr.bf16.mxu0 0
        %2076 = vmatpush1.bf16.msra.mxu0 0
        %2077 = vmatprep.subr.bf16.mxu0 0
        %2078 = vmatpush1.bf16.msra.mxu0 0
        %2079 = vmatprep.subr.bf16.mxu0 0
        %2080 = vmatpush1.bf16.msra.mxu0 0
        %2081 = vmatprep.subr.bf16.mxu0 0
        %2082 = vmatpush1.bf16.msra.mxu0 0
        %2083 = vmatprep.mubr.bf16.mxu0 0
        %2084 = vmatmul.mubr.bf16.gmra.mrb[0].mxu0 %v2046
        %v2085 = vpop.f32.mrb[0].mxu0
        %v2086 = vadd.f32 0.0, %v2085
        %v2087 = vpop.f32.mrb[0].mxu0
        %v2088 = vpop.f32.mrb[0].mxu0
        %v2089 = vpop.f32.mrb[0].mxu0
        %2090 = vdwg.mxu0
        %v2092 = vsel %vm1515, %v1948, 0
        %v2095 = vsel %vm1763, %v1952, 0
        %2097 = vmatprep.subr.bf16.mxu0 0
        %2098 = vmatpush1.bf16.msra.mxu0 %v2095
        %2099 = vmatprep.subr.bf16.mxu0 0
        %2100 = vmatpush1.bf16.msra.mxu0 0
        %2101 = vmatprep.subr.bf16.mxu0 0
        %2102 = vmatpush1.bf16.msra.mxu0 0
        %2103 = vmatprep.subr.bf16.mxu0 0
        %2104 = vmatpush1.bf16.msra.mxu0 0
        %2105 = vmatprep.subr.bf16.mxu0 0
        %2106 = vmatpush1.bf16.msra.mxu0 0
        %2107 = vmatprep.subr.bf16.mxu0 0
        %2108 = vmatpush1.bf16.msra.mxu0 0
        %2109 = vmatprep.subr.bf16.mxu0 0
        %2110 = vmatpush1.bf16.msra.mxu0 0
        %2111 = vmatprep.subr.bf16.mxu0 0
        %2112 = vmatpush1.bf16.msra.mxu0 0
        %2113 = vmatprep.subr.bf16.mxu0 0
        %2114 = vmatpush1.bf16.msra.mxu0 0
        %2115 = vmatprep.subr.bf16.mxu0 0
        %2116 = vmatpush1.bf16.msra.mxu0 0
        %2117 = vmatprep.subr.bf16.mxu0 0
        %2118 = vmatpush1.bf16.msra.mxu0 0
        %2119 = vmatprep.subr.bf16.mxu0 0
        %2120 = vmatpush1.bf16.msra.mxu0 0
        %2121 = vmatprep.subr.bf16.mxu0 0
        %2122 = vmatpush1.bf16.msra.mxu0 0
        %2123 = vmatprep.subr.bf16.mxu0 0
        %2124 = vmatpush1.bf16.msra.mxu0 0
        %2125 = vmatprep.subr.bf16.mxu0 0
        %2126 = vmatpush1.bf16.msra.mxu0 0
        %2127 = vmatprep.subr.bf16.mxu0 0
        %2128 = vmatpush1.bf16.msra.mxu0 0
        %2129 = vmatprep.mubr.bf16.mxu0 0
        %2130 = vmatmul.mubr.bf16.gmra.mrb[0].mxu0 %v2092
        %v2131 = vpop.f32.mrb[0].mxu0
        %v2132 = vadd.f32 0.0, %v2131
        %v2133 = vpop.f32.mrb[0].mxu0
        %v2134 = vpop.f32.mrb[0].mxu0
        %v2135 = vpop.f32.mrb[0].mxu0
        %2136 = vdwg.mxu0
        %v2137 = vsel %vm803, %v1994, 0.0
        %v2138 = vsel %vm803, %v2040, 0.0
        %v2139 = vadd.f32 %v2137, %v2138
        %v2140 = vsel %vm803, %v2086, 0.0
        %v2141 = vadd.f32 %v2139, %v2140
        %v2142 = vsel %vm803, %v2132, 0.0
        %v2143 = vadd.f32 %v2141, %v2142
        %v2144 = vld [vmem:[%s11] sm:$0x1]
        %v2146 = vlaneseq
        %v2147 = vshrl.u32 %v2146, 7
        %v2148 = vsub.s32 0, %v2147
        %v2149 = vrot.slane %v2144, %v2148
        %v2151 = vadd.f32 %v2143, %v2149
        %v2152 = vadd.f32 %v739, %v2151
        %v2153 = vld [vmem:[%s12] sm:$0x1]
        %v2154 = vld [vmem:[%s13] sm:$0x1]
        %v2155 = vsel %vm803, %v2152, 0.0
        %2156 = vadd.xlane.f32.xlu0 %v2155
        %v2157 = vpop.xlane.xlu0 %2156
        %v2158 = vrcp.pop 32.0
        %v2159 = vmul.f32 %v2157, %v2158
        %v2160 = vsub.f32 %v2152, %v2159
        %v2161 = vmul.f32 %v2160, %v2160
        %v2162 = vsel %vm803, %v2161, 0.0
        %2163 = vadd.xlane.f32.xlu0 %v2162
        %v2164 = vpop.xlane.xlu0 %2163
        %v2165 = vmul.f32 %v2164, %v2158
        %v2166 = vadd.f32 %v2165, 1e-05
        %v2167 = vrsqrt.pop %v2166
        %v2169 = vlaneseq
        %v2170 = vshrl.u32 %v2169, 7
        %v2171 = vsub.s32 0, %v2170
        %v2172 = vrot.slane %v2153, %v2171
        %v2174 = vmul.f32 %v2167, %v2172
        %v2175 = vmul.f32 %v2160, %v2174
        %v2177 = vlaneseq
        %v2178 = vshrl.u32 %v2177, 7
        %v2179 = vsub.s32 0, %v2178
        %v2180 = vrot.slane %v2154, %v2179
        %v2182 = vadd.f32 %v2175, %v2180
        %v2183 = vpack.c.bf16 %v2182, %v2182
        %v2184 = vld [vmem:[%s14] sm:$0xf]
        %v2185 = vld [vmem:[%s14 + $0x4] sm:$0xf]
        %v2186 = vld [vmem:[%s14 + $0x8] sm:$0xf]
        %v2187 = vld [vmem:[%s14 + $0xc] sm:$0xf]
        %v2188 = vld [vmem:[%s15] sm:$0x1]
        %v2190 = vlaneseq
        %v2191 = vshrl.u32 %v2190, 7
        %v2192 = vsub.s32 0, %v2191
        %v2193 = vrot.slane %v2188, %v2192
        %v2199 = vunpack.c.l.b16 %v2184
        %v2200 = vunpack.c.l.b16 %v2185
        %v2201 = vunpack.c.l.b16 %v2186
        %v2202 = vunpack.c.l.b16 %v2187
        %v2203 = vpack.c.b16 %v2200, %v2199
        %v2204 = vpack.c.b16 %v2202, %v2201
        %v2208 = vsel %vm803, %v2183, 0
        %2210 = vmatprep.subr.bf16.mxu0 0
        %2211 = vmatpush1.bf16.msra.mxu0 %v2203
        %2212 = vmatprep.subr.bf16.mxu0 0
        %2213 = vmatpush1.bf16.msra.mxu0 %v2204
        %2214 = vmatprep.subr.bf16.mxu0 0
        %2215 = vmatpush1.bf16.msra.mxu0 0
        %2216 = vmatprep.subr.bf16.mxu0 0
        %2217 = vmatpush1.bf16.msra.mxu0 0
        %2218 = vmatprep.subr.bf16.mxu0 0
        %2219 = vmatpush1.bf16.msra.mxu0 0
        %2220 = vmatprep.subr.bf16.mxu0 0
        %2221 = vmatpush1.bf16.msra.mxu0 0
        %2222 = vmatprep.subr.bf16.mxu0 0
        %2223 = vmatpush1.bf16.msra.mxu0 0
        %2224 = vmatprep.subr.bf16.mxu0 0
        %2225 = vmatpush1.bf16.msra.mxu0 0
        %2226 = vmatprep.subr.bf16.mxu0 0
        %2227 = vmatpush1.bf16.msra.mxu0 0
        %2228 = vmatprep.subr.bf16.mxu0 0
        %2229 = vmatpush1.bf16.msra.mxu0 0
        %2230 = vmatprep.subr.bf16.mxu0 0
        %2231 = vmatpush1.bf16.msra.mxu0 0
        %2232 = vmatprep.subr.bf16.mxu0 0
        %2233 = vmatpush1.bf16.msra.mxu0 0
        %2234 = vmatprep.subr.bf16.mxu0 0
        %2235 = vmatpush1.bf16.msra.mxu0 0
        %2236 = vmatprep.subr.bf16.mxu0 0
        %2237 = vmatpush1.bf16.msra.mxu0 0
        %2238 = vmatprep.subr.bf16.mxu0 0
        %2239 = vmatpush1.bf16.msra.mxu0 0
        %2240 = vmatprep.subr.bf16.mxu0 0
        %2241 = vmatpush1.bf16.msra.mxu0 0
        %2242 = vmatprep.mubr.bf16.mxu0 0
        %2243 = vmatmul.mubr.bf16.gmra.mrb[0].mxu0 %v2208
        %v2244 = vpop.f32.mrb[0].mxu0
        %v2245 = vadd.f32 %v2193, %v2244
        %v2246 = vpop.f32.mrb[0].mxu0
        %v2247 = vpop.f32.mrb[0].mxu0
        %v2248 = vpop.f32.mrb[0].mxu0
        %2249 = vdwg.mxu0
        %v2250 = vmax.f32 %v2245, 0.0
        %v2251 = vpack.c.bf16 %v2250, %v2250
        %v2252 = vld [vmem:[%s16] sm:$0xf]
        %v2253 = vld [vmem:[%s16 + $0x4] sm:$0xf]
        %v2254 = vld [vmem:[%s16 + $0x8] sm:$0xf]
        %v2255 = vld [vmem:[%s16 + $0xc] sm:$0xf]
        %v2256 = vld [vmem:[%s17] sm:$0x1]
        %v2258 = vlaneseq
        %v2259 = vshrl.u32 %v2258, 7
        %v2260 = vsub.s32 0, %v2259
        %v2261 = vrot.slane %v2256, %v2260
        %v2267 = vunpack.c.l.b16 %v2252
        %v2268 = vunpack.c.l.b16 %v2253
        %v2269 = vunpack.c.l.b16 %v2254
        %v2270 = vunpack.c.l.b16 %v2255
        %v2271 = vpack.c.b16 %v2268, %v2267
        %v2272 = vpack.c.b16 %v2270, %v2269
        %v2276 = vsel %vm803, %v2251, 0
        %2278 = vmatprep.subr.bf16.mxu0 0
        %2279 = vmatpush1.bf16.msra.mxu0 %v2271
        %2280 = vmatprep.subr.bf16.mxu0 0
        %2281 = vmatpush1.bf16.msra.mxu0 %v2272
        %2282 = vmatprep.subr.bf16.mxu0 0
        %2283 = vmatpush1.bf16.msra.mxu0 0
        %2284 = vmatprep.subr.bf16.mxu0 0
        %2285 = vmatpush1.bf16.msra.mxu0 0
        %2286 = vmatprep.subr.bf16.mxu0 0
        %2287 = vmatpush1.bf16.msra.mxu0 0
        %2288 = vmatprep.subr.bf16.mxu0 0
        %2289 = vmatpush1.bf16.msra.mxu0 0
        %2290 = vmatprep.subr.bf16.mxu0 0
        %2291 = vmatpush1.bf16.msra.mxu0 0
        %2292 = vmatprep.subr.bf16.mxu0 0
        %2293 = vmatpush1.bf16.msra.mxu0 0
        %2294 = vmatprep.subr.bf16.mxu0 0
        %2295 = vmatpush1.bf16.msra.mxu0 0
        %2296 = vmatprep.subr.bf16.mxu0 0
        %2297 = vmatpush1.bf16.msra.mxu0 0
        %2298 = vmatprep.subr.bf16.mxu0 0
        %2299 = vmatpush1.bf16.msra.mxu0 0
        %2300 = vmatprep.subr.bf16.mxu0 0
        %2301 = vmatpush1.bf16.msra.mxu0 0
        %2302 = vmatprep.subr.bf16.mxu0 0
        %2303 = vmatpush1.bf16.msra.mxu0 0
        %2304 = vmatprep.subr.bf16.mxu0 0
        %2305 = vmatpush1.bf16.msra.mxu0 0
        %2306 = vmatprep.subr.bf16.mxu0 0
        %2307 = vmatpush1.bf16.msra.mxu0 0
        %2308 = vmatprep.subr.bf16.mxu0 0
        %2309 = vmatpush1.bf16.msra.mxu0 0
        %2310 = vmatprep.mubr.bf16.mxu0 0
        %2311 = vmatmul.mubr.bf16.gmra.mrb[0].mxu0 %v2276
        %v2312 = vpop.f32.mrb[0].mxu0
        %v2313 = vadd.f32 %v2261, %v2312
        %v2314 = vpop.f32.mrb[0].mxu0
        %v2315 = vpop.f32.mrb[0].mxu0
        %v2316 = vpop.f32.mrb[0].mxu0
        %2317 = vdwg.mxu0
        %v2318 = vadd.f32 %v2182, %v2313
        %v2319 = vld [vmem:[%s18] sm:$0x1]
        %v2320 = vld [vmem:[%s19] sm:$0x1]
        %v2321 = vsel %vm803, %v2318, 0.0
        %2322 = vadd.xlane.f32.xlu0 %v2321
        %v2323 = vpop.xlane.xlu0 %2322
        %v2324 = vmul.f32 %v2323, %v2158
        %v2325 = vsub.f32 %v2318, %v2324
        %v2326 = vmul.f32 %v2325, %v2325
        %v2327 = vsel %vm803, %v2326, 0.0
        %2328 = vadd.xlane.f32.xlu0 %v2327
        %v2329 = vpop.xlane.xlu0 %2328
        %v2330 = vmul.f32 %v2329, %v2158
        %v2331 = vadd.f32 %v2330, 1e-05
        %v2332 = vrsqrt.pop %v2331
        %v2334 = vlaneseq
        %v2335 = vshrl.u32 %v2334, 7
        %v2336 = vsub.s32 0, %v2335
        %v2337 = vrot.slane %v2319, %v2336
        %v2339 = vmul.f32 %v2332, %v2337
        %v2340 = vmul.f32 %v2325, %v2339
        %v2342 = vlaneseq
        %v2343 = vshrl.u32 %v2342, 7
        %v2344 = vsub.s32 0, %v2343
        %v2345 = vrot.slane %v2320, %v2344
        %v2347 = vadd.f32 %v2340, %v2345
        %v2348 = vpack.c.bf16 %v2347, %v2347
        %s2349 = scalar_lea.vmem %s4, 64
        %v2350 = vld [vmem:[%s2349] sm:$0xf]
        %v2351 = vld [vmem:[%s2349 + $0x4] sm:$0xf]
        %v2352 = vld [vmem:[%s2349 + $0x8] sm:$0xf]
        %v2353 = vld [vmem:[%s2349 + $0xc] sm:$0xf]
        %v2354 = vld [vmem:[%s2349 + $0x10] sm:$0xf]
        %v2355 = vld [vmem:[%s2349 + $0x14] sm:$0xf]
        %v2356 = vld [vmem:[%s2349 + $0x18] sm:$0xf]
        %v2357 = vld [vmem:[%s2349 + $0x1c] sm:$0xf]
        %v2358 = vld [vmem:[%s2349 + $0x20] sm:$0xf]
        %v2359 = vld [vmem:[%s2349 + $0x24] sm:$0xf]
        %v2360 = vld [vmem:[%s2349 + $0x28] sm:$0xf]
        %v2361 = vld [vmem:[%s2349 + $0x2c] sm:$0xf]
        %v2362 = vld [vmem:[%s2349 + $0x30] sm:$0xf]
        %v2363 = vld [vmem:[%s2349 + $0x34] sm:$0xf]
        %v2364 = vld [vmem:[%s2349 + $0x38] sm:$0xf]
        %v2365 = vld [vmem:[%s2349 + $0x3c] sm:$0xf]
        %s2366 = scalar_lea.vmem %s7, 4
        %v2367 = vld [vmem:[%s2366] sm:$0x1]
        %v2368 = vld [vmem:[%s2366 + $0x1] sm:$0x1]
        %v2369 = vld [vmem:[%s2366 + $0x2] sm:$0x1]
        %v2370 = vld [vmem:[%s2366 + $0x3] sm:$0x1]
        %v2375 = vlaneseq
        %v2376 = vshrl.u32 %v2375, 7
        %v2377 = vsub.s32 0, %v2376
        %v2378 = vrot.slane %v2367, %v2377
        %v2379 = vlaneseq
        %v2380 = vshrl.u32 %v2379, 7
        %v2381 = vsub.s32 0, %v2380
        %v2382 = vrot.slane %v2368, %v2381
        %v2383 = vlaneseq
        %v2384 = vshrl.u32 %v2383, 7
        %v2385 = vsub.s32 0, %v2384
        %v2386 = vrot.slane %v2369, %v2385
        %v2387 = vlaneseq
        %v2388 = vshrl.u32 %v2387, 7
        %v2389 = vsub.s32 0, %v2388
        %v2390 = vrot.slane %v2370, %v2389
        %v2399 = vunpack.c.l.b16 %v2350
        %v2400 = vunpack.c.l.b16 %v2351
        %v2401 = vunpack.c.l.b16 %v2352
        %v2402 = vunpack.c.l.b16 %v2353
        %v2403 = vpack.c.b16 %v2400, %v2399
        %v2404 = vpack.c.b16 %v2402, %v2401
        %v2408 = vsel %vm803, %v2348, 0
        %2410 = vmatprep.subr.bf16.mxu0 0
        %2411 = vmatpush1.bf16.msra.mxu0 %v2403
        %2412 = vmatprep.subr.bf16.mxu0 0
        %2413 = vmatpush1.bf16.msra.mxu0 %v2404
        %2414 = vmatprep.subr.bf16.mxu0 0
        %2415 = vmatpush1.bf16.msra.mxu0 0
        %2416 = vmatprep.subr.bf16.mxu0 0
        %2417 = vmatpush1.bf16.msra.mxu0 0
        %2418 = vmatprep.subr.bf16.mxu0 0
        %2419 = vmatpush1.bf16.msra.mxu0 0
        %2420 = vmatprep.subr.bf16.mxu0 0
        %2421 = vmatpush1.bf16.msra.mxu0 0
        %2422 = vmatprep.subr.bf16.mxu0 0
        %2423 = vmatpush1.bf16.msra.mxu0 0
        %2424 = vmatprep.subr.bf16.mxu0 0
        %2425 = vmatpush1.bf16.msra.mxu0 0
        %2426 = vmatprep.subr.bf16.mxu0 0
        %2427 = vmatpush1.bf16.msra.mxu0 0
        %2428 = vmatprep.subr.bf16.mxu0 0
        %2429 = vmatpush1.bf16.msra.mxu0 0
        %2430 = vmatprep.subr.bf16.mxu0 0
        %2431 = vmatpush1.bf16.msra.mxu0 0
        %2432 = vmatprep.subr.bf16.mxu0 0
        %2433 = vmatpush1.bf16.msra.mxu0 0
        %2434 = vmatprep.subr.bf16.mxu0 0
        %2435 = vmatpush1.bf16.msra.mxu0 0
        %2436 = vmatprep.subr.bf16.mxu0 0
        %2437 = vmatpush1.bf16.msra.mxu0 0
        %2438 = vmatprep.subr.bf16.mxu0 0
        %2439 = vmatpush1.bf16.msra.mxu0 0
        %2440 = vmatprep.subr.bf16.mxu0 0
        %2441 = vmatpush1.bf16.msra.mxu0 0
        %2442 = vmatprep.mubr.bf16.mxu0 0
        %2443 = vmatmul.mubr.bf16.gmra.mrb[0].mxu0 %v2408
        %v2444 = vpop.f32.mrb[0].mxu0
        %v2445 = vadd.f32 %v2378, %v2444
        %v2446 = vpop.f32.mrb[0].mxu0
        %v2447 = vpop.f32.mrb[0].mxu0
        %v2448 = vpop.f32.mrb[0].mxu0
        %2449 = vdwg.mxu0
        %v2454 = vunpack.c.l.b16 %v2354
        %v2455 = vunpack.c.l.b16 %v2355
        %v2456 = vunpack.c.l.b16 %v2356
        %v2457 = vunpack.c.l.b16 %v2357
        %v2458 = vpack.c.b16 %v2455, %v2454
        %v2459 = vpack.c.b16 %v2457, %v2456
        %2462 = vmatprep.subr.bf16.mxu0 0
        %2463 = vmatpush1.bf16.msra.mxu0 %v2458
        %2464 = vmatprep.subr.bf16.mxu0 0
        %2465 = vmatpush1.bf16.msra.mxu0 %v2459
        %2466 = vmatprep.subr.bf16.mxu0 0
        %2467 = vmatpush1.bf16.msra.mxu0 0
        %2468 = vmatprep.subr.bf16.mxu0 0
        %2469 = vmatpush1.bf16.msra.mxu0 0
        %2470 = vmatprep.subr.bf16.mxu0 0
        %2471 = vmatpush1.bf16.msra.mxu0 0
        %2472 = vmatprep.subr.bf16.mxu0 0
        %2473 = vmatpush1.bf16.msra.mxu0 0
        %2474 = vmatprep.subr.bf16.mxu0 0
        %2475 = vmatpush1.bf16.msra.mxu0 0
        %2476 = vmatprep.subr.bf16.mxu0 0
        %2477 = vmatpush1.bf16.msra.mxu0 0
        %2478 = vmatprep.subr.bf16.mxu0 0
        %2479 = vmatpush1.bf16.msra.mxu0 0
        %2480 = vmatprep.subr.bf16.mxu0 0
        %2481 = vmatpush1.bf16.msra.mxu0 0
        %2482 = vmatprep.subr.bf16.mxu0 0
        %2483 = vmatpush1.bf16.msra.mxu0 0
        %2484 = vmatprep.subr.bf16.mxu0 0
        %2485 = vmatpush1.bf16.msra.mxu0 0
        %2486 = vmatprep.subr.bf16.mxu0 0
        %2487 = vmatpush1.bf16.msra.mxu0 0
        %2488 = vmatprep.subr.bf16.mxu0 0
        %2489 = vmatpush1.bf16.msra.mxu0 0
        %2490 = vmatprep.subr.bf16.mxu0 0
        %2491 = vmatpush1.bf16.msra.mxu0 0
        %2492 = vmatprep.subr.bf16.mxu0 0
        %2493 = vmatpush1.bf16.msra.mxu0 0
        %2494 = vmatprep.mubr.bf16.mxu0 0
        %2495 = vmatmul.mubr.bf16.gmra.mrb[0].mxu0 %v2408
        %v2496 = vpop.f32.mrb[0].mxu0
        %v2497 = vadd.f32 %v2382, %v2496
        %v2498 = vpop.f32.mrb[0].mxu0
        %v2499 = vpop.f32.mrb[0].mxu0
        %v2500 = vpop.f32.mrb[0].mxu0
        %2501 = vdwg.mxu0
        %v2506 = vunpack.c.l.b16 %v2358
        %v2507 = vunpack.c.l.b16 %v2359
        %v2508 = vunpack.c.l.b16 %v2360
        %v2509 = vunpack.c.l.b16 %v2361
        %v2510 = vpack.c.b16 %v2507, %v2506
        %v2511 = vpack.c.b16 %v2509, %v2508
        %2514 = vmatprep.subr.bf16.mxu0 0
        %2515 = vmatpush1.bf16.msra.mxu0 %v2510
        %2516 = vmatprep.subr.bf16.mxu0 0
        %2517 = vmatpush1.bf16.msra.mxu0 %v2511
        %2518 = vmatprep.subr.bf16.mxu0 0
        %2519 = vmatpush1.bf16.msra.mxu0 0
        %2520 = vmatprep.subr.bf16.mxu0 0
        %2521 = vmatpush1.bf16.msra.mxu0 0
        %2522 = vmatprep.subr.bf16.mxu0 0
        %2523 = vmatpush1.bf16.msra.mxu0 0
        %2524 = vmatprep.subr.bf16.mxu0 0
        %2525 = vmatpush1.bf16.msra.mxu0 0
        %2526 = vmatprep.subr.bf16.mxu0 0
        %2527 = vmatpush1.bf16.msra.mxu0 0
        %2528 = vmatprep.subr.bf16.mxu0 0
        %2529 = vmatpush1.bf16.msra.mxu0 0
        %2530 = vmatprep.subr.bf16.mxu0 0
        %2531 = vmatpush1.bf16.msra.mxu0 0
        %2532 = vmatprep.subr.bf16.mxu0 0
        %2533 = vmatpush1.bf16.msra.mxu0 0
        %2534 = vmatprep.subr.bf16.mxu0 0
        %2535 = vmatpush1.bf16.msra.mxu0 0
        %2536 = vmatprep.subr.bf16.mxu0 0
        %2537 = vmatpush1.bf16.msra.mxu0 0
        %2538 = vmatprep.subr.bf16.mxu0 0
        %2539 = vmatpush1.bf16.msra.mxu0 0
        %2540 = vmatprep.subr.bf16.mxu0 0
        %2541 = vmatpush1.bf16.msra.mxu0 0
        %2542 = vmatprep.subr.bf16.mxu0 0
        %2543 = vmatpush1.bf16.msra.mxu0 0
        %2544 = vmatprep.subr.bf16.mxu0 0
        %2545 = vmatpush1.bf16.msra.mxu0 0
        %2546 = vmatprep.mubr.bf16.mxu0 0
        %2547 = vmatmul.mubr.bf16.gmra.mrb[0].mxu0 %v2408
        %v2548 = vpop.f32.mrb[0].mxu0
        %v2549 = vadd.f32 %v2386, %v2548
        %v2550 = vpop.f32.mrb[0].mxu0
        %v2551 = vpop.f32.mrb[0].mxu0
        %v2552 = vpop.f32.mrb[0].mxu0
        %2553 = vdwg.mxu0
        %v2558 = vunpack.c.l.b16 %v2362
        %v2559 = vunpack.c.l.b16 %v2363
        %v2560 = vunpack.c.l.b16 %v2364
        %v2561 = vunpack.c.l.b16 %v2365
        %v2562 = vpack.c.b16 %v2559, %v2558
        %v2563 = vpack.c.b16 %v2561, %v2560
        %2566 = vmatprep.subr.bf16.mxu0 0
        %2567 = vmatpush1.bf16.msra.mxu0 %v2562
        %2568 = vmatprep.subr.bf16.mxu0 0
        %2569 = vmatpush1.bf16.msra.mxu0 %v2563
        %2570 = vmatprep.subr.bf16.mxu0 0
        %2571 = vmatpush1.bf16.msra.mxu0 0
        %2572 = vmatprep.subr.bf16.mxu0 0
        %2573 = vmatpush1.bf16.msra.mxu0 0
        %2574 = vmatprep.subr.bf16.mxu0 0
        %2575 = vmatpush1.bf16.msra.mxu0 0
        %2576 = vmatprep.subr.bf16.mxu0 0
        %2577 = vmatpush1.bf16.msra.mxu0 0
        %2578 = vmatprep.subr.bf16.mxu0 0
        %2579 = vmatpush1.bf16.msra.mxu0 0
        %2580 = vmatprep.subr.bf16.mxu0 0
        %2581 = vmatpush1.bf16.msra.mxu0 0
        %2582 = vmatprep.subr.bf16.mxu0 0
        %2583 = vmatpush1.bf16.msra.mxu0 0
        %2584 = vmatprep.subr.bf16.mxu0 0
        %2585 = vmatpush1.bf16.msra.mxu0 0
        %2586 = vmatprep.subr.bf16.mxu0 0
        %2587 = vmatpush1.bf16.msra.mxu0 0
        %2588 = vmatprep.subr.bf16.mxu0 0
        %2589 = vmatpush1.bf16.msra.mxu0 0
        %2590 = vmatprep.subr.bf16.mxu0 0
        %2591 = vmatpush1.bf16.msra.mxu0 0
        %2592 = vmatprep.subr.bf16.mxu0 0
        %2593 = vmatpush1.bf16.msra.mxu0 0
        %2594 = vmatprep.subr.bf16.mxu0 0
        %2595 = vmatpush1.bf16.msra.mxu0 0
        %2596 = vmatprep.subr.bf16.mxu0 0
        %2597 = vmatpush1.bf16.msra.mxu0 0
        %2598 = vmatprep.mubr.bf16.mxu0 0
        %2599 = vmatmul.mubr.bf16.gmra.mrb[0].mxu0 %v2408
        %v2600 = vpop.f32.mrb[0].mxu0
        %v2601 = vadd.f32 %v2390, %v2600
        %v2602 = vpop.f32.mrb[0].mxu0
        %v2603 = vpop.f32.mrb[0].mxu0
        %v2604 = vpop.f32.mrb[0].mxu0
        %2605 = vdwg.mxu0
        %s2606 = scalar_lea.vmem %s5, 64
        %v2607 = vld [vmem:[%s2606] sm:$0xf]
        %v2608 = vld [vmem:[%s2606 + $0x4] sm:$0xf]
        %v2609 = vld [vmem:[%s2606 + $0x8] sm:$0xf]
        %v2610 = vld [vmem:[%s2606 + $0xc] sm:$0xf]
        %v2611 = vld [vmem:[%s2606 + $0x10] sm:$0xf]
        %v2612 = vld [vmem:[%s2606 + $0x14] sm:$0xf]
        %v2613 = vld [vmem:[%s2606 + $0x18] sm:$0xf]
        %v2614 = vld [vmem:[%s2606 + $0x1c] sm:$0xf]
        %v2615 = vld [vmem:[%s2606 + $0x20] sm:$0xf]
        %v2616 = vld [vmem:[%s2606 + $0x24] sm:$0xf]
        %v2617 = vld [vmem:[%s2606 + $0x28] sm:$0xf]
        %v2618 = vld [vmem:[%s2606 + $0x2c] sm:$0xf]
        %v2619 = vld [vmem:[%s2606 + $0x30] sm:$0xf]
        %v2620 = vld [vmem:[%s2606 + $0x34] sm:$0xf]
        %v2621 = vld [vmem:[%s2606 + $0x38] sm:$0xf]
        %v2622 = vld [vmem:[%s2606 + $0x3c] sm:$0xf]
        %s2623 = scalar_lea.vmem %s8, 4
        %v2624 = vld [vmem:[%s2623] sm:$0x1]
        %v2625 = vld [vmem:[%s2623 + $0x1] sm:$0x1]
        %v2626 = vld [vmem:[%s2623 + $0x2] sm:$0x1]
        %v2627 = vld [vmem:[%s2623 + $0x3] sm:$0x1]
        %v2632 = vlaneseq
        %v2633 = vshrl.u32 %v2632, 7
        %v2634 = vsub.s32 0, %v2633
        %v2635 = vrot.slane %v2624, %v2634
        %v2636 = vlaneseq
        %v2637 = vshrl.u32 %v2636, 7
        %v2638 = vsub.s32 0, %v2637
        %v2639 = vrot.slane %v2625, %v2638
        %v2640 = vlaneseq
        %v2641 = vshrl.u32 %v2640, 7
        %v2642 = vsub.s32 0, %v2641
        %v2643 = vrot.slane %v2626, %v2642
        %v2644 = vlaneseq
        %v2645 = vshrl.u32 %v2644, 7
        %v2646 = vsub.s32 0, %v2645
        %v2647 = vrot.slane %v2627, %v2646
        %v2656 = vunpack.c.l.b16 %v2607
        %v2657 = vunpack.c.l.b16 %v2608
        %v2658 = vunpack.c.l.b16 %v2609
        %v2659 = vunpack.c.l.b16 %v2610
        %v2660 = vpack.c.b16 %v2657, %v2656
        %v2661 = vpack.c.b16 %v2659, %v2658
        %2664 = vmatprep.subr.bf16.mxu0 0
        %2665 = vmatpush1.bf16.msra.mxu0 %v2660
        %2666 = vmatprep.subr.bf16.mxu0 0
        %2667 = vmatpush1.bf16.msra.mxu0 %v2661
        %2668 = vmatprep.subr.bf16.mxu0 0
        %2669 = vmatpush1.bf16.msra.mxu0 0
        %2670 = vmatprep.subr.bf16.mxu0 0
        %2671 = vmatpush1.bf16.msra.mxu0 0
        %2672 = vmatprep.subr.bf16.mxu0 0
        %2673 = vmatpush1.bf16.msra.mxu0 0
        %2674 = vmatprep.subr.bf16.mxu0 0
        %2675 = vmatpush1.bf16.msra.mxu0 0
        %2676 = vmatprep.subr.bf16.mxu0 0
        %2677 = vmatpush1.bf16.msra.mxu0 0
        %2678 = vmatprep.subr.bf16.mxu0 0
        %2679 = vmatpush1.bf16.msra.mxu0 0
        %2680 = vmatprep.subr.bf16.mxu0 0
        %2681 = vmatpush1.bf16.msra.mxu0 0
        %2682 = vmatprep.subr.bf16.mxu0 0
        %2683 = vmatpush1.bf16.msra.mxu0 0
        %2684 = vmatprep.subr.bf16.mxu0 0
        %2685 = vmatpush1.bf16.msra.mxu0 0
        %2686 = vmatprep.subr.bf16.mxu0 0
        %2687 = vmatpush1.bf16.msra.mxu0 0
        %2688 = vmatprep.subr.bf16.mxu0 0
        %2689 = vmatpush1.bf16.msra.mxu0 0
        %2690 = vmatprep.subr.bf16.mxu0 0
        %2691 = vmatpush1.bf16.msra.mxu0 0
        %2692 = vmatprep.subr.bf16.mxu0 0
        %2693 = vmatpush1.bf16.msra.mxu0 0
        %2694 = vmatprep.subr.bf16.mxu0 0
        %2695 = vmatpush1.bf16.msra.mxu0 0
        %2696 = vmatprep.mubr.bf16.mxu0 0
        %2697 = vmatmul.mubr.bf16.gmra.mrb[0].mxu0 %v2408
        %v2698 = vpop.f32.mrb[0].mxu0
        %v2699 = vadd.f32 %v2635, %v2698
        %v2700 = vpop.f32.mrb[0].mxu0
        %v2701 = vpop.f32.mrb[0].mxu0
        %v2702 = vpop.f32.mrb[0].mxu0
        %2703 = vdwg.mxu0
        %v2708 = vunpack.c.l.b16 %v2611
        %v2709 = vunpack.c.l.b16 %v2612
        %v2710 = vunpack.c.l.b16 %v2613
        %v2711 = vunpack.c.l.b16 %v2614
        %v2712 = vpack.c.b16 %v2709, %v2708
        %v2713 = vpack.c.b16 %v2711, %v2710
        %2716 = vmatprep.subr.bf16.mxu0 0
        %2717 = vmatpush1.bf16.msra.mxu0 %v2712
        %2718 = vmatprep.subr.bf16.mxu0 0
        %2719 = vmatpush1.bf16.msra.mxu0 %v2713
        %2720 = vmatprep.subr.bf16.mxu0 0
        %2721 = vmatpush1.bf16.msra.mxu0 0
        %2722 = vmatprep.subr.bf16.mxu0 0
        %2723 = vmatpush1.bf16.msra.mxu0 0
        %2724 = vmatprep.subr.bf16.mxu0 0
        %2725 = vmatpush1.bf16.msra.mxu0 0
        %2726 = vmatprep.subr.bf16.mxu0 0
        %2727 = vmatpush1.bf16.msra.mxu0 0
        %2728 = vmatprep.subr.bf16.mxu0 0
        %2729 = vmatpush1.bf16.msra.mxu0 0
        %2730 = vmatprep.subr.bf16.mxu0 0
        %2731 = vmatpush1.bf16.msra.mxu0 0
        %2732 = vmatprep.subr.bf16.mxu0 0
        %2733 = vmatpush1.bf16.msra.mxu0 0
        %2734 = vmatprep.subr.bf16.mxu0 0
        %2735 = vmatpush1.bf16.msra.mxu0 0
        %2736 = vmatprep.subr.bf16.mxu0 0
        %2737 = vmatpush1.bf16.msra.mxu0 0
        %2738 = vmatprep.subr.bf16.mxu0 0
        %2739 = vmatpush1.bf16.msra.mxu0 0
        %2740 = vmatprep.subr.bf16.mxu0 0
        %2741 = vmatpush1.bf16.msra.mxu0 0
        %2742 = vmatprep.subr.bf16.mxu0 0
        %2743 = vmatpush1.bf16.msra.mxu0 0
        %2744 = vmatprep.subr.bf16.mxu0 0
        %2745 = vmatpush1.bf16.msra.mxu0 0
        %2746 = vmatprep.subr.bf16.mxu0 0
        %2747 = vmatpush1.bf16.msra.mxu0 0
        %2748 = vmatprep.mubr.bf16.mxu0 0
        %2749 = vmatmul.mubr.bf16.gmra.mrb[0].mxu0 %v2408
        %v2750 = vpop.f32.mrb[0].mxu0
        %v2751 = vadd.f32 %v2639, %v2750
        %v2752 = vpop.f32.mrb[0].mxu0
        %v2753 = vpop.f32.mrb[0].mxu0
        %v2754 = vpop.f32.mrb[0].mxu0
        %2755 = vdwg.mxu0
        %v2760 = vunpack.c.l.b16 %v2615
        %v2761 = vunpack.c.l.b16 %v2616
        %v2762 = vunpack.c.l.b16 %v2617
        %v2763 = vunpack.c.l.b16 %v2618
        %v2764 = vpack.c.b16 %v2761, %v2760
        %v2765 = vpack.c.b16 %v2763, %v2762
        %2768 = vmatprep.subr.bf16.mxu0 0
        %2769 = vmatpush1.bf16.msra.mxu0 %v2764
        %2770 = vmatprep.subr.bf16.mxu0 0
        %2771 = vmatpush1.bf16.msra.mxu0 %v2765
        %2772 = vmatprep.subr.bf16.mxu0 0
        %2773 = vmatpush1.bf16.msra.mxu0 0
        %2774 = vmatprep.subr.bf16.mxu0 0
        %2775 = vmatpush1.bf16.msra.mxu0 0
        %2776 = vmatprep.subr.bf16.mxu0 0
        %2777 = vmatpush1.bf16.msra.mxu0 0
        %2778 = vmatprep.subr.bf16.mxu0 0
        %2779 = vmatpush1.bf16.msra.mxu0 0
        %2780 = vmatprep.subr.bf16.mxu0 0
        %2781 = vmatpush1.bf16.msra.mxu0 0
        %2782 = vmatprep.subr.bf16.mxu0 0
        %2783 = vmatpush1.bf16.msra.mxu0 0
        %2784 = vmatprep.subr.bf16.mxu0 0
        %2785 = vmatpush1.bf16.msra.mxu0 0
        %2786 = vmatprep.subr.bf16.mxu0 0
        %2787 = vmatpush1.bf16.msra.mxu0 0
        %2788 = vmatprep.subr.bf16.mxu0 0
        %2789 = vmatpush1.bf16.msra.mxu0 0
        %2790 = vmatprep.subr.bf16.mxu0 0
        %2791 = vmatpush1.bf16.msra.mxu0 0
        %2792 = vmatprep.subr.bf16.mxu0 0
        %2793 = vmatpush1.bf16.msra.mxu0 0
        %2794 = vmatprep.subr.bf16.mxu0 0
        %2795 = vmatpush1.bf16.msra.mxu0 0
        %2796 = vmatprep.subr.bf16.mxu0 0
        %2797 = vmatpush1.bf16.msra.mxu0 0
        %2798 = vmatprep.subr.bf16.mxu0 0
        %2799 = vmatpush1.bf16.msra.mxu0 0
        %2800 = vmatprep.mubr.bf16.mxu0 0
        %2801 = vmatmul.mubr.bf16.gmra.mrb[0].mxu0 %v2408
        %v2802 = vpop.f32.mrb[0].mxu0
        %v2803 = vadd.f32 %v2643, %v2802
        %v2804 = vpop.f32.mrb[0].mxu0
        %v2805 = vpop.f32.mrb[0].mxu0
        %v2806 = vpop.f32.mrb[0].mxu0
        %2807 = vdwg.mxu0
        %v2812 = vunpack.c.l.b16 %v2619
        %v2813 = vunpack.c.l.b16 %v2620
        %v2814 = vunpack.c.l.b16 %v2621
        %v2815 = vunpack.c.l.b16 %v2622
        %v2816 = vpack.c.b16 %v2813, %v2812
        %v2817 = vpack.c.b16 %v2815, %v2814
        %2820 = vmatprep.subr.bf16.mxu0 0
        %2821 = vmatpush1.bf16.msra.mxu0 %v2816
        %2822 = vmatprep.subr.bf16.mxu0 0
        %2823 = vmatpush1.bf16.msra.mxu0 %v2817
        %2824 = vmatprep.subr.bf16.mxu0 0
        %2825 = vmatpush1.bf16.msra.mxu0 0
        %2826 = vmatprep.subr.bf16.mxu0 0
        %2827 = vmatpush1.bf16.msra.mxu0 0
        %2828 = vmatprep.subr.bf16.mxu0 0
        %2829 = vmatpush1.bf16.msra.mxu0 0
        %2830 = vmatprep.subr.bf16.mxu0 0
        %2831 = vmatpush1.bf16.msra.mxu0 0
        %2832 = vmatprep.subr.bf16.mxu0 0
        %2833 = vmatpush1.bf16.msra.mxu0 0
        %2834 = vmatprep.subr.bf16.mxu0 0
        %2835 = vmatpush1.bf16.msra.mxu0 0
        %2836 = vmatprep.subr.bf16.mxu0 0
        %2837 = vmatpush1.bf16.msra.mxu0 0
        %2838 = vmatprep.subr.bf16.mxu0 0
        %2839 = vmatpush1.bf16.msra.mxu0 0
        %2840 = vmatprep.subr.bf16.mxu0 0
        %2841 = vmatpush1.bf16.msra.mxu0 0
        %2842 = vmatprep.subr.bf16.mxu0 0
        %2843 = vmatpush1.bf16.msra.mxu0 0
        %2844 = vmatprep.subr.bf16.mxu0 0
        %2845 = vmatpush1.bf16.msra.mxu0 0
        %2846 = vmatprep.subr.bf16.mxu0 0
        %2847 = vmatpush1.bf16.msra.mxu0 0
        %2848 = vmatprep.subr.bf16.mxu0 0
        %2849 = vmatpush1.bf16.msra.mxu0 0
        %2850 = vmatprep.subr.bf16.mxu0 0
        %2851 = vmatpush1.bf16.msra.mxu0 0
        %2852 = vmatprep.mubr.bf16.mxu0 0
        %2853 = vmatmul.mubr.bf16.gmra.mrb[0].mxu0 %v2408
        %v2854 = vpop.f32.mrb[0].mxu0
        %v2855 = vadd.f32 %v2647, %v2854
        %v2856 = vpop.f32.mrb[0].mxu0
        %v2857 = vpop.f32.mrb[0].mxu0
        %v2858 = vpop.f32.mrb[0].mxu0
        %2859 = vdwg.mxu0
        %s2860 = scalar_lea.vmem %s6, 64
        %v2861 = vld [vmem:[%s2860] sm:$0xf]
        %v2862 = vld [vmem:[%s2860 + $0x4] sm:$0xf]
        %v2863 = vld [vmem:[%s2860 + $0x8] sm:$0xf]
        %v2864 = vld [vmem:[%s2860 + $0xc] sm:$0xf]
        %v2865 = vld [vmem:[%s2860 + $0x10] sm:$0xf]
        %v2866 = vld [vmem:[%s2860 + $0x14] sm:$0xf]
        %v2867 = vld [vmem:[%s2860 + $0x18] sm:$0xf]
        %v2868 = vld [vmem:[%s2860 + $0x1c] sm:$0xf]
        %v2869 = vld [vmem:[%s2860 + $0x20] sm:$0xf]
        %v2870 = vld [vmem:[%s2860 + $0x24] sm:$0xf]
        %v2871 = vld [vmem:[%s2860 + $0x28] sm:$0xf]
        %v2872 = vld [vmem:[%s2860 + $0x2c] sm:$0xf]
        %v2873 = vld [vmem:[%s2860 + $0x30] sm:$0xf]
        %v2874 = vld [vmem:[%s2860 + $0x34] sm:$0xf]
        %v2875 = vld [vmem:[%s2860 + $0x38] sm:$0xf]
        %v2876 = vld [vmem:[%s2860 + $0x3c] sm:$0xf]
        %s2877 = scalar_lea.vmem %s9, 4
        %v2878 = vld [vmem:[%s2877] sm:$0x1]
        %v2879 = vld [vmem:[%s2877 + $0x1] sm:$0x1]
        %v2880 = vld [vmem:[%s2877 + $0x2] sm:$0x1]
        %v2881 = vld [vmem:[%s2877 + $0x3] sm:$0x1]
        %v2886 = vlaneseq
        %v2887 = vshrl.u32 %v2886, 7
        %v2888 = vsub.s32 0, %v2887
        %v2889 = vrot.slane %v2878, %v2888
        %v2890 = vlaneseq
        %v2891 = vshrl.u32 %v2890, 7
        %v2892 = vsub.s32 0, %v2891
        %v2893 = vrot.slane %v2879, %v2892
        %v2894 = vlaneseq
        %v2895 = vshrl.u32 %v2894, 7
        %v2896 = vsub.s32 0, %v2895
        %v2897 = vrot.slane %v2880, %v2896
        %v2898 = vlaneseq
        %v2899 = vshrl.u32 %v2898, 7
        %v2900 = vsub.s32 0, %v2899
        %v2901 = vrot.slane %v2881, %v2900
        %v2910 = vunpack.c.l.b16 %v2861
        %v2911 = vunpack.c.l.b16 %v2862
        %v2912 = vunpack.c.l.b16 %v2863
        %v2913 = vunpack.c.l.b16 %v2864
        %v2914 = vpack.c.b16 %v2911, %v2910
        %v2915 = vpack.c.b16 %v2913, %v2912
        %2918 = vmatprep.subr.bf16.mxu0 0
        %2919 = vmatpush1.bf16.msra.mxu0 %v2914
        %2920 = vmatprep.subr.bf16.mxu0 0
        %2921 = vmatpush1.bf16.msra.mxu0 %v2915
        %2922 = vmatprep.subr.bf16.mxu0 0
        %2923 = vmatpush1.bf16.msra.mxu0 0
        %2924 = vmatprep.subr.bf16.mxu0 0
        %2925 = vmatpush1.bf16.msra.mxu0 0
        %2926 = vmatprep.subr.bf16.mxu0 0
        %2927 = vmatpush1.bf16.msra.mxu0 0
        %2928 = vmatprep.subr.bf16.mxu0 0
        %2929 = vmatpush1.bf16.msra.mxu0 0
        %2930 = vmatprep.subr.bf16.mxu0 0
        %2931 = vmatpush1.bf16.msra.mxu0 0
        %2932 = vmatprep.subr.bf16.mxu0 0
        %2933 = vmatpush1.bf16.msra.mxu0 0
        %2934 = vmatprep.subr.bf16.mxu0 0
        %2935 = vmatpush1.bf16.msra.mxu0 0
        %2936 = vmatprep.subr.bf16.mxu0 0
        %2937 = vmatpush1.bf16.msra.mxu0 0
        %2938 = vmatprep.subr.bf16.mxu0 0
        %2939 = vmatpush1.bf16.msra.mxu0 0
        %2940 = vmatprep.subr.bf16.mxu0 0
        %2941 = vmatpush1.bf16.msra.mxu0 0
        %2942 = vmatprep.subr.bf16.mxu0 0
        %2943 = vmatpush1.bf16.msra.mxu0 0
        %2944 = vmatprep.subr.bf16.mxu0 0
        %2945 = vmatpush1.bf16.msra.mxu0 0
        %2946 = vmatprep.subr.bf16.mxu0 0
        %2947 = vmatpush1.bf16.msra.mxu0 0
        %2948 = vmatprep.subr.bf16.mxu0 0
        %2949 = vmatpush1.bf16.msra.mxu0 0
        %2950 = vmatprep.mubr.bf16.mxu0 0
        %2951 = vmatmul.mubr.bf16.gmra.mrb[0].mxu0 %v2408
        %v2952 = vpop.f32.mrb[0].mxu0
        %v2953 = vadd.f32 %v2889, %v2952
        %v2954 = vpop.f32.mrb[0].mxu0
        %v2955 = vpop.f32.mrb[0].mxu0
        %v2956 = vpop.f32.mrb[0].mxu0
        %2957 = vdwg.mxu0
        %v2962 = vunpack.c.l.b16 %v2865
        %v2963 = vunpack.c.l.b16 %v2866
        %v2964 = vunpack.c.l.b16 %v2867
        %v2965 = vunpack.c.l.b16 %v2868
        %v2966 = vpack.c.b16 %v2963, %v2962
        %v2967 = vpack.c.b16 %v2965, %v2964
        %2970 = vmatprep.subr.bf16.mxu0 0
        %2971 = vmatpush1.bf16.msra.mxu0 %v2966
        %2972 = vmatprep.subr.bf16.mxu0 0
        %2973 = vmatpush1.bf16.msra.mxu0 %v2967
        %2974 = vmatprep.subr.bf16.mxu0 0
        %2975 = vmatpush1.bf16.msra.mxu0 0
        %2976 = vmatprep.subr.bf16.mxu0 0
        %2977 = vmatpush1.bf16.msra.mxu0 0
        %2978 = vmatprep.subr.bf16.mxu0 0
        %2979 = vmatpush1.bf16.msra.mxu0 0
        %2980 = vmatprep.subr.bf16.mxu0 0
        %2981 = vmatpush1.bf16.msra.mxu0 0
        %2982 = vmatprep.subr.bf16.mxu0 0
        %2983 = vmatpush1.bf16.msra.mxu0 0
        %2984 = vmatprep.subr.bf16.mxu0 0
        %2985 = vmatpush1.bf16.msra.mxu0 0
        %2986 = vmatprep.subr.bf16.mxu0 0
        %2987 = vmatpush1.bf16.msra.mxu0 0
        %2988 = vmatprep.subr.bf16.mxu0 0
        %2989 = vmatpush1.bf16.msra.mxu0 0
        %2990 = vmatprep.subr.bf16.mxu0 0
        %2991 = vmatpush1.bf16.msra.mxu0 0
        %2992 = vmatprep.subr.bf16.mxu0 0
        %2993 = vmatpush1.bf16.msra.mxu0 0
        %2994 = vmatprep.subr.bf16.mxu0 0
        %2995 = vmatpush1.bf16.msra.mxu0 0
        %2996 = vmatprep.subr.bf16.mxu0 0
        %2997 = vmatpush1.bf16.msra.mxu0 0
        %2998 = vmatprep.subr.bf16.mxu0 0
        %2999 = vmatpush1.bf16.msra.mxu0 0
        %3000 = vmatprep.subr.bf16.mxu0 0
        %3001 = vmatpush1.bf16.msra.mxu0 0
        %3002 = vmatprep.mubr.bf16.mxu0 0
        %3003 = vmatmul.mubr.bf16.gmra.mrb[0].mxu0 %v2408
        %v3004 = vpop.f32.mrb[0].mxu0
        %v3005 = vadd.f32 %v2893, %v3004
        %v3006 = vpop.f32.mrb[0].mxu0
        %v3007 = vpop.f32.mrb[0].mxu0
        %v3008 = vpop.f32.mrb[0].mxu0
        %3009 = vdwg.mxu0
        %v3014 = vunpack.c.l.b16 %v2869
        %v3015 = vunpack.c.l.b16 %v2870
        %v3016 = vunpack.c.l.b16 %v2871
        %v3017 = vunpack.c.l.b16 %v2872
        %v3018 = vpack.c.b16 %v3015, %v3014
        %v3019 = vpack.c.b16 %v3017, %v3016
        %3022 = vmatprep.subr.bf16.mxu0 0
        %3023 = vmatpush1.bf16.msra.mxu0 %v3018
        %3024 = vmatprep.subr.bf16.mxu0 0
        %3025 = vmatpush1.bf16.msra.mxu0 %v3019
        %3026 = vmatprep.subr.bf16.mxu0 0
        %3027 = vmatpush1.bf16.msra.mxu0 0
        %3028 = vmatprep.subr.bf16.mxu0 0
        %3029 = vmatpush1.bf16.msra.mxu0 0
        %3030 = vmatprep.subr.bf16.mxu0 0
        %3031 = vmatpush1.bf16.msra.mxu0 0
        %3032 = vmatprep.subr.bf16.mxu0 0
        %3033 = vmatpush1.bf16.msra.mxu0 0
        %3034 = vmatprep.subr.bf16.mxu0 0
        %3035 = vmatpush1.bf16.msra.mxu0 0
        %3036 = vmatprep.subr.bf16.mxu0 0
        %3037 = vmatpush1.bf16.msra.mxu0 0
        %3038 = vmatprep.subr.bf16.mxu0 0
        %3039 = vmatpush1.bf16.msra.mxu0 0
        %3040 = vmatprep.subr.bf16.mxu0 0
        %3041 = vmatpush1.bf16.msra.mxu0 0
        %3042 = vmatprep.subr.bf16.mxu0 0
        %3043 = vmatpush1.bf16.msra.mxu0 0
        %3044 = vmatprep.subr.bf16.mxu0 0
        %3045 = vmatpush1.bf16.msra.mxu0 0
        %3046 = vmatprep.subr.bf16.mxu0 0
        %3047 = vmatpush1.bf16.msra.mxu0 0
        %3048 = vmatprep.subr.bf16.mxu0 0
        %3049 = vmatpush1.bf16.msra.mxu0 0
        %3050 = vmatprep.subr.bf16.mxu0 0
        %3051 = vmatpush1.bf16.msra.mxu0 0
        %3052 = vmatprep.subr.bf16.mxu0 0
        %3053 = vmatpush1.bf16.msra.mxu0 0
        %3054 = vmatprep.mubr.bf16.mxu0 0
        %3055 = vmatmul.mubr.bf16.gmra.mrb[0].mxu0 %v2408
        %v3056 = vpop.f32.mrb[0].mxu0
        %v3057 = vadd.f32 %v2897, %v3056
        %v3058 = vpop.f32.mrb[0].mxu0
        %v3059 = vpop.f32.mrb[0].mxu0
        %v3060 = vpop.f32.mrb[0].mxu0
        %3061 = vdwg.mxu0
        %v3066 = vunpack.c.l.b16 %v2873
        %v3067 = vunpack.c.l.b16 %v2874
        %v3068 = vunpack.c.l.b16 %v2875
        %v3069 = vunpack.c.l.b16 %v2876
        %v3070 = vpack.c.b16 %v3067, %v3066
        %v3071 = vpack.c.b16 %v3069, %v3068
        %3074 = vmatprep.subr.bf16.mxu0 0
        %3075 = vmatpush1.bf16.msra.mxu0 %v3070
        %3076 = vmatprep.subr.bf16.mxu0 0
        %3077 = vmatpush1.bf16.msra.mxu0 %v3071
        %3078 = vmatprep.subr.bf16.mxu0 0
        %3079 = vmatpush1.bf16.msra.mxu0 0
        %3080 = vmatprep.subr.bf16.mxu0 0
        %3081 = vmatpush1.bf16.msra.mxu0 0
        %3082 = vmatprep.subr.bf16.mxu0 0
        %3083 = vmatpush1.bf16.msra.mxu0 0
        %3084 = vmatprep.subr.bf16.mxu0 0
        %3085 = vmatpush1.bf16.msra.mxu0 0
        %3086 = vmatprep.subr.bf16.mxu0 0
        %3087 = vmatpush1.bf16.msra.mxu0 0
        %3088 = vmatprep.subr.bf16.mxu0 0
        %3089 = vmatpush1.bf16.msra.mxu0 0
        %3090 = vmatprep.subr.bf16.mxu0 0
        %3091 = vmatpush1.bf16.msra.mxu0 0
        %3092 = vmatprep.subr.bf16.mxu0 0
        %3093 = vmatpush1.bf16.msra.mxu0 0
        %3094 = vmatprep.subr.bf16.mxu0 0
        %3095 = vmatpush1.bf16.msra.mxu0 0
        %3096 = vmatprep.subr.bf16.mxu0 0
        %3097 = vmatpush1.bf16.msra.mxu0 0
        %3098 = vmatprep.subr.bf16.mxu0 0
        %3099 = vmatpush1.bf16.msra.mxu0 0
        %3100 = vmatprep.subr.bf16.mxu0 0
        %3101 = vmatpush1.bf16.msra.mxu0 0
        %3102 = vmatprep.subr.bf16.mxu0 0
        %3103 = vmatpush1.bf16.msra.mxu0 0
        %3104 = vmatprep.subr.bf16.mxu0 0
        %3105 = vmatpush1.bf16.msra.mxu0 0
        %3106 = vmatprep.mubr.bf16.mxu0 0
        %3107 = vmatmul.mubr.bf16.gmra.mrb[0].mxu0 %v2408
        %v3108 = vpop.f32.mrb[0].mxu0
        %v3109 = vadd.f32 %v2901, %v3108
        %v3110 = vpop.f32.mrb[0].mxu0
        %v3111 = vpop.f32.mrb[0].mxu0
        %v3112 = vpop.f32.mrb[0].mxu0
        %3113 = vdwg.mxu0
        %v3114 = vpack.c.bf16 %v2445, %v2445
        %v3115 = vpack.c.bf16 %v2497, %v2497
        %v3116 = vpack.c.bf16 %v2549, %v2549
        %v3117 = vpack.c.bf16 %v2601, %v2601
        %v3118 = vpack.c.bf16 %v2699, %v2699
        %v3119 = vpack.c.bf16 %v2751, %v2751
        %v3120 = vpack.c.bf16 %v2803, %v2803
        %v3121 = vpack.c.bf16 %v2855, %v2855
        %v3123 = vsel %vm1515, %v3114, 0
        %v3126 = vsel %vm1515, %v3118, 0
        %3128 = vmatprep.subr.bf16.mxu0 0
        %3129 = vmatpush1.bf16.xpose.msra.mxu0 %v3126
        %3130 = vmatprep.subr.bf16.mxu0 0
        %3131 = vmatpush1.bf16.xpose.msra.mxu0 0
        %3132 = vmatprep.subr.bf16.mxu0 0
        %3133 = vmatpush1.bf16.xpose.msra.mxu0 0
        %3134 = vmatprep.subr.bf16.mxu0 0
        %3135 = vmatpush1.bf16.xpose.msra.mxu0 0
        %3136 = vmatprep.subr.bf16.mxu0 0
        %3137 = vmatpush1.bf16.xpose.msra.mxu0 0
        %3138 = vmatprep.subr.bf16.mxu0 0
        %3139 = vmatpush1.bf16.xpose.msra.mxu0 0
        %3140 = vmatprep.subr.bf16.mxu0 0
        %3141 = vmatpush1.bf16.xpose.msra.mxu0 0
        %3142 = vmatprep.subr.bf16.mxu0 0
        %3143 = vmatpush1.bf16.xpose.msra.mxu0 0
        %3144 = vmatprep.subr.bf16.mxu0 0
        %3145 = vmatpush1.bf16.xpose.msra.mxu0 0
        %3146 = vmatprep.subr.bf16.mxu0 0
        %3147 = vmatpush1.bf16.xpose.msra.mxu0 0
        %3148 = vmatprep.subr.bf16.mxu0 0
        %3149 = vmatpush1.bf16.xpose.msra.mxu0 0
        %3150 = vmatprep.subr.bf16.mxu0 0
        %3151 = vmatpush1.bf16.xpose.msra.mxu0 0
        %3152 = vmatprep.subr.bf16.mxu0 0
        %3153 = vmatpush1.bf16.xpose.msra.mxu0 0
        %3154 = vmatprep.subr.bf16.mxu0 0
        %3155 = vmatpush1.bf16.xpose.msra.mxu0 0
        %3156 = vmatprep.subr.bf16.mxu0 0
        %3157 = vmatpush1.bf16.xpose.msra.mxu0 0
        %3158 = vmatprep.subr.bf16.mxu0 0
        %3159 = vmatpush1.bf16.xpose.msra.mxu0 0
        %3160 = vmatprep.mubr.bf16.mxu0 0
        %3161 = vmatmul.mubr.bf16.gmra.mrb[0].mxu0 %v3123
        %v3162 = vpop.f32.mrb[0].mxu0
        %v3163 = vadd.f32 0.0, %v3162
        %v3164 = vpop.f32.mrb[0].mxu0
        %v3165 = vpop.f32.mrb[0].mxu0
        %v3166 = vpop.f32.mrb[0].mxu0
        %3167 = vdwg.mxu0
        %v3169 = vsel %vm1515, %v3115, 0
        %v3172 = vsel %vm1515, %v3119, 0
        %3174 = vmatprep.subr.bf16.mxu0 0
        %3175 = vmatpush1.bf16.xpose.msra.mxu0 %v3172
        %3176 = vmatprep.subr.bf16.mxu0 0
        %3177 = vmatpush1.bf16.xpose.msra.mxu0 0
        %3178 = vmatprep.subr.bf16.mxu0 0
        %3179 = vmatpush1.bf16.xpose.msra.mxu0 0
        %3180 = vmatprep.subr.bf16.mxu0 0
        %3181 = vmatpush1.bf16.xpose.msra.mxu0 0
        %3182 = vmatprep.subr.bf16.mxu0 0
        %3183 = vmatpush1.bf16.xpose.msra.mxu0 0
        %3184 = vmatprep.subr.bf16.mxu0 0
        %3185 = vmatpush1.bf16.xpose.msra.mxu0 0
        %3186 = vmatprep.subr.bf16.mxu0 0
        %3187 = vmatpush1.bf16.xpose.msra.mxu0 0
        %3188 = vmatprep.subr.bf16.mxu0 0
        %3189 = vmatpush1.bf16.xpose.msra.mxu0 0
        %3190 = vmatprep.subr.bf16.mxu0 0
        %3191 = vmatpush1.bf16.xpose.msra.mxu0 0
        %3192 = vmatprep.subr.bf16.mxu0 0
        %3193 = vmatpush1.bf16.xpose.msra.mxu0 0
        %3194 = vmatprep.subr.bf16.mxu0 0
        %3195 = vmatpush1.bf16.xpose.msra.mxu0 0
        %3196 = vmatprep.subr.bf16.mxu0 0
        %3197 = vmatpush1.bf16.xpose.msra.mxu0 0
        %3198 = vmatprep.subr.bf16.mxu0 0
        %3199 = vmatpush1.bf16.xpose.msra.mxu0 0
        %3200 = vmatprep.subr.bf16.mxu0 0
        %3201 = vmatpush1.bf16.xpose.msra.mxu0 0
        %3202 = vmatprep.subr.bf16.mxu0 0
        %3203 = vmatpush1.bf16.xpose.msra.mxu0 0
        %3204 = vmatprep.subr.bf16.mxu0 0
        %3205 = vmatpush1.bf16.xpose.msra.mxu0 0
        %3206 = vmatprep.mubr.bf16.mxu0 0
        %3207 = vmatmul.mubr.bf16.gmra.mrb[0].mxu0 %v3169
        %v3208 = vpop.f32.mrb[0].mxu0
        %v3209 = vadd.f32 0.0, %v3208
        %v3210 = vpop.f32.mrb[0].mxu0
        %v3211 = vpop.f32.mrb[0].mxu0
        %v3212 = vpop.f32.mrb[0].mxu0
        %3213 = vdwg.mxu0
        %v3215 = vsel %vm1515, %v3116, 0
        %v3218 = vsel %vm1515, %v3120, 0
        %3220 = vmatprep.subr.bf16.mxu0 0
        %3221 = vmatpush1.bf16.xpose.msra.mxu0 %v3218
        %3222 = vmatprep.subr.bf16.mxu0 0
        %3223 = vmatpush1.bf16.xpose.msra.mxu0 0
        %3224 = vmatprep.subr.bf16.mxu0 0
        %3225 = vmatpush1.bf16.xpose.msra.mxu0 0
        %3226 = vmatprep.subr.bf16.mxu0 0
        %3227 = vmatpush1.bf16.xpose.msra.mxu0 0
        %3228 = vmatprep.subr.bf16.mxu0 0
        %3229 = vmatpush1.bf16.xpose.msra.mxu0 0
        %3230 = vmatprep.subr.bf16.mxu0 0
        %3231 = vmatpush1.bf16.xpose.msra.mxu0 0
        %3232 = vmatprep.subr.bf16.mxu0 0
        %3233 = vmatpush1.bf16.xpose.msra.mxu0 0
        %3234 = vmatprep.subr.bf16.mxu0 0
        %3235 = vmatpush1.bf16.xpose.msra.mxu0 0
        %3236 = vmatprep.subr.bf16.mxu0 0
        %3237 = vmatpush1.bf16.xpose.msra.mxu0 0
        %3238 = vmatprep.subr.bf16.mxu0 0
        %3239 = vmatpush1.bf16.xpose.msra.mxu0 0
        %3240 = vmatprep.subr.bf16.mxu0 0
        %3241 = vmatpush1.bf16.xpose.msra.mxu0 0
        %3242 = vmatprep.subr.bf16.mxu0 0
        %3243 = vmatpush1.bf16.xpose.msra.mxu0 0
        %3244 = vmatprep.subr.bf16.mxu0 0
        %3245 = vmatpush1.bf16.xpose.msra.mxu0 0
        %3246 = vmatprep.subr.bf16.mxu0 0
        %3247 = vmatpush1.bf16.xpose.msra.mxu0 0
        %3248 = vmatprep.subr.bf16.mxu0 0
        %3249 = vmatpush1.bf16.xpose.msra.mxu0 0
        %3250 = vmatprep.subr.bf16.mxu0 0
        %3251 = vmatpush1.bf16.xpose.msra.mxu0 0
        %3252 = vmatprep.mubr.bf16.mxu0 0
        %3253 = vmatmul.mubr.bf16.gmra.mrb[0].mxu0 %v3215
        %v3254 = vpop.f32.mrb[0].mxu0
        %v3255 = vadd.f32 0.0, %v3254
        %v3256 = vpop.f32.mrb[0].mxu0
        %v3257 = vpop.f32.mrb[0].mxu0
        %v3258 = vpop.f32.mrb[0].mxu0
        %3259 = vdwg.mxu0
        %v3261 = vsel %vm1515, %v3117, 0
        %v3264 = vsel %vm1515, %v3121, 0
        %3266 = vmatprep.subr.bf16.mxu0 0
        %3267 = vmatpush1.bf16.xpose.msra.mxu0 %v3264
        %3268 = vmatprep.subr.bf16.mxu0 0
        %3269 = vmatpush1.bf16.xpose.msra.mxu0 0
        %3270 = vmatprep.subr.bf16.mxu0 0
        %3271 = vmatpush1.bf16.xpose.msra.mxu0 0
        %3272 = vmatprep.subr.bf16.mxu0 0
        %3273 = vmatpush1.bf16.xpose.msra.mxu0 0
        %3274 = vmatprep.subr.bf16.mxu0 0
        %3275 = vmatpush1.bf16.xpose.msra.mxu0 0
        %3276 = vmatprep.subr.bf16.mxu0 0
        %3277 = vmatpush1.bf16.xpose.msra.mxu0 0
        %3278 = vmatprep.subr.bf16.mxu0 0
        %3279 = vmatpush1.bf16.xpose.msra.mxu0 0
        %3280 = vmatprep.subr.bf16.mxu0 0
        %3281 = vmatpush1.bf16.xpose.msra.mxu0 0
        %3282 = vmatprep.subr.bf16.mxu0 0
        %3283 = vmatpush1.bf16.xpose.msra.mxu0 0
        %3284 = vmatprep.subr.bf16.mxu0 0
        %3285 = vmatpush1.bf16.xpose.msra.mxu0 0
        %3286 = vmatprep.subr.bf16.mxu0 0
        %3287 = vmatpush1.bf16.xpose.msra.mxu0 0
        %3288 = vmatprep.subr.bf16.mxu0 0
        %3289 = vmatpush1.bf16.xpose.msra.mxu0 0
        %3290 = vmatprep.subr.bf16.mxu0 0
        %3291 = vmatpush1.bf16.xpose.msra.mxu0 0
        %3292 = vmatprep.subr.bf16.mxu0 0
        %3293 = vmatpush1.bf16.xpose.msra.mxu0 0
        %3294 = vmatprep.subr.bf16.mxu0 0
        %3295 = vmatpush1.bf16.xpose.msra.mxu0 0
        %3296 = vmatprep.subr.bf16.mxu0 0
        %3297 = vmatpush1.bf16.xpose.msra.mxu0 0
        %3298 = vmatprep.mubr.bf16.mxu0 0
        %3299 = vmatmul.mubr.bf16.gmra.mrb[0].mxu0 %v3261
        %v3300 = vpop.f32.mrb[0].mxu0
        %v3301 = vadd.f32 0.0, %v3300
        %v3302 = vpop.f32.mrb[0].mxu0
        %v3303 = vpop.f32.mrb[0].mxu0
        %v3304 = vpop.f32.mrb[0].mxu0
        %3305 = vdwg.mxu0
        %v3306 = vmul.f32 %v3163, 0.35355338
        %v3307 = vmul.f32 %v3209, 0.35355338
        %v3308 = vmul.f32 %v3255, 0.35355338
        %v3309 = vmul.f32 %v3301, 0.35355338
        %v3310 = vadd.f32 %v3306, %v745
        %v3311 = vadd.f32 %v3307, %v745
        %v3312 = vadd.f32 %v3308, %v745
        %v3313 = vadd.f32 %v3309, %v745
        %v3314 = vsel %vm1515, %v3310, -inf
        %3315 = vmax.xlane.f32.xlu0 %v3314
        %v3316 = vpop.xlane.xlu0 %3315
        %v3317 = vsel %vm1515, %v3311, -inf
        %3318 = vmax.xlane.f32.xlu0 %v3317
        %v3319 = vpop.xlane.xlu0 %3318
        %v3320 = vsel %vm1515, %v3312, -inf
        %3321 = vmax.xlane.f32.xlu0 %v3320
        %v3322 = vpop.xlane.xlu0 %3321
        %v3323 = vsel %vm1515, %v3313, -inf
        %3324 = vmax.xlane.f32.xlu0 %v3323
        %v3325 = vpop.xlane.xlu0 %3324
        %v3326 = vsub.f32 %v3310, %v3316
        %v3327 = vsub.f32 %v3311, %v3319
        %v3328 = vsub.f32 %v3312, %v3322
        %v3329 = vsub.f32 %v3313, %v3325
        %v3330 = vmul.f32 %v3326, 1.442695
        %v3331 = vpow.pop %v3330
        %v3332 = vmul.f32 %v3327, 1.442695
        %v3333 = vpow.pop %v3332
        %v3334 = vmul.f32 %v3328, 1.442695
        %v3335 = vpow.pop %v3334
        %v3336 = vmul.f32 %v3329, 1.442695
        %v3337 = vpow.pop %v3336
        %v3338 = vsel %vm1515, %v3331, 0.0
        %3339 = vadd.xlane.f32.xlu0 %v3338
        %v3340 = vpop.xlane.xlu0 %3339
        %v3341 = vsel %vm1515, %v3333, 0.0
        %3342 = vadd.xlane.f32.xlu0 %v3341
        %v3343 = vpop.xlane.xlu0 %3342
        %v3344 = vsel %vm1515, %v3335, 0.0
        %3345 = vadd.xlane.f32.xlu0 %v3344
        %v3346 = vpop.xlane.xlu0 %3345
        %v3347 = vsel %vm1515, %v3337, 0.0
        %3348 = vadd.xlane.f32.xlu0 %v3347
        %v3349 = vpop.xlane.xlu0 %3348
        %v3350 = vrcp.pop %v3340
        %v3351 = vrcp.pop %v3343
        %v3352 = vrcp.pop %v3346
        %v3353 = vrcp.pop %v3349
        %v3354 = vmul.f32 %v3331, %v3350
        %v3355 = vmul.f32 %v3333, %v3351
        %v3356 = vmul.f32 %v3335, %v3352
        %v3357 = vmul.f32 %v3337, %v3353
        %v3358 = vpack.c.bf16 %v3354, %v3354
        %v3359 = vpack.c.bf16 %v3355, %v3355
        %v3360 = vpack.c.bf16 %v3356, %v3356
        %v3361 = vpack.c.bf16 %v3357, %v3357
        %v3362 = vpack.c.bf16 %v2953, %v2953
        %v3363 = vpack.c.bf16 %v3005, %v3005
        %v3364 = vpack.c.bf16 %v3057, %v3057
        %v3365 = vpack.c.bf16 %v3109, %v3109
        %v3367 = vsel %vm1515, %v3358, 0
        %v3370 = vsel %vm1763, %v3362, 0
        %3372 = vmatprep.subr.bf16.mxu0 0
        %3373 = vmatpush1.bf16.msra.mxu0 %v3370
        %3374 = vmatprep.subr.bf16.mxu0 0
        %3375 = vmatpush1.bf16.msra.mxu0 0
        %3376 = vmatprep.subr.bf16.mxu0 0
        %3377 = vmatpush1.bf16.msra.mxu0 0
        %3378 = vmatprep.subr.bf16.mxu0 0
        %3379 = vmatpush1.bf16.msra.mxu0 0
        %3380 = vmatprep.subr.bf16.mxu0 0
        %3381 = vmatpush1.bf16.msra.mxu0 0
        %3382 = vmatprep.subr.bf16.mxu0 0
        %3383 = vmatpush1.bf16.msra.mxu0 0
        %3384 = vmatprep.subr.bf16.mxu0 0
        %3385 = vmatpush1.bf16.msra.mxu0 0
        %3386 = vmatprep.subr.bf16.mxu0 0
        %3387 = vmatpush1.bf16.msra.mxu0 0
        %3388 = vmatprep.subr.bf16.mxu0 0
        %3389 = vmatpush1.bf16.msra.mxu0 0
        %3390 = vmatprep.subr.bf16.mxu0 0
        %3391 = vmatpush1.bf16.msra.mxu0 0
        %3392 = vmatprep.subr.bf16.mxu0 0
        %3393 = vmatpush1.bf16.msra.mxu0 0
        %3394 = vmatprep.subr.bf16.mxu0 0
        %3395 = vmatpush1.bf16.msra.mxu0 0
        %3396 = vmatprep.subr.bf16.mxu0 0
        %3397 = vmatpush1.bf16.msra.mxu0 0
        %3398 = vmatprep.subr.bf16.mxu0 0
        %3399 = vmatpush1.bf16.msra.mxu0 0
        %3400 = vmatprep.subr.bf16.mxu0 0
        %3401 = vmatpush1.bf16.msra.mxu0 0
        %3402 = vmatprep.subr.bf16.mxu0 0
        %3403 = vmatpush1.bf16.msra.mxu0 0
        %3404 = vmatprep.mubr.bf16.mxu0 0
        %3405 = vmatmul.mubr.bf16.gmra.mrb[0].mxu0 %v3367
        %v3406 = vpop.f32.mrb[0].mxu0
        %v3407 = vadd.f32 0.0, %v3406
        %v3408 = vpop.f32.mrb[0].mxu0
        %v3409 = vpop.f32.mrb[0].mxu0
        %v3410 = vpop.f32.mrb[0].mxu0
        %3411 = vdwg.mxu0
        %v3413 = vsel %vm1515, %v3359, 0
        %v3416 = vsel %vm1763, %v3363, 0
        %3418 = vmatprep.subr.bf16.mxu0 0
        %3419 = vmatpush1.bf16.msra.mxu0 %v3416
        %3420 = vmatprep.subr.bf16.mxu0 0
        %3421 = vmatpush1.bf16.msra.mxu0 0
        %3422 = vmatprep.subr.bf16.mxu0 0
        %3423 = vmatpush1.bf16.msra.mxu0 0
        %3424 = vmatprep.subr.bf16.mxu0 0
        %3425 = vmatpush1.bf16.msra.mxu0 0
        %3426 = vmatprep.subr.bf16.mxu0 0
        %3427 = vmatpush1.bf16.msra.mxu0 0
        %3428 = vmatprep.subr.bf16.mxu0 0
        %3429 = vmatpush1.bf16.msra.mxu0 0
        %3430 = vmatprep.subr.bf16.mxu0 0
        %3431 = vmatpush1.bf16.msra.mxu0 0
        %3432 = vmatprep.subr.bf16.mxu0 0
        %3433 = vmatpush1.bf16.msra.mxu0 0
        %3434 = vmatprep.subr.bf16.mxu0 0
        %3435 = vmatpush1.bf16.msra.mxu0 0
        %3436 = vmatprep.subr.bf16.mxu0 0
        %3437 = vmatpush1.bf16.msra.mxu0 0
        %3438 = vmatprep.subr.bf16.mxu0 0
        %3439 = vmatpush1.bf16.msra.mxu0 0
        %3440 = vmatprep.subr.bf16.mxu0 0
        %3441 = vmatpush1.bf16.msra.mxu0 0
        %3442 = vmatprep.subr.bf16.mxu0 0
        %3443 = vmatpush1.bf16.msra.mxu0 0
        %3444 = vmatprep.subr.bf16.mxu0 0
        %3445 = vmatpush1.bf16.msra.mxu0 0
        %3446 = vmatprep.subr.bf16.mxu0 0
        %3447 = vmatpush1.bf16.msra.mxu0 0
        %3448 = vmatprep.subr.bf16.mxu0 0
        %3449 = vmatpush1.bf16.msra.mxu0 0
        %3450 = vmatprep.mubr.bf16.mxu0 0
        %3451 = vmatmul.mubr.bf16.gmra.mrb[0].mxu0 %v3413
        %v3452 = vpop.f32.mrb[0].mxu0
        %v3453 = vadd.f32 0.0, %v3452
        %v3454 = vpop.f32.mrb[0].mxu0
        %v3455 = vpop.f32.mrb[0].mxu0
        %v3456 = vpop.f32.mrb[0].mxu0
        %3457 = vdwg.mxu0
        %v3459 = vsel %vm1515, %v3360, 0
        %v3462 = vsel %vm1763, %v3364, 0
        %3464 = vmatprep.subr.bf16.mxu0 0
        %3465 = vmatpush1.bf16.msra.mxu0 %v3462
        %3466 = vmatprep.subr.bf16.mxu0 0
        %3467 = vmatpush1.bf16.msra.mxu0 0
        %3468 = vmatprep.subr.bf16.mxu0 0
        %3469 = vmatpush1.bf16.msra.mxu0 0
        %3470 = vmatprep.subr.bf16.mxu0 0
        %3471 = vmatpush1.bf16.msra.mxu0 0
        %3472 = vmatprep.subr.bf16.mxu0 0
        %3473 = vmatpush1.bf16.msra.mxu0 0
        %3474 = vmatprep.subr.bf16.mxu0 0
        %3475 = vmatpush1.bf16.msra.mxu0 0
        %3476 = vmatprep.subr.bf16.mxu0 0
        %3477 = vmatpush1.bf16.msra.mxu0 0
        %3478 = vmatprep.subr.bf16.mxu0 0
        %3479 = vmatpush1.bf16.msra.mxu0 0
        %3480 = vmatprep.subr.bf16.mxu0 0
        %3481 = vmatpush1.bf16.msra.mxu0 0
        %3482 = vmatprep.subr.bf16.mxu0 0
        %3483 = vmatpush1.bf16.msra.mxu0 0
        %3484 = vmatprep.subr.bf16.mxu0 0
        %3485 = vmatpush1.bf16.msra.mxu0 0
        %3486 = vmatprep.subr.bf16.mxu0 0
        %3487 = vmatpush1.bf16.msra.mxu0 0
        %3488 = vmatprep.subr.bf16.mxu0 0
        %3489 = vmatpush1.bf16.msra.mxu0 0
        %3490 = vmatprep.subr.bf16.mxu0 0
        %3491 = vmatpush1.bf16.msra.mxu0 0
        %3492 = vmatprep.subr.bf16.mxu0 0
        %3493 = vmatpush1.bf16.msra.mxu0 0
        %3494 = vmatprep.subr.bf16.mxu0 0
        %3495 = vmatpush1.bf16.msra.mxu0 0
        %3496 = vmatprep.mubr.bf16.mxu0 0
        %3497 = vmatmul.mubr.bf16.gmra.mrb[0].mxu0 %v3459
        %v3498 = vpop.f32.mrb[0].mxu0
        %v3499 = vadd.f32 0.0, %v3498
        %v3500 = vpop.f32.mrb[0].mxu0
        %v3501 = vpop.f32.mrb[0].mxu0
        %v3502 = vpop.f32.mrb[0].mxu0
        %3503 = vdwg.mxu0
        %v3505 = vsel %vm1515, %v3361, 0
        %v3508 = vsel %vm1763, %v3365, 0
        %3510 = vmatprep.subr.bf16.mxu0 0
        %3511 = vmatpush1.bf16.msra.mxu0 %v3508
        %3512 = vmatprep.subr.bf16.mxu0 0
        %3513 = vmatpush1.bf16.msra.mxu0 0
        %3514 = vmatprep.subr.bf16.mxu0 0
        %3515 = vmatpush1.bf16.msra.mxu0 0
        %3516 = vmatprep.subr.bf16.mxu0 0
        %3517 = vmatpush1.bf16.msra.mxu0 0
        %3518 = vmatprep.subr.bf16.mxu0 0
        %3519 = vmatpush1.bf16.msra.mxu0 0
        %3520 = vmatprep.subr.bf16.mxu0 0
        %3521 = vmatpush1.bf16.msra.mxu0 0
        %3522 = vmatprep.subr.bf16.mxu0 0
        %3523 = vmatpush1.bf16.msra.mxu0 0
        %3524 = vmatprep.subr.bf16.mxu0 0
        %3525 = vmatpush1.bf16.msra.mxu0 0
        %3526 = vmatprep.subr.bf16.mxu0 0
        %3527 = vmatpush1.bf16.msra.mxu0 0
        %3528 = vmatprep.subr.bf16.mxu0 0
        %3529 = vmatpush1.bf16.msra.mxu0 0
        %3530 = vmatprep.subr.bf16.mxu0 0
        %3531 = vmatpush1.bf16.msra.mxu0 0
        %3532 = vmatprep.subr.bf16.mxu0 0
        %3533 = vmatpush1.bf16.msra.mxu0 0
        %3534 = vmatprep.subr.bf16.mxu0 0
        %3535 = vmatpush1.bf16.msra.mxu0 0
        %3536 = vmatprep.subr.bf16.mxu0 0
        %3537 = vmatpush1.bf16.msra.mxu0 0
        %3538 = vmatprep.subr.bf16.mxu0 0
        %3539 = vmatpush1.bf16.msra.mxu0 0
        %3540 = vmatprep.subr.bf16.mxu0 0
        %3541 = vmatpush1.bf16.msra.mxu0 0
        %3542 = vmatprep.mubr.bf16.mxu0 0
        %3543 = vmatmul.mubr.bf16.gmra.mrb[0].mxu0 %v3505
        %v3544 = vpop.f32.mrb[0].mxu0
        %v3545 = vadd.f32 0.0, %v3544
        %v3546 = vpop.f32.mrb[0].mxu0
        %v3547 = vpop.f32.mrb[0].mxu0
        %v3548 = vpop.f32.mrb[0].mxu0
        %3549 = vdwg.mxu0
        %v3550 = vpack.c.bf16 %v3407, %v3407
        %v3551 = vpack.c.bf16 %v3453, %v3453
        %v3552 = vpack.c.bf16 %v3499, %v3499
        %v3553 = vpack.c.bf16 %v3545, %v3545
        %s3554 = scalar_lea.vmem %s10, 16
        %v3555 = vld [vmem:[%s3554] sm:$0xf]
        %v3556 = vld [vmem:[%s3554 + $0x4] sm:$0xf]
        %v3557 = vld [vmem:[%s3554 + $0x8] sm:$0xf]
        %v3558 = vld [vmem:[%s3554 + $0xc] sm:$0xf]
        %v3560 = vsel %vm1515, %v3550, 0
        %v3563 = vsel %vm1763, %v3555, 0
        %3565 = vmatprep.subr.bf16.mxu0 0
        %3566 = vmatpush1.bf16.msra.mxu0 %v3563
        %3567 = vmatprep.subr.bf16.mxu0 0
        %3568 = vmatpush1.bf16.msra.mxu0 0
        %3569 = vmatprep.subr.bf16.mxu0 0
        %3570 = vmatpush1.bf16.msra.mxu0 0
        %3571 = vmatprep.subr.bf16.mxu0 0
        %3572 = vmatpush1.bf16.msra.mxu0 0
        %3573 = vmatprep.subr.bf16.mxu0 0
        %3574 = vmatpush1.bf16.msra.mxu0 0
        %3575 = vmatprep.subr.bf16.mxu0 0
        %3576 = vmatpush1.bf16.msra.mxu0 0
        %3577 = vmatprep.subr.bf16.mxu0 0
        %3578 = vmatpush1.bf16.msra.mxu0 0
        %3579 = vmatprep.subr.bf16.mxu0 0
        %3580 = vmatpush1.bf16.msra.mxu0 0
        %3581 = vmatprep.subr.bf16.mxu0 0
        %3582 = vmatpush1.bf16.msra.mxu0 0
        %3583 = vmatprep.subr.bf16.mxu0 0
        %3584 = vmatpush1.bf16.msra.mxu0 0
        %3585 = vmatprep.subr.bf16.mxu0 0
        %3586 = vmatpush1.bf16.msra.mxu0 0
        %3587 = vmatprep.subr.bf16.mxu0 0
        %3588 = vmatpush1.bf16.msra.mxu0 0
        %3589 = vmatprep.subr.bf16.mxu0 0
        %3590 = vmatpush1.bf16.msra.mxu0 0
        %3591 = vmatprep.subr.bf16.mxu0 0
        %3592 = vmatpush1.bf16.msra.mxu0 0
        %3593 = vmatprep.subr.bf16.mxu0 0
        %3594 = vmatpush1.bf16.msra.mxu0 0
        %3595 = vmatprep.subr.bf16.mxu0 0
        %3596 = vmatpush1.bf16.msra.mxu0 0
        %3597 = vmatprep.mubr.bf16.mxu0 0
        %3598 = vmatmul.mubr.bf16.gmra.mrb[0].mxu0 %v3560
        %v3599 = vpop.f32.mrb[0].mxu0
        %v3600 = vadd.f32 0.0, %v3599
        %v3601 = vpop.f32.mrb[0].mxu0
        %v3602 = vpop.f32.mrb[0].mxu0
        %v3603 = vpop.f32.mrb[0].mxu0
        %3604 = vdwg.mxu0
        %v3606 = vsel %vm1515, %v3551, 0
        %v3609 = vsel %vm1763, %v3556, 0
        %3611 = vmatprep.subr.bf16.mxu0 0
        %3612 = vmatpush1.bf16.msra.mxu0 %v3609
        %3613 = vmatprep.subr.bf16.mxu0 0
        %3614 = vmatpush1.bf16.msra.mxu0 0
        %3615 = vmatprep.subr.bf16.mxu0 0
        %3616 = vmatpush1.bf16.msra.mxu0 0
        %3617 = vmatprep.subr.bf16.mxu0 0
        %3618 = vmatpush1.bf16.msra.mxu0 0
        %3619 = vmatprep.subr.bf16.mxu0 0
        %3620 = vmatpush1.bf16.msra.mxu0 0
        %3621 = vmatprep.subr.bf16.mxu0 0
        %3622 = vmatpush1.bf16.msra.mxu0 0
        %3623 = vmatprep.subr.bf16.mxu0 0
        %3624 = vmatpush1.bf16.msra.mxu0 0
        %3625 = vmatprep.subr.bf16.mxu0 0
        %3626 = vmatpush1.bf16.msra.mxu0 0
        %3627 = vmatprep.subr.bf16.mxu0 0
        %3628 = vmatpush1.bf16.msra.mxu0 0
        %3629 = vmatprep.subr.bf16.mxu0 0
        %3630 = vmatpush1.bf16.msra.mxu0 0
        %3631 = vmatprep.subr.bf16.mxu0 0
        %3632 = vmatpush1.bf16.msra.mxu0 0
        %3633 = vmatprep.subr.bf16.mxu0 0
        %3634 = vmatpush1.bf16.msra.mxu0 0
        %3635 = vmatprep.subr.bf16.mxu0 0
        %3636 = vmatpush1.bf16.msra.mxu0 0
        %3637 = vmatprep.subr.bf16.mxu0 0
        %3638 = vmatpush1.bf16.msra.mxu0 0
        %3639 = vmatprep.subr.bf16.mxu0 0
        %3640 = vmatpush1.bf16.msra.mxu0 0
        %3641 = vmatprep.subr.bf16.mxu0 0
        %3642 = vmatpush1.bf16.msra.mxu0 0
        %3643 = vmatprep.mubr.bf16.mxu0 0
        %3644 = vmatmul.mubr.bf16.gmra.mrb[0].mxu0 %v3606
        %v3645 = vpop.f32.mrb[0].mxu0
        %v3646 = vadd.f32 0.0, %v3645
        %v3647 = vpop.f32.mrb[0].mxu0
        %v3648 = vpop.f32.mrb[0].mxu0
        %v3649 = vpop.f32.mrb[0].mxu0
        %3650 = vdwg.mxu0
        %v3652 = vsel %vm1515, %v3552, 0
        %v3655 = vsel %vm1763, %v3557, 0
        %3657 = vmatprep.subr.bf16.mxu0 0
        %3658 = vmatpush1.bf16.msra.mxu0 %v3655
        %3659 = vmatprep.subr.bf16.mxu0 0
        %3660 = vmatpush1.bf16.msra.mxu0 0
        %3661 = vmatprep.subr.bf16.mxu0 0
        %3662 = vmatpush1.bf16.msra.mxu0 0
        %3663 = vmatprep.subr.bf16.mxu0 0
        %3664 = vmatpush1.bf16.msra.mxu0 0
        %3665 = vmatprep.subr.bf16.mxu0 0
        %3666 = vmatpush1.bf16.msra.mxu0 0
        %3667 = vmatprep.subr.bf16.mxu0 0
        %3668 = vmatpush1.bf16.msra.mxu0 0
        %3669 = vmatprep.subr.bf16.mxu0 0
        %3670 = vmatpush1.bf16.msra.mxu0 0
        %3671 = vmatprep.subr.bf16.mxu0 0
        %3672 = vmatpush1.bf16.msra.mxu0 0
        %3673 = vmatprep.subr.bf16.mxu0 0
        %3674 = vmatpush1.bf16.msra.mxu0 0
        %3675 = vmatprep.subr.bf16.mxu0 0
        %3676 = vmatpush1.bf16.msra.mxu0 0
        %3677 = vmatprep.subr.bf16.mxu0 0
        %3678 = vmatpush1.bf16.msra.mxu0 0
        %3679 = vmatprep.subr.bf16.mxu0 0
        %3680 = vmatpush1.bf16.msra.mxu0 0
        %3681 = vmatprep.subr.bf16.mxu0 0
        %3682 = vmatpush1.bf16.msra.mxu0 0
        %3683 = vmatprep.subr.bf16.mxu0 0
        %3684 = vmatpush1.bf16.msra.mxu0 0
        %3685 = vmatprep.subr.bf16.mxu0 0
        %3686 = vmatpush1.bf16.msra.mxu0 0
        %3687 = vmatprep.subr.bf16.mxu0 0
        %3688 = vmatpush1.bf16.msra.mxu0 0
        %3689 = vmatprep.mubr.bf16.mxu0 0
        %3690 = vmatmul.mubr.bf16.gmra.mrb[0].mxu0 %v3652
        %v3691 = vpop.f32.mrb[0].mxu0
        %v3692 = vadd.f32 0.0, %v3691
        %v3693 = vpop.f32.mrb[0].mxu0
        %v3694 = vpop.f32.mrb[0].mxu0
        %v3695 = vpop.f32.mrb[0].mxu0
        %3696 = vdwg.mxu0
        %v3698 = vsel %vm1515, %v3553, 0
        %v3701 = vsel %vm1763, %v3558, 0
        %3703 = vmatprep.subr.bf16.mxu0 0
        %3704 = vmatpush1.bf16.msra.mxu0 %v3701
        %3705 = vmatprep.subr.bf16.mxu0 0
        %3706 = vmatpush1.bf16.msra.mxu0 0
        %3707 = vmatprep.subr.bf16.mxu0 0
        %3708 = vmatpush1.bf16.msra.mxu0 0
        %3709 = vmatprep.subr.bf16.mxu0 0
        %3710 = vmatpush1.bf16.msra.mxu0 0
        %3711 = vmatprep.subr.bf16.mxu0 0
        %3712 = vmatpush1.bf16.msra.mxu0 0
        %3713 = vmatprep.subr.bf16.mxu0 0
        %3714 = vmatpush1.bf16.msra.mxu0 0
        %3715 = vmatprep.subr.bf16.mxu0 0
        %3716 = vmatpush1.bf16.msra.mxu0 0
        %3717 = vmatprep.subr.bf16.mxu0 0
        %3718 = vmatpush1.bf16.msra.mxu0 0
        %3719 = vmatprep.subr.bf16.mxu0 0
        %3720 = vmatpush1.bf16.msra.mxu0 0
        %3721 = vmatprep.subr.bf16.mxu0 0
        %3722 = vmatpush1.bf16.msra.mxu0 0
        %3723 = vmatprep.subr.bf16.mxu0 0
        %3724 = vmatpush1.bf16.msra.mxu0 0
        %3725 = vmatprep.subr.bf16.mxu0 0
        %3726 = vmatpush1.bf16.msra.mxu0 0
        %3727 = vmatprep.subr.bf16.mxu0 0
        %3728 = vmatpush1.bf16.msra.mxu0 0
        %3729 = vmatprep.subr.bf16.mxu0 0
        %3730 = vmatpush1.bf16.msra.mxu0 0
        %3731 = vmatprep.subr.bf16.mxu0 0
        %3732 = vmatpush1.bf16.msra.mxu0 0
        %3733 = vmatprep.subr.bf16.mxu0 0
        %3734 = vmatpush1.bf16.msra.mxu0 0
        %3735 = vmatprep.mubr.bf16.mxu0 0
        %3736 = vmatmul.mubr.bf16.gmra.mrb[0].mxu0 %v3698
        %v3737 = vpop.f32.mrb[0].mxu0
        %v3738 = vadd.f32 0.0, %v3737
        %v3739 = vpop.f32.mrb[0].mxu0
        %v3740 = vpop.f32.mrb[0].mxu0
        %v3741 = vpop.f32.mrb[0].mxu0
        %3742 = vdwg.mxu0
        %v3743 = vsel %vm803, %v3600, 0.0
        %v3744 = vsel %vm803, %v3646, 0.0
        %v3745 = vadd.f32 %v3743, %v3744
        %v3746 = vsel %vm803, %v3692, 0.0
        %v3747 = vadd.f32 %v3745, %v3746
        %v3748 = vsel %vm803, %v3738, 0.0
        %v3749 = vadd.f32 %v3747, %v3748
        %s3750 = scalar_lea.vmem %s11, 1
        %v3751 = vld [vmem:[%s3750] sm:$0x1]
        %v3753 = vlaneseq
        %v3754 = vshrl.u32 %v3753, 7
        %v3755 = vsub.s32 0, %v3754
        %v3756 = vrot.slane %v3751, %v3755
        %v3758 = vadd.f32 %v3749, %v3756
        %v3759 = vadd.f32 %v2347, %v3758
        %s3760 = scalar_lea.vmem %s12, 1
        %v3761 = vld [vmem:[%s3760] sm:$0x1]
        %s3762 = scalar_lea.vmem %s13, 1
        %v3763 = vld [vmem:[%s3762] sm:$0x1]
        %v3764 = vsel %vm803, %v3759, 0.0
        %3765 = vadd.xlane.f32.xlu0 %v3764
        %v3766 = vpop.xlane.xlu0 %3765
        %v3767 = vmul.f32 %v3766, %v2158
        %v3768 = vsub.f32 %v3759, %v3767
        %v3769 = vmul.f32 %v3768, %v3768
        %v3770 = vsel %vm803, %v3769, 0.0
        %3771 = vadd.xlane.f32.xlu0 %v3770
        %v3772 = vpop.xlane.xlu0 %3771
        %v3773 = vmul.f32 %v3772, %v2158
        %v3774 = vadd.f32 %v3773, 1e-05
        %v3775 = vrsqrt.pop %v3774
        %v3777 = vlaneseq
        %v3778 = vshrl.u32 %v3777, 7
        %v3779 = vsub.s32 0, %v3778
        %v3780 = vrot.slane %v3761, %v3779
        %v3782 = vmul.f32 %v3775, %v3780
        %v3783 = vmul.f32 %v3768, %v3782
        %v3785 = vlaneseq
        %v3786 = vshrl.u32 %v3785, 7
        %v3787 = vsub.s32 0, %v3786
        %v3788 = vrot.slane %v3763, %v3787
        %v3790 = vadd.f32 %v3783, %v3788
        %v3791 = vpack.c.bf16 %v3790, %v3790
        %s3792 = scalar_lea.vmem %s14, 16
        %v3793 = vld [vmem:[%s3792] sm:$0xf]
        %v3794 = vld [vmem:[%s3792 + $0x4] sm:$0xf]
        %v3795 = vld [vmem:[%s3792 + $0x8] sm:$0xf]
        %v3796 = vld [vmem:[%s3792 + $0xc] sm:$0xf]
        %s3797 = scalar_lea.vmem %s15, 1
        %v3798 = vld [vmem:[%s3797] sm:$0x1]
        %v3800 = vlaneseq
        %v3801 = vshrl.u32 %v3800, 7
        %v3802 = vsub.s32 0, %v3801
        %v3803 = vrot.slane %v3798, %v3802
        %v3809 = vunpack.c.l.b16 %v3793
        %v3810 = vunpack.c.l.b16 %v3794
        %v3811 = vunpack.c.l.b16 %v3795
        %v3812 = vunpack.c.l.b16 %v3796
        %v3813 = vpack.c.b16 %v3810, %v3809
        %v3814 = vpack.c.b16 %v3812, %v3811
        %v3818 = vsel %vm803, %v3791, 0
        %3820 = vmatprep.subr.bf16.mxu0 0
        %3821 = vmatpush1.bf16.msra.mxu0 %v3813
        %3822 = vmatprep.subr.bf16.mxu0 0
        %3823 = vmatpush1.bf16.msra.mxu0 %v3814
        %3824 = vmatprep.subr.bf16.mxu0 0
        %3825 = vmatpush1.bf16.msra.mxu0 0
        %3826 = vmatprep.subr.bf16.mxu0 0
        %3827 = vmatpush1.bf16.msra.mxu0 0
        %3828 = vmatprep.subr.bf16.mxu0 0
        %3829 = vmatpush1.bf16.msra.mxu0 0
        %3830 = vmatprep.subr.bf16.mxu0 0
        %3831 = vmatpush1.bf16.msra.mxu0 0
        %3832 = vmatprep.subr.bf16.mxu0 0
        %3833 = vmatpush1.bf16.msra.mxu0 0
        %3834 = vmatprep.subr.bf16.mxu0 0
        %3835 = vmatpush1.bf16.msra.mxu0 0
        %3836 = vmatprep.subr.bf16.mxu0 0
        %3837 = vmatpush1.bf16.msra.mxu0 0
        %3838 = vmatprep.subr.bf16.mxu0 0
        %3839 = vmatpush1.bf16.msra.mxu0 0
        %3840 = vmatprep.subr.bf16.mxu0 0
        %3841 = vmatpush1.bf16.msra.mxu0 0
        %3842 = vmatprep.subr.bf16.mxu0 0
        %3843 = vmatpush1.bf16.msra.mxu0 0
        %3844 = vmatprep.subr.bf16.mxu0 0
        %3845 = vmatpush1.bf16.msra.mxu0 0
        %3846 = vmatprep.subr.bf16.mxu0 0
        %3847 = vmatpush1.bf16.msra.mxu0 0
        %3848 = vmatprep.subr.bf16.mxu0 0
        %3849 = vmatpush1.bf16.msra.mxu0 0
        %3850 = vmatprep.subr.bf16.mxu0 0
        %3851 = vmatpush1.bf16.msra.mxu0 0
        %3852 = vmatprep.mubr.bf16.mxu0 0
        %3853 = vmatmul.mubr.bf16.gmra.mrb[0].mxu0 %v3818
        %v3854 = vpop.f32.mrb[0].mxu0
        %v3855 = vadd.f32 %v3803, %v3854
        %v3856 = vpop.f32.mrb[0].mxu0
        %v3857 = vpop.f32.mrb[0].mxu0
        %v3858 = vpop.f32.mrb[0].mxu0
        %3859 = vdwg.mxu0
        %v3860 = vmax.f32 %v3855, 0.0
        %v3861 = vpack.c.bf16 %v3860, %v3860
        %s3862 = scalar_lea.vmem %s16, 16
        %v3863 = vld [vmem:[%s3862] sm:$0xf]
        %v3864 = vld [vmem:[%s3862 + $0x4] sm:$0xf]
        %v3865 = vld [vmem:[%s3862 + $0x8] sm:$0xf]
        %v3866 = vld [vmem:[%s3862 + $0xc] sm:$0xf]
        %s3867 = scalar_lea.vmem %s17, 1
        %v3868 = vld [vmem:[%s3867] sm:$0x1]
        %v3870 = vlaneseq
        %v3871 = vshrl.u32 %v3870, 7
        %v3872 = vsub.s32 0, %v3871
        %v3873 = vrot.slane %v3868, %v3872
        %v3879 = vunpack.c.l.b16 %v3863
        %v3880 = vunpack.c.l.b16 %v3864
        %v3881 = vunpack.c.l.b16 %v3865
        %v3882 = vunpack.c.l.b16 %v3866
        %v3883 = vpack.c.b16 %v3880, %v3879
        %v3884 = vpack.c.b16 %v3882, %v3881
        %v3888 = vsel %vm803, %v3861, 0
        %3890 = vmatprep.subr.bf16.mxu0 0
        %3891 = vmatpush1.bf16.msra.mxu0 %v3883
        %3892 = vmatprep.subr.bf16.mxu0 0
        %3893 = vmatpush1.bf16.msra.mxu0 %v3884
        %3894 = vmatprep.subr.bf16.mxu0 0
        %3895 = vmatpush1.bf16.msra.mxu0 0
        %3896 = vmatprep.subr.bf16.mxu0 0
        %3897 = vmatpush1.bf16.msra.mxu0 0
        %3898 = vmatprep.subr.bf16.mxu0 0
        %3899 = vmatpush1.bf16.msra.mxu0 0
        %3900 = vmatprep.subr.bf16.mxu0 0
        %3901 = vmatpush1.bf16.msra.mxu0 0
        %3902 = vmatprep.subr.bf16.mxu0 0
        %3903 = vmatpush1.bf16.msra.mxu0 0
        %3904 = vmatprep.subr.bf16.mxu0 0
        %3905 = vmatpush1.bf16.msra.mxu0 0
        %3906 = vmatprep.subr.bf16.mxu0 0
        %3907 = vmatpush1.bf16.msra.mxu0 0
        %3908 = vmatprep.subr.bf16.mxu0 0
        %3909 = vmatpush1.bf16.msra.mxu0 0
        %3910 = vmatprep.subr.bf16.mxu0 0
        %3911 = vmatpush1.bf16.msra.mxu0 0
        %3912 = vmatprep.subr.bf16.mxu0 0
        %3913 = vmatpush1.bf16.msra.mxu0 0
        %3914 = vmatprep.subr.bf16.mxu0 0
        %3915 = vmatpush1.bf16.msra.mxu0 0
        %3916 = vmatprep.subr.bf16.mxu0 0
        %3917 = vmatpush1.bf16.msra.mxu0 0
        %3918 = vmatprep.subr.bf16.mxu0 0
        %3919 = vmatpush1.bf16.msra.mxu0 0
        %3920 = vmatprep.subr.bf16.mxu0 0
        %3921 = vmatpush1.bf16.msra.mxu0 0
        %3922 = vmatprep.mubr.bf16.mxu0 0
        %3923 = vmatmul.mubr.bf16.gmra.mrb[0].mxu0 %v3888
        %v3924 = vpop.f32.mrb[0].mxu0
        %v3925 = vadd.f32 %v3873, %v3924
        %v3926 = vpop.f32.mrb[0].mxu0
        %v3927 = vpop.f32.mrb[0].mxu0
        %v3928 = vpop.f32.mrb[0].mxu0
        %3929 = vdwg.mxu0
        %v3930 = vadd.f32 %v3790, %v3925
        %s3931 = scalar_lea.vmem %s18, 1
        %v3932 = vld [vmem:[%s3931] sm:$0x1]
        %s3933 = scalar_lea.vmem %s19, 1
        %v3934 = vld [vmem:[%s3933] sm:$0x1]
        %v3935 = vsel %vm803, %v3930, 0.0
        %3936 = vadd.xlane.f32.xlu0 %v3935
        %v3937 = vpop.xlane.xlu0 %3936
        %v3938 = vmul.f32 %v3937, %v2158
        %v3939 = vsub.f32 %v3930, %v3938
        %v3940 = vmul.f32 %v3939, %v3939
        %v3941 = vsel %vm803, %v3940, 0.0
        %3942 = vadd.xlane.f32.xlu0 %v3941
        %v3943 = vpop.xlane.xlu0 %3942
        %v3944 = vmul.f32 %v3943, %v2158
        %v3945 = vadd.f32 %v3944, 1e-05
        %v3946 = vrsqrt.pop %v3945
        %v3948 = vlaneseq
        %v3949 = vshrl.u32 %v3948, 7
        %v3950 = vsub.s32 0, %v3949
        %v3951 = vrot.slane %v3932, %v3950
        %v3953 = vmul.f32 %v3946, %v3951
        %v3954 = vmul.f32 %v3939, %v3953
        %v3956 = vlaneseq
        %v3957 = vshrl.u32 %v3956, 7
        %v3958 = vsub.s32 0, %v3957
        %v3959 = vrot.slane %v3934, %v3958
        %v3961 = vadd.f32 %v3954, %v3959
        %v3962 = vpack.c.bf16 %v3961, %v3961
        %v3963 = vld [vmem:[%s20] sm:$0xf]
        %v3964 = vld [vmem:[%s20 + $0x4] sm:$0xf]
        %v3965 = vld [vmem:[%s20 + $0x8] sm:$0xf]
        %v3966 = vld [vmem:[%s20 + $0xc] sm:$0xf]
        %v3967 = vld [vmem:[%s21] sm:$0x1]
        %v3969 = vlaneseq
        %v3970 = vshrl.u32 %v3969, 7
        %v3971 = vsub.s32 0, %v3970
        %v3972 = vrot.slane %v3967, %v3971
        %v3978 = vunpack.c.l.b16 %v3963
        %v3979 = vunpack.c.l.b16 %v3964
        %v3980 = vunpack.c.l.b16 %v3965
        %v3981 = vunpack.c.l.b16 %v3966
        %v3982 = vpack.c.b16 %v3979, %v3978
        %v3983 = vpack.c.b16 %v3981, %v3980
        %v3987 = vsel %vm803, %v3962, 0
        %3989 = vmatprep.subr.bf16.mxu0 0
        %3990 = vmatpush1.bf16.msra.mxu0 %v3982
        %3991 = vmatprep.subr.bf16.mxu0 0
        %3992 = vmatpush1.bf16.msra.mxu0 %v3983
        %3993 = vmatprep.subr.bf16.mxu0 0
        %3994 = vmatpush1.bf16.msra.mxu0 0
        %3995 = vmatprep.subr.bf16.mxu0 0
        %3996 = vmatpush1.bf16.msra.mxu0 0
        %3997 = vmatprep.subr.bf16.mxu0 0
        %3998 = vmatpush1.bf16.msra.mxu0 0
        %3999 = vmatprep.subr.bf16.mxu0 0
        %4000 = vmatpush1.bf16.msra.mxu0 0
        %4001 = vmatprep.subr.bf16.mxu0 0
        %4002 = vmatpush1.bf16.msra.mxu0 0
        %4003 = vmatprep.subr.bf16.mxu0 0
        %4004 = vmatpush1.bf16.msra.mxu0 0
        %4005 = vmatprep.subr.bf16.mxu0 0
        %4006 = vmatpush1.bf16.msra.mxu0 0
        %4007 = vmatprep.subr.bf16.mxu0 0
        %4008 = vmatpush1.bf16.msra.mxu0 0
        %4009 = vmatprep.subr.bf16.mxu0 0
        %4010 = vmatpush1.bf16.msra.mxu0 0
        %4011 = vmatprep.subr.bf16.mxu0 0
        %4012 = vmatpush1.bf16.msra.mxu0 0
        %4013 = vmatprep.subr.bf16.mxu0 0
        %4014 = vmatpush1.bf16.msra.mxu0 0
        %4015 = vmatprep.subr.bf16.mxu0 0
        %4016 = vmatpush1.bf16.msra.mxu0 0
        %4017 = vmatprep.subr.bf16.mxu0 0
        %4018 = vmatpush1.bf16.msra.mxu0 0
        %4019 = vmatprep.subr.bf16.mxu0 0
        %4020 = vmatpush1.bf16.msra.mxu0 0
        %4021 = vmatprep.mubr.bf16.mxu0 0
        %4022 = vmatmul.mubr.bf16.gmra.mrb[0].mxu0 %v3987
        %v4023 = vpop.f32.mrb[0].mxu0
        %v4024 = vadd.f32 %v3972, %v4023
        %v4025 = vpop.f32.mrb[0].mxu0
        %v4026 = vpop.f32.mrb[0].mxu0
        %v4027 = vpop.f32.mrb[0].mxu0
        %4028 = vdwg.mxu0
        %4029 = vst [vmem:[%s674] sm:$0xff] %v4024
        %s4030 = sand.u32 %s511, 1
        %s4031 = scalar_lea.sflag [#allocation3], %s4030
        %s4032 = sand.u32 %s511, 1
        %s4033 = smul.addr %s4032, 8
        %s4034 = scalar_lea.vmem [#allocation2], %s4033
        // Predicated region
        $region109: #{tpu_custom_call.1} parent=107 // pred_check
          %p4035 = pneg %p521
        $region110: #{tpu_custom_call.1} parent=107 // pred_check_branch
          %4037 = sbr.rel (%p4035) target = $region112
        $region111: #{tpu_custom_call.1} parent=107 // pred_region
          %s4039 = ssub.s32 128, 128
          %4040 = vsyncadd %s4031, %s4039
          %s4041 = smul.addr %s36, 128
          %s4042 = scalar_lea.hbm %s22, %s4041
          %s4044 = sshll.u32 %s4034, 4
          %s4045 = int_to_ptr.vmem [resolvable:$true] %s4044
          %4047 = dma.vmem_to_hbm [thread:$0]  %s4045, 128, %s4042, %s4031
        $region112: #{tpu_custom_call.1} parent=107 // pred_fallthru
          _
      $region108: #{tpu_custom_call.1} parent=5 // pred_fallthru
        _
      %p4048 = scmp.le.s32.totalorder 2, %s31
      // Predicated region
      $region113: #{tpu_custom_call.1} parent=5 // pred_check
        %p4049 = pneg %p4048
      $region114: #{tpu_custom_call.1} parent=5 // pred_check_branch
        %4051 = sbr.rel (%p4049) target = $region116
      $region115: #{tpu_custom_call.1} parent=5 // pred_region
        %s4052 = ssub.s32 %s31, 2
        // Predicated region
        $region117: #{tpu_custom_call.1} parent=115 // pred_check
          %p4053 = pneg %p527
        $region118: #{tpu_custom_call.1} parent=115 // pred_check_branch
          %4055 = sbr.rel (%p4053) target = $region120
        $region119: #{tpu_custom_call.1} parent=115 // pred_region
          %s4056 = sand.u32 %s512, 1
          %s4057 = scalar_lea.sflag [#allocation3], %s4056
          %s4058 = sand.u32 %s512, 1
          %s4059 = smul.addr %s4058, 8
          %s4060 = scalar_lea.vmem [#allocation2], %s4059
          %4061 = dma.done %s4057, 128
        $region120: #{tpu_custom_call.1} parent=115 // pred_fallthru
          _
      $region116: #{tpu_custom_call.1} parent=5 // pred_fallthru
        _
    $region6: #{tpu_custom_call.1} parent=1 // loop_footer
      %s35 = sadd.s32 1, %s31
    $region7: #{tpu_custom_call.1} parent=1 // loop_footer_branch
      %30 = sbr.rel target = $region3
    $region8: #{tpu_custom_call.1} parent=1 // loop_exit
      _
    %4062 = vsyncpa [#allocation3], 1
    %s4063 = scalar_lea.sflag [#allocation3], 1
    %4064 = vsyncpa %s4063, 1

</llo_original>
